<compile_context>
chip_gen: v7x
topology: tpu7x:2x2x1
jax: 0.10.0
libtpu: 0.0.40
codegen_flags: <defaults>
</compile_context>

<pallas_src>
import functools

import jax
import jax.numpy as jnp
from jax.experimental import pallas as pl
from jax.experimental.pallas import tpu as pltpu


# ---------------------------------------------------------------------------
# Pallas kernels
# ---------------------------------------------------------------------------
def _gelu_exact(x):
    # PyTorch F.gelu default ("none" approximation): 0.5*x*(1+erf(x/sqrt(2)))
    return 0.5 * x * (1.0 + jax.lax.erf(x * 0.7071067811865476))


def _linear_cf_kernel(x_ref, w_ref, b_ref, o_ref, *, apply_gelu):
    # x: (Cin, tn), w: (Cout, Cin), b: (Cout, 1)  ->  o: (Cout, tn)  (lane-dense)
    y = jnp.dot(w_ref[...], x_ref[...], preferred_element_type=jnp.float32)
    y = y + b_ref[...]
    if apply_gelu:
        y = _gelu_exact(y)
    o_ref[...] = y.astype(o_ref.dtype)


def _linear_cf_residual_kernel(x_ref, w_ref, b_ref, r_ref, o_ref, *, apply_gelu):
    # Fused 1x1-conv branch + spectral residual add + (optional) GELU.
    y = jnp.dot(w_ref[...], x_ref[...], preferred_element_type=jnp.float32)
    y = y + b_ref[...] + r_ref[...]
    if apply_gelu:
        y = _gelu_exact(y)
    o_ref[...] = y.astype(o_ref.dtype)


def _mlp_head_kernel(x_ref, w1_ref, b1_ref, w2_ref, b2_ref, w3_ref, b3_ref, o_ref):
    # Fused fc1 -> gelu -> fc2 -> gelu -> fc3 per row tile; all weights in VMEM.
    h = jnp.dot(w1_ref[...], x_ref[...], preferred_element_type=jnp.float32) + b1_ref[...]
    h = _gelu_exact(h)
    h = jnp.dot(w2_ref[...], h, preferred_element_type=jnp.float32) + b2_ref[...]
    h = _gelu_exact(h)
    h = jnp.dot(w3_ref[...], h, preferred_element_type=jnp.float32) + b3_ref[...]
    o_ref[...] = h.astype(o_ref.dtype)


def _spectral_mix_kernel(x_ref, w_ref, o_ref):
    # Batched over the mode-group axis: (mg, B, 2Cin) @ (mg, 2Cin, 2Cout).
    # Stacked-real form: one matmul replaces the 4 real matmuls of the complex mul.
    o_ref[...] = jnp.einsum("gbi,gio->gbo", x_ref[...], w_ref[...],
                            preferred_element_type=jnp.float32)


# ---------------------------------------------------------------------------
# Tiling helpers / Pallas wrappers
# ---------------------------------------------------------------------------
_TILES = (2048, 1024, 512, 256)


def _pick_tile(n):
    """Largest lane tile (multiple of 256) that keeps the grid >= 2 when possible."""
    for tn in _TILES:
        if n % tn == 0 and n // tn >= 2:
            return tn, n
    n_pad = ((n + 255) // 256) * 256
    for tn in _TILES:
        if n_pad % tn == 0 and n_pad // tn >= 2:
            return tn, n_pad
    return n_pad, n_pad  # tiny N: single block


def pallas_linear_cf(x, w, b, *, apply_gelu=False, residual=None):
    """o = [gelu](w @ x + b [+ residual]);  x: (Cin, N), w: (Cout, Cin), b: (Cout, 1)."""
    cin, n = x.shape
    cout = w.shape[0]
    tn, n_pad = _pick_tile(n)
    if n_pad != n:
        x = jnp.pad(x, ((0, 0), (0, n_pad - n)))
        if residual is not None:
            residual = jnp.pad(residual, ((0, 0), (0, n_pad - n)))

    in_specs = [
        pl.BlockSpec((cin, tn), lambda i: (0, i)),
        pl.BlockSpec((cout, cin), lambda i: (0, 0)),
        pl.BlockSpec((cout, 1), lambda i: (0, 0)),
    ]
    args = [x, w, b]
    if residual is not None:
        in_specs.append(pl.BlockSpec((cout, tn), lambda i: (0, i)))
        args.append(residual)
        kernel = functools.partial(_linear_cf_residual_kernel, apply_gelu=apply_gelu)
    else:
        kernel = functools.partial(_linear_cf_kernel, apply_gelu=apply_gelu)

    out = pl.pallas_call(
        kernel,
        out_shape=jax.ShapeDtypeStruct((cout, n_pad), jnp.float32),
        grid=(n_pad // tn,),
        in_specs=in_specs,
        out_specs=pl.BlockSpec((cout, tn), lambda i: (0, i)),
        compiler_params=pltpu.CompilerParams(dimension_semantics=("parallel",)),
    )(*args)
    return out if n_pad == n else out[:, :n]


def pallas_mlp_head(x, w1, b1, w2, b2, w3, b3):
    """Fused fc1->gelu->fc2->gelu->fc3.  x: (C, N) -> (out_dim, N)."""
    c, n = x.shape
    fc_dim = w1.shape[0]
    out_dim = w3.shape[0]
    tn, n_pad = _pick_tile(n)
    if n_pad != n:
        x = jnp.pad(x, ((0, 0), (0, n_pad - n)))

    out = pl.pallas_call(
        _mlp_head_kernel,
        out_shape=jax.ShapeDtypeStruct((out_dim, n_pad), jnp.float32),
        grid=(n_pad // tn,),
        in_specs=[
            pl.BlockSpec((c, tn), lambda i: (0, i)),
            pl.BlockSpec((fc_dim, c), lambda i: (0, 0)),
            pl.BlockSpec((fc_dim, 1), lambda i: (0, 0)),
            pl.BlockSpec((c, fc_dim), lambda i: (0, 0)),
            pl.BlockSpec((c, 1), lambda i: (0, 0)),
            pl.BlockSpec((out_dim, c), lambda i: (0, 0)),
            pl.BlockSpec((out_dim, 1), lambda i: (0, 0)),
        ],
        out_specs=pl.BlockSpec((out_dim, tn), lambda i: (0, i)),
        compiler_params=pltpu.CompilerParams(dimension_semantics=("parallel",)),
    )(x, w1, b1, w2, b2, w3, b3)
    return out if n_pad == n else out[:, :n]


def pallas_spectral_mix(x_s, w_stack):
    """x_s: (M, B, 2Cin), w_stack: (M, 2Cin, 2Cout) -> (M, B, 2Cout)."""
    m, b, two_cin = x_s.shape
    two_cout = w_stack.shape[2]
    groups = 2 if m % 2 == 0 else 1      # grid >= 2 keeps both v7x TensorCores busy
    mg = m // groups
    return pl.pallas_call(
        _spectral_mix_kernel,
        out_shape=jax.ShapeDtypeStruct((m, b, two_cout), jnp.float32),
        grid=(groups,),
        in_specs=[
            pl.BlockSpec((mg, b, two_cin), lambda g: (g, 0, 0)),
            pl.BlockSpec((mg, two_cin, two_cout), lambda g: (g, 0, 0)),
        ],
        out_specs=pl.BlockSpec((mg, b, two_cout), lambda g: (g, 0, 0)),
        compiler_params=pltpu.CompilerParams(dimension_semantics=("parallel",)),
    )(x_s, w_stack)


# ---------------------------------------------------------------------------
# SpectralConv2d (FFT glue in JAX, mode-mixing in Pallas), channels-first layout
# ---------------------------------------------------------------------------
def spectral_conv2d_cf(x, w_stack, modes1, modes2):
    """x: (Cin, B, H, W) f32, w_stack: (2*m1*m2, 2Cin, 2Cout) -> (Cout, B, H, W)."""
    cin, bsz, h, w = x.shape
    cout = w_stack.shape[2] // 2
    x_ft = jnp.fft.rfft2(x, axes=(-2, -1))           # (Cin, B, H, W//2+1) complex64
    top = x_ft[:, :, :modes1, :modes2]
    bot = x_ft[:, :, h - modes1:, :modes2]

    def to_mbc(a):                                    # (Cin, B, m1, m2) -> (m1*m2, B, Cin)
        return jnp.transpose(a, (2, 3, 1, 0)).reshape(modes1 * modes2, bsz, cin)

    xc = jnp.concatenate([to_mbc(top), to_mbc(bot)], axis=0)
    x_s = jnp.concatenate([jnp.real(xc), jnp.imag(xc)], axis=-1).astype(jnp.float32)

    o_s = pallas_spectral_mix(x_s, w_stack)           # (2*m1*m2, B, 2Cout)
    o = jax.lax.complex(o_s[..., :cout], o_s[..., cout:])

    def from_mbc(a):                                  # (m1*m2, B, Cout) -> (Cout, B, m1, m2)
        return jnp.transpose(a.reshape(modes1, modes2, bsz, cout), (3, 2, 0, 1))

    half = modes1 * modes2
    out_ft = jnp.zeros((cout, bsz, h, w // 2 + 1), dtype=jnp.complex64)
    out_ft = out_ft.at[:, :, :modes1, :modes2].set(from_mbc(o[:half]))
    out_ft = out_ft.at[:, :, h - modes1:, :modes2].set(from_mbc(o[half:]))
    return jnp.fft.irfft2(out_ft, s=(h, w), axes=(-2, -1))


# ---------------------------------------------------------------------------
# FNO2d forward (pad_ratio = [0, 0]  ->  no domain padding)
# ---------------------------------------------------------------------------
def fno2d_forward(params, x):
    """x: (B, H, W, in_dim) float32  ->  (B, H, W, out_dim) float32."""
    bsz, h, w, in_dim = x.shape
    layers = params["layers"]
    n = bsz * h * w

    # single entry transpose into the channels-first flattened layout (C, B*H*W)
    xcf = jnp.transpose(x, (3, 0, 1, 2)).reshape(in_dim, n)

    # fc0
    hid = pallas_linear_cf(xcf, params["fc0_w"], params["fc0_b"])        # (C0, N)

    n_layers = len(params["sp"])
    for i, (sp, wlin) in enumerate(zip(params["sp"], params["ws"])):
        cin, cout = layers[i], layers[i + 1]
        # spectral branch (free reshape: (C, N) <-> (C, B, H, W), no transpose)
        x1 = spectral_conv2d_cf(hid.reshape(cin, bsz, h, w),
                                sp["w_stack"], sp["m1"], sp["m2"])
        # fused 1x1-conv branch + residual add + (optional) GELU
        hid = pallas_linear_cf(hid, wlin["w"], wlin["b"],
                               apply_gelu=(i != n_layers - 1),
                               residual=x1.reshape(cout, n))

    # fused MLP head: fc1 -> gelu -> fc2 -> gelu -> fc3
    out = pallas_mlp_head(hid,
                          params["fc1_w"], params["fc1_b"],
                          params["fc2_w"], params["fc2_b"],
                          params["fc3_w"], params["fc3_b"])              # (out_dim, N)
    return jnp.transpose(out.reshape(params["out_dim"], bsz, h, w), (1, 2, 3, 0))


# ---------------------------------------------------------------------------
# Deterministic parameter initialization (shapes consistent with PyTorch __init__,
# weights stored (out, in) and the stacked mode-major spectral weight precomputed)
# ---------------------------------------------------------------------------
def init_params(key, modes1, modes2, width, fc_dim, in_dim, out_dim):
    layers = [width] * (len(modes1) + 1)
    keys = jax.random.split(key, 16 + 6 * len(modes1))
    it = iter(range(len(keys)))

    def nk():
        return keys[next(it)]

    def linear(cin, cout):
        bound = 1.0 / (cin ** 0.5)
        w_ = jax.random.uniform(nk(), (cout, cin), jnp.float32, -bound, bound)
        b_ = jax.random.uniform(nk(), (cout, 1), jnp.float32, -bound, bound)
        return w_, b_

    p = {"layers": layers, "out_dim": out_dim, "sp": [], "ws": []}
    p["fc0_w"], p["fc0_b"] = linear(in_dim, layers[0])

    for i, (m1, m2) in enumerate(zip(modes1, modes2)):
        cin, cout = layers[i], layers[i + 1]
        scale = 1.0 / (cin * cout)

        def cplx():
            return scale * jax.random.uniform(nk(), (cin, cout, m1, m2), jnp.float32)

        w1r, w1i, w2r, w2i = cplx(), cplx(), cplx(), cplx()

        # Hoisted once at param-build time:
        # mode-major (2*m1*m2, 2Cin, 2Cout) stacked-real weight [[wr, wi], [-wi, wr]].
        def to_mio(a):                               # (Cin,Cout,m1,m2) -> (m1*m2,Cin,Cout)
            return jnp.transpose(a, (2, 3, 0, 1)).reshape(m1 * m2, cin, cout)

        wr = jnp.concatenate([to_mio(w1r), to_mio(w2r)], axis=0)
        wi = jnp.concatenate([to_mio(w1i), to_mio(w2i)], axis=0)
        w_stack = jnp.concatenate(
            [jnp.concatenate([wr, wi], axis=-1),
             jnp.concatenate([-wi, wr], axis=-1)], axis=1)
        p["sp"].append({"w_stack": w_stack, "m1": m1, "m2": m2})

        # nn.Conv1d(cin, cout, 1) == pointwise linear over channels
        wv, bv = linear(cin, cout)
        p["ws"].append({"w": wv, "b": bv})

    p["fc1_w"], p["fc1_b"] = linear(layers[-1], fc_dim)
    p["fc2_w"], p["fc2_b"] = linear(fc_dim, layers[-1])
    p["fc3_w"], p["fc3_b"] = linear(layers[-1], out_dim)
    return p


if __name__ == "__main__":
    key = jax.random.PRNGKey(0)
    B, H, W = 2, 16, 16
    in_dim, out_dim = 3, 1
    width, fc_dim = 32, 64
    modes1 = [4, 4, 4]
    modes2 = [4, 4, 4]

    kp, kx = jax.random.split(key)
    params = init_params(kp, modes1, modes2, width, fc_dim, in_dim, out_dim)
    x = jax.random.normal(kx, (B, H, W, in_dim), dtype=jnp.float32)

    fwd = jax.jit(functools.partial(fno2d_forward, params))
    y = fwd(x)
    jax.block_until_ready(y)
    assert y.shape == (B, H, W, out_dim), y.shape
    assert bool(jnp.all(jnp.isfinite(y)))
    print("KERNEL_OK")
</pallas_src>

<mosaic_0001>
module attributes {stable_mosaic.version = 11 : i64} {
  func.func @_linear_cf_kernel(%arg0: i32, %arg1: memref<3x256xf32, #tpu.memory_space<vmem>>, %arg2: memref<32x3xf32, #tpu.memory_space<vmem>>, %arg3: memref<32x1xf32, #tpu.memory_space<vmem>>, %arg4: memref<32x256xf32, #tpu.memory_space<vmem>>) attributes {dimension_semantics = [#tpu.dimension_semantics<parallel>], iteration_bounds = array<i64: 2>, scalar_prefetch = 0 : i64, scratch_operands = 0 : i64, tpu.core_type = #tpu.core_type<tc>, window_params = [{transform_indices = @transform_0, window_bounds = array<i64: 3, 256>}, {pipeline_mode = #tpu.pipeline_mode<synchronous>, transform_indices = @transform_1, window_bounds = array<i64: 32, 3>}, {pipeline_mode = #tpu.pipeline_mode<synchronous>, transform_indices = @transform_2, window_bounds = array<i64: 32, 1>}, {transform_indices = @transform_3, window_bounds = array<i64: 32, 256>}]} {
    %c0 = arith.constant 0 : index
    %c0_0 = arith.constant 0 : index
    %0 = vector.load %arg2[%c0, %c0_0] : memref<32x3xf32, #tpu.memory_space<vmem>>, vector<32x3xf32>
    %c0_1 = arith.constant 0 : index
    %c0_2 = arith.constant 0 : index
    %1 = vector.load %arg1[%c0_1, %c0_2] : memref<3x256xf32, #tpu.memory_space<vmem>>, vector<3x256xf32>
    %cst = arith.constant dense<0.000000e+00> : vector<32x256xf32>
    %2 = tpu.matmul %0, %1, %cst {dimension_numbers = #tpu.dot_dimension_numbers<[1], [0], [0], [1], [0, 0, 1, 1], [], []>} : vector<32x3xf32>, vector<3x256xf32>, vector<32x256xf32> -> vector<32x256xf32>
    %c0_3 = arith.constant 0 : index
    %c0_4 = arith.constant 0 : index
    %3 = vector.load %arg3[%c0_3, %c0_4] : memref<32x1xf32, #tpu.memory_space<vmem>>, vector<32x1xf32>
    %4 = vector.broadcast %3 : vector<32x1xf32> to vector<32x256xf32>
    %5 = arith.addf %2, %4 : vector<32x256xf32>
    %c0_5 = arith.constant 0 : index
    %c0_6 = arith.constant 0 : index
    %6 = vector.load %arg4[%c0_5, %c0_6] : memref<32x256xf32, #tpu.memory_space<vmem>>, vector<32x256xf32>
    tpu.vector_store %arg4[%c0_5, %c0_6], %5 {strides = array<i32>} : memref<32x256xf32, #tpu.memory_space<vmem>>, vector<32x256xf32>,
    return
  }
  func.func @transform_0(%arg0: i32) -> (i32, i32) {
    %c0_i32 = arith.constant 0 : i32
    %c0_i32_0 = arith.constant 0 : i32
    return %c0_i32, %arg0 : i32, i32
  }
  func.func @transform_1(%arg0: i32) -> (i32, i32) {
    %c0_i32 = arith.constant 0 : i32
    %c0_i32_0 = arith.constant 0 : i32
    %c0_i32_1 = arith.constant 0 : i32
    return %c0_i32, %c0_i32_0 : i32, i32
  }
  func.func @transform_2(%arg0: i32) -> (i32, i32) {
    %c0_i32 = arith.constant 0 : i32
    %c0_i32_0 = arith.constant 0 : i32
    %c0_i32_1 = arith.constant 0 : i32
    return %c0_i32, %c0_i32_0 : i32, i32
  }
  func.func @transform_3(%arg0: i32) -> (i32, i32) {
    %c0_i32 = arith.constant 0 : i32
    %c0_i32_0 = arith.constant 0 : i32
    return %c0_i32, %arg0 : i32, i32
  }
}

module attributes {stable_mosaic.version = 11 : i64} {
  func.func @_spectral_mix_kernel(%arg0: i32, %arg1: memref<16x2x64xf32, #tpu.memory_space<vmem>>, %arg2: memref<16x64x64xf32, #tpu.memory_space<vmem>>, %arg3: memref<16x2x64xf32, #tpu.memory_space<vmem>>) attributes {dimension_semantics = [#tpu.dimension_semantics<parallel>], iteration_bounds = array<i64: 2>, scalar_prefetch = 0 : i64, scratch_operands = 0 : i64, tpu.core_type = #tpu.core_type<tc>, window_params = [{transform_indices = @transform_0, window_bounds = array<i64: 16, 2, 64>}, {transform_indices = @transform_1, window_bounds = array<i64: 16, 64, 64>}, {transform_indices = @transform_2, window_bounds = array<i64: 16, 2, 64>}]} {
    %c0 = arith.constant 0 : index
    %c0_0 = arith.constant 0 : index
    %c0_1 = arith.constant 0 : index
    %0 = vector.load %arg1[%c0, %c0_0, %c0_1] : memref<16x2x64xf32, #tpu.memory_space<vmem>>, vector<16x2x64xf32>
    %c0_2 = arith.constant 0 : index
    %c0_3 = arith.constant 0 : index
    %c0_4 = arith.constant 0 : index
    %1 = vector.load %arg2[%c0_2, %c0_3, %c0_4] : memref<16x64x64xf32, #tpu.memory_space<vmem>>, vector<16x64x64xf32>
    "tpu.trace_start"() <{level = 10 : i32, message = "gbi,gio->gbo"}> : () -> ()
    %cst = arith.constant dense<0.000000e+00> : vector<16x2x64xf32>
    %2 = tpu.matmul %0, %1, %cst {dimension_numbers = #tpu.dot_dimension_numbers<[2], [1], [1], [2], [0, 0, 0, 1, 1, 2], [0], [0]>} : vector<16x2x64xf32>, vector<16x64x64xf32>, vector<16x2x64xf32> -> vector<16x2x64xf32>
    "tpu.trace_stop"() : () -> ()
    %c0_5 = arith.constant 0 : index
    %c0_6 = arith.constant 0 : index
    %c0_7 = arith.constant 0 : index
    %3 = vector.load %arg3[%c0_5, %c0_6, %c0_7] : memref<16x2x64xf32, #tpu.memory_space<vmem>>, vector<16x2x64xf32>
    tpu.vector_store %arg3[%c0_5, %c0_6, %c0_7], %2 {strides = array<i32>} : memref<16x2x64xf32, #tpu.memory_space<vmem>>, vector<16x2x64xf32>,
    return
  }
  func.func @transform_0(%arg0: i32) -> (i32, i32, i32) {
    %c0_i32 = arith.constant 0 : i32
    %c0_i32_0 = arith.constant 0 : i32
    %c0_i32_1 = arith.constant 0 : i32
    return %arg0, %c0_i32, %c0_i32_0 : i32, i32, i32
  }
  func.func @transform_1(%arg0: i32) -> (i32, i32, i32) {
    %c0_i32 = arith.constant 0 : i32
    %c0_i32_0 = arith.constant 0 : i32
    %c0_i32_1 = arith.constant 0 : i32
    return %arg0, %c0_i32, %c0_i32_0 : i32, i32, i32
  }
  func.func @transform_2(%arg0: i32) -> (i32, i32, i32) {
    %c0_i32 = arith.constant 0 : i32
    %c0_i32_0 = arith.constant 0 : i32
    %c0_i32_1 = arith.constant 0 : i32
    return %arg0, %c0_i32, %c0_i32_0 : i32, i32, i32
  }
}

module attributes {stable_mosaic.version = 11 : i64} {
  func.func @_linear_cf_residual_kernel(%arg0: i32, %arg1: memref<32x256xf32, #tpu.memory_space<vmem>>, %arg2: memref<32x32xf32, #tpu.memory_space<vmem>>, %arg3: memref<32x1xf32, #tpu.memory_space<vmem>>, %arg4: memref<32x256xf32, #tpu.memory_space<vmem>>, %arg5: memref<32x256xf32, #tpu.memory_space<vmem>>) attributes {dimension_semantics = [#tpu.dimension_semantics<parallel>], iteration_bounds = array<i64: 2>, scalar_prefetch = 0 : i64, scratch_operands = 0 : i64, tpu.core_type = #tpu.core_type<tc>, window_params = [{transform_indices = @transform_0, window_bounds = array<i64: 32, 256>}, {pipeline_mode = #tpu.pipeline_mode<synchronous>, transform_indices = @transform_1, window_bounds = array<i64: 32, 32>}, {pipeline_mode = #tpu.pipeline_mode<synchronous>, transform_indices = @transform_2, window_bounds = array<i64: 32, 1>}, {transform_indices = @transform_3, window_bounds = array<i64: 32, 256>}, {transform_indices = @transform_4, window_bounds = array<i64: 32, 256>}]} {
    %c0 = arith.constant 0 : index
    %c0_0 = arith.constant 0 : index
    %0 = vector.load %arg2[%c0, %c0_0] : memref<32x32xf32, #tpu.memory_space<vmem>>, vector<32x32xf32>
    %c0_1 = arith.constant 0 : index
    %c0_2 = arith.constant 0 : index
    %1 = vector.load %arg1[%c0_1, %c0_2] : memref<32x256xf32, #tpu.memory_space<vmem>>, vector<32x256xf32>
    %cst = arith.constant dense<0.000000e+00> : vector<32x256xf32>
    %2 = tpu.matmul %0, %1, %cst {dimension_numbers = #tpu.dot_dimension_numbers<[1], [0], [0], [1], [0, 0, 1, 1], [], []>} : vector<32x32xf32>, vector<32x256xf32>, vector<32x256xf32> -> vector<32x256xf32>
    %c0_3 = arith.constant 0 : index
    %c0_4 = arith.constant 0 : index
    %3 = vector.load %arg3[%c0_3, %c0_4] : memref<32x1xf32, #tpu.memory_space<vmem>>, vector<32x1xf32>
    %4 = vector.broadcast %3 : vector<32x1xf32> to vector<32x256xf32>
    %5 = arith.addf %2, %4 : vector<32x256xf32>
    %c0_5 = arith.constant 0 : index
    %c0_6 = arith.constant 0 : index
    %6 = vector.load %arg4[%c0_5, %c0_6] : memref<32x256xf32, #tpu.memory_space<vmem>>, vector<32x256xf32>
    %7 = arith.addf %5, %6 : vector<32x256xf32>
    %cst_7 = arith.constant 5.000000e-01 : f32
    %8 = vector.broadcast %cst_7 : f32 to vector<32x256xf32>
    %9 = arith.mulf %8, %7 : vector<32x256xf32>
    %cst_8 = arith.constant 0.707106769 : f32
    %10 = vector.broadcast %cst_8 : f32 to vector<32x256xf32>
    %11 = arith.mulf %7, %10 : vector<32x256xf32>
    %12 = math.erf %11 : vector<32x256xf32>
    %cst_9 = arith.constant 1.000000e+00 : f32
    %13 = vector.broadcast %cst_9 : f32 to vector<32x256xf32>
    %14 = arith.addf %13, %12 : vector<32x256xf32>
    %15 = arith.mulf %9, %14 : vector<32x256xf32>
    %c0_10 = arith.constant 0 : index
    %c0_11 = arith.constant 0 : index
    %16 = vector.load %arg5[%c0_10, %c0_11] : memref<32x256xf32, #tpu.memory_space<vmem>>, vector<32x256xf32>
    tpu.vector_store %arg5[%c0_10, %c0_11], %15 {strides = array<i32>} : memref<32x256xf32, #tpu.memory_space<vmem>>, vector<32x256xf32>,
    return
  }
  func.func @transform_0(%arg0: i32) -> (i32, i32) {
    %c0_i32 = arith.constant 0 : i32
    %c0_i32_0 = arith.constant 0 : i32
    return %c0_i32, %arg0 : i32, i32
  }
  func.func @transform_1(%arg0: i32) -> (i32, i32) {
    %c0_i32 = arith.constant 0 : i32
    %c0_i32_0 = arith.constant 0 : i32
    %c0_i32_1 = arith.constant 0 : i32
    return %c0_i32, %c0_i32_0 : i32, i32
  }
  func.func @transform_2(%arg0: i32) -> (i32, i32) {
    %c0_i32 = arith.constant 0 : i32
    %c0_i32_0 = arith.constant 0 : i32
    %c0_i32_1 = arith.constant 0 : i32
    return %c0_i32, %c0_i32_0 : i32, i32
  }
  func.func @transform_3(%arg0: i32) -> (i32, i32) {
    %c0_i32 = arith.constant 0 : i32
    %c0_i32_0 = arith.constant 0 : i32
    return %c0_i32, %arg0 : i32, i32
  }
  func.func @transform_4(%arg0: i32) -> (i32, i32) {
    %c0_i32 = arith.constant 0 : i32
    %c0_i32_0 = arith.constant 0 : i32
    return %c0_i32, %arg0 : i32, i32
  }
}

module attributes {stable_mosaic.version = 11 : i64} {
  func.func @_mlp_head_kernel(%arg0: i32, %arg1: memref<32x256xf32, #tpu.memory_space<vmem>>, %arg2: memref<64x32xf32, #tpu.memory_space<vmem>>, %arg3: memref<64x1xf32, #tpu.memory_space<vmem>>, %arg4: memref<32x64xf32, #tpu.memory_space<vmem>>, %arg5: memref<32x1xf32, #tpu.memory_space<vmem>>, %arg6: memref<1x32xf32, #tpu.memory_space<vmem>>, %arg7: memref<1x1xf32, #tpu.memory_space<vmem>>, %arg8: memref<1x256xf32, #tpu.memory_space<vmem>>) attributes {dimension_semantics = [#tpu.dimension_semantics<parallel>], iteration_bounds = array<i64: 2>, scalar_prefetch = 0 : i64, scratch_operands = 0 : i64, tpu.core_type = #tpu.core_type<tc>, window_params = [{transform_indices = @transform_0, window_bounds = array<i64: 32, 256>}, {pipeline_mode = #tpu.pipeline_mode<synchronous>, transform_indices = @transform_1, window_bounds = array<i64: 64, 32>}, {pipeline_mode = #tpu.pipeline_mode<synchronous>, transform_indices = @transform_2, window_bounds = array<i64: 64, 1>}, {pipeline_mode = #tpu.pipeline_mode<synchronous>, transform_indices = @transform_3, window_bounds = array<i64: 32, 64>}, {pipeline_mode = #tpu.pipeline_mode<synchronous>, transform_indices = @transform_4, window_bounds = array<i64: 32, 1>}, {pipeline_mode = #tpu.pipeline_mode<synchronous>, transform_indices = @transform_5, window_bounds = array<i64: 1, 32>}, {pipeline_mode = #tpu.pipeline_mode<synchronous>, transform_indices = @transform_6, window_bounds = array<i64: 1, 1>}, {transform_indices = @transform_7, window_bounds = array<i64: 1, 256>}]} {
    %c0 = arith.constant 0 : index
    %c0_0 = arith.constant 0 : index
    %0 = vector.load %arg2[%c0, %c0_0] : memref<64x32xf32, #tpu.memory_space<vmem>>, vector<64x32xf32>
    %c0_1 = arith.constant 0 : index
    %c0_2 = arith.constant 0 : index
    %1 = vector.load %arg1[%c0_1, %c0_2] : memref<32x256xf32, #tpu.memory_space<vmem>>, vector<32x256xf32>
    %cst = arith.constant dense<0.000000e+00> : vector<64x256xf32>
    %2 = tpu.matmul %0, %1, %cst {dimension_numbers = #tpu.dot_dimension_numbers<[1], [0], [0], [1], [0, 0, 1, 1], [], []>} : vector<64x32xf32>, vector<32x256xf32>, vector<64x256xf32> -> vector<64x256xf32>
    %c0_3 = arith.constant 0 : index
    %c0_4 = arith.constant 0 : index
    %3 = vector.load %arg3[%c0_3, %c0_4] : memref<64x1xf32, #tpu.memory_space<vmem>>, vector<64x1xf32>
    %4 = vector.broadcast %3 : vector<64x1xf32> to vector<64x256xf32>
    %5 = arith.addf %2, %4 : vector<64x256xf32>
    %cst_5 = arith.constant 5.000000e-01 : f32
    %6 = vector.broadcast %cst_5 : f32 to vector<64x256xf32>
    %7 = arith.mulf %6, %5 : vector<64x256xf32>
    %cst_6 = arith.constant 0.707106769 : f32
    %8 = vector.broadcast %cst_6 : f32 to vector<64x256xf32>
    %9 = arith.mulf %5, %8 : vector<64x256xf32>
    %10 = math.erf %9 : vector<64x256xf32>
    %cst_7 = arith.constant 1.000000e+00 : f32
    %11 = vector.broadcast %cst_7 : f32 to vector<64x256xf32>
    %12 = arith.addf %11, %10 : vector<64x256xf32>
    %13 = arith.mulf %7, %12 : vector<64x256xf32>
    %c0_8 = arith.constant 0 : index
    %c0_9 = arith.constant 0 : index
    %14 = vector.load %arg4[%c0_8, %c0_9] : memref<32x64xf32, #tpu.memory_space<vmem>>, vector<32x64xf32>
    %cst_10 = arith.constant dense<0.000000e+00> : vector<32x256xf32>
    %15 = tpu.matmul %14, %13, %cst_10 {dimension_numbers = #tpu.dot_dimension_numbers<[1], [0], [0], [1], [0, 0, 1, 1], [], []>} : vector<32x64xf32>, vector<64x256xf32>, vector<32x256xf32> -> vector<32x256xf32>
    %c0_11 = arith.constant 0 : index
    %c0_12 = arith.constant 0 : index
    %16 = vector.load %arg5[%c0_11, %c0_12] : memref<32x1xf32, #tpu.memory_space<vmem>>, vector<32x1xf32>
    %17 = vector.broadcast %16 : vector<32x1xf32> to vector<32x256xf32>
    %18 = arith.addf %15, %17 : vector<32x256xf32>
    %cst_13 = arith.constant 5.000000e-01 : f32
    %19 = vector.broadcast %cst_13 : f32 to vector<32x256xf32>
    %20 = arith.mulf %19, %18 : vector<32x256xf32>
    %cst_14 = arith.constant 0.707106769 : f32
    %21 = vector.broadcast %cst_14 : f32 to vector<32x256xf32>
    %22 = arith.mulf %18, %21 : vector<32x256xf32>
    %23 = math.erf %22 : vector<32x256xf32>
    %cst_15 = arith.constant 1.000000e+00 : f32
    %24 = vector.broadcast %cst_15 : f32 to vector<32x256xf32>
    %25 = arith.addf %24, %23 : vector<32x256xf32>
    %26 = arith.mulf %20, %25 : vector<32x256xf32>
    %c0_16 = arith.constant 0 : index
    %c0_17 = arith.constant 0 : index
    %27 = vector.load %arg6[%c0_16, %c0_17] : memref<1x32xf32, #tpu.memory_space<vmem>>, vector<1x32xf32>
    %cst_18 = arith.constant dense<0.000000e+00> : vector<1x256xf32>
    %28 = tpu.matmul %27, %26, %cst_18 {dimension_numbers = #tpu.dot_dimension_numbers<[1], [0], [0], [1], [0, 0, 1, 1], [], []>} : vector<1x32xf32>, vector<32x256xf32>, vector<1x256xf32> -> vector<1x256xf32>
    %c0_19 = arith.constant 0 : index
    %c0_20 = arith.constant 0 : index
    %29 = vector.load %arg7[%c0_19, %c0_20] : memref<1x1xf32, #tpu.memory_space<vmem>>, vector<1x1xf32>
    %30 = vector.broadcast %29 : vector<1x1xf32> to vector<1x256xf32>
    %31 = arith.addf %28, %30 : vector<1x256xf32>
    %c0_21 = arith.constant 0 : index
    %c0_22 = arith.constant 0 : index
    %32 = vector.load %arg8[%c0_21, %c0_22] : memref<1x256xf32, #tpu.memory_space<vmem>>, vector<1x256xf32>
    tpu.vector_store %arg8[%c0_21, %c0_22], %31 {strides = array<i32>} : memref<1x256xf32, #tpu.memory_space<vmem>>, vector<1x256xf32>,
    return
  }
  func.func @transform_0(%arg0: i32) -> (i32, i32) {
    %c0_i32 = arith.constant 0 : i32
    %c0_i32_0 = arith.constant 0 : i32
    return %c0_i32, %arg0 : i32, i32
  }
  func.func @transform_1(%arg0: i32) -> (i32, i32) {
    %c0_i32 = arith.constant 0 : i32
    %c0_i32_0 = arith.constant 0 : i32
    %c0_i32_1 = arith.constant 0 : i32
    return %c0_i32, %c0_i32_0 : i32, i32
  }
  func.func @transform_2(%arg0: i32) -> (i32, i32) {
    %c0_i32 = arith.constant 0 : i32
    %c0_i32_0 = arith.constant 0 : i32
    %c0_i32_1 = arith.constant 0 : i32
    return %c0_i32, %c0_i32_0 : i32, i32
  }
  func.func @transform_3(%arg0: i32) -> (i32, i32) {
    %c0_i32 = arith.constant 0 : i32
    %c0_i32_0 = arith.constant 0 : i32
    %c0_i32_1 = arith.constant 0 : i32
    return %c0_i32, %c0_i32_0 : i32, i32
  }
  func.func @transform_4(%arg0: i32) -> (i32, i32) {
    %c0_i32 = arith.constant 0 : i32
    %c0_i32_0 = arith.constant 0 : i32
    %c0_i32_1 = arith.constant 0 : i32
    return %c0_i32, %c0_i32_0 : i32, i32
  }
  func.func @transform_5(%arg0: i32) -> (i32, i32) {
    %c0_i32 = arith.constant 0 : i32
    %c0_i32_0 = arith.constant 0 : i32
    %c0_i32_1 = arith.constant 0 : i32
    return %c0_i32, %c0_i32_0 : i32, i32
  }
  func.func @transform_6(%arg0: i32) -> (i32, i32) {
    %c0_i32 = arith.constant 0 : i32
    %c0_i32_0 = arith.constant 0 : i32
    %c0_i32_1 = arith.constant 0 : i32
    return %c0_i32, %c0_i32_0 : i32, i32
  }
  func.func @transform_7(%arg0: i32) -> (i32, i32) {
    %c0_i32 = arith.constant 0 : i32
    %c0_i32_0 = arith.constant 0 : i32
    return %c0_i32, %arg0 : i32, i32
  }
}

module attributes {stable_mosaic.version = 11 : i64} {
  func.func @_linear_cf_residual_kernel(%arg0: i32, %arg1: memref<32x256xf32, #tpu.memory_space<vmem>>, %arg2: memref<32x32xf32, #tpu.memory_space<vmem>>, %arg3: memref<32x1xf32, #tpu.memory_space<vmem>>, %arg4: memref<32x256xf32, #tpu.memory_space<vmem>>, %arg5: memref<32x256xf32, #tpu.memory_space<vmem>>) attributes {dimension_semantics = [#tpu.dimension_semantics<parallel>], iteration_bounds = array<i64: 2>, scalar_prefetch = 0 : i64, scratch_operands = 0 : i64, tpu.core_type = #tpu.core_type<tc>, window_params = [{transform_indices = @transform_0, window_bounds = array<i64: 32, 256>}, {pipeline_mode = #tpu.pipeline_mode<synchronous>, transform_indices = @transform_1, window_bounds = array<i64: 32, 32>}, {pipeline_mode = #tpu.pipeline_mode<synchronous>, transform_indices = @transform_2, window_bounds = array<i64: 32, 1>}, {transform_indices = @transform_3, window_bounds = array<i64: 32, 256>}, {transform_indices = @transform_4, window_bounds = array<i64: 32, 256>}]} {
    %c0 = arith.constant 0 : index
    %c0_0 = arith.constant 0 : index
    %0 = vector.load %arg2[%c0, %c0_0] : memref<32x32xf32, #tpu.memory_space<vmem>>, vector<32x32xf32>
    %c0_1 = arith.constant 0 : index
    %c0_2 = arith.constant 0 : index
    %1 = vector.load %arg1[%c0_1, %c0_2] : memref<32x256xf32, #tpu.memory_space<vmem>>, vector<32x256xf32>
    %cst = arith.constant dense<0.000000e+00> : vector<32x256xf32>
    %2 = tpu.matmul %0, %1, %cst {dimension_numbers = #tpu.dot_dimension_numbers<[1], [0], [0], [1], [0, 0, 1, 1], [], []>} : vector<32x32xf32>, vector<32x256xf32>, vector<32x256xf32> -> vector<32x256xf32>
    %c0_3 = arith.constant 0 : index
    %c0_4 = arith.constant 0 : index
    %3 = vector.load %arg3[%c0_3, %c0_4] : memref<32x1xf32, #tpu.memory_space<vmem>>, vector<32x1xf32>
    %4 = vector.broadcast %3 : vector<32x1xf32> to vector<32x256xf32>
    %5 = arith.addf %2, %4 : vector<32x256xf32>
    %c0_5 = arith.constant 0 : index
    %c0_6 = arith.constant 0 : index
    %6 = vector.load %arg4[%c0_5, %c0_6] : memref<32x256xf32, #tpu.memory_space<vmem>>, vector<32x256xf32>
    %7 = arith.addf %5, %6 : vector<32x256xf32>
    %c0_7 = arith.constant 0 : index
    %c0_8 = arith.constant 0 : index
    %8 = vector.load %arg5[%c0_7, %c0_8] : memref<32x256xf32, #tpu.memory_space<vmem>>, vector<32x256xf32>
    tpu.vector_store %arg5[%c0_7, %c0_8], %7 {strides = array<i32>} : memref<32x256xf32, #tpu.memory_space<vmem>>, vector<32x256xf32>,
    return
  }
  func.func @transform_0(%arg0: i32) -> (i32, i32) {
    %c0_i32 = arith.constant 0 : i32
    %c0_i32_0 = arith.constant 0 : i32
    return %c0_i32, %arg0 : i32, i32
  }
  func.func @transform_1(%arg0: i32) -> (i32, i32) {
    %c0_i32 = arith.constant 0 : i32
    %c0_i32_0 = arith.constant 0 : i32
    %c0_i32_1 = arith.constant 0 : i32
    return %c0_i32, %c0_i32_0 : i32, i32
  }
  func.func @transform_2(%arg0: i32) -> (i32, i32) {
    %c0_i32 = arith.constant 0 : i32
    %c0_i32_0 = arith.constant 0 : i32
    %c0_i32_1 = arith.constant 0 : i32
    return %c0_i32, %c0_i32_0 : i32, i32
  }
  func.func @transform_3(%arg0: i32) -> (i32, i32) {
    %c0_i32 = arith.constant 0 : i32
    %c0_i32_0 = arith.constant 0 : i32
    return %c0_i32, %arg0 : i32, i32
  }
  func.func @transform_4(%arg0: i32) -> (i32, i32) {
    %c0_i32 = arith.constant 0 : i32
    %c0_i32_0 = arith.constant 0 : i32
    return %c0_i32, %arg0 : i32, i32
  }
}

</mosaic_0001>

<llo_original>
// kernel: fno2d_forward.8
$region0: #{fno2d_forward.8}
  #allocation0 [shape = 'u32[]', space=smem, size = 0x4, offset = 0x4, fixed_abs, tag = 'smem constant byte address 0x4 - core index']
  #allocation1 [shape = 'u32[144,128]{1,0:T(1,128)}', space=vmem, size = 0x12000, scoped, tag = 'internal scratch']
  %s0 = inlined_call_operand.vmem [shape: f32[3,512], index: 0, kind: input, shape index: {}]
  %s1 = inlined_call_operand.vmem [shape: f32[32,3], index: 1, kind: input, shape index: {}]
  %s2 = inlined_call_operand.vmem [shape: f32[32,1], index: 2, kind: input, shape index: {}]
  %s3 = inlined_call_operand.vmem [shape: f32[32,512], index: 3, kind: output, shape index: {}]
  %s4 = sld [smem:[#allocation0]]
  $region64: #{fno2d_forward.8} parent=0
    _
  %s6 = ssub.s32 1, %s4
  %s7 = scalar_select 0, %s6, %s4
  $region1: #{fno2d_forward.8} parent=0
    #allocation2 [shape = 'u8[65536]{0}', space=vmem, size = 0x10000, scoped, tag = 'output window, operand 0']
    loop: start=0, step=1, limit=4
    $region2: #{fno2d_forward.8} parent=1 // loop_pre_header
      _
    $region3: #{fno2d_forward.8} parent=1 // loop_header
      %s9 = sphi 0, %s13
      %p10 = scmp.ge.s32.totalorder %s9, 4
      %s19 = sphi 0, %s21
      %s22 = sphi 0, %s19
      %s23 = sphi 0, %s22
      %s39 = sphi 0, %s23
      %s43 = sphi 0, %s43
      %s45 = sphi 0, %s43
      %s46 = sphi 0, %s45
      %s60 = sphi 0, %s46
      %s64 = sphi 0, %s64
      %s66 = sphi 0, %s64
      %s67 = sphi 0, %s66
      %s81 = sphi 0, %s67
      %s87 = sphi 0, %s89
      %s90 = sphi 0, %s87
      %s91 = sphi 0, %s90
      %s107 = sphi 0, %s91
    $region4: #{fno2d_forward.8} parent=1 // loop_header_branch
      %12 = sbr.rel (%p10) target = $region8
    $region5: #{fno2d_forward.8} parent=1 // loop_body
      %s14 = ssub.s32 %s9, 1
      %s15 = ssub.s32 %s9, 2
      %s16 = sadd.s32 %s9, 1
      %s17 = ssub.s32 %s9, %s16
      %p18 = scmp.eq.s32.totalorder %s17, 0
      %s20 = sadd.s32 %s19, 1
      %s21 = scalar_select %p18, %s19, %s20
      %p24 = pneg %p18
      %p25 = scmp.eq.s32.totalorder %s9, 1
      %p26 = por %p24, %p25
      %p27 = scmp.ne.s32.totalorder %s19, %s22
      %p28 = scmp.eq.s32.totalorder %s9, 0
      %p29 = por %p27, %p28
      %p30 = scmp.ne.s32.totalorder %s19, %s22
      %p31 = scmp.eq.s32.totalorder %s14, 1
      %p32 = por %p30, %p31
      %p33 = scmp.ne.s32.totalorder %s22, %s23
      %p34 = scmp.eq.s32.totalorder %s14, 0
      %p35 = por %p33, %p34
      %p36 = scmp.ne.s32.totalorder %s22, %s23
      %p37 = scmp.eq.s32.totalorder %s15, 1
      %p38 = por %p36, %p37
      %p40 = scmp.ne.s32.totalorder %s23, %s39
      %p41 = scmp.eq.s32.totalorder %s15, 0
      %p42 = por %p40, %p41
      %s44 = sadd.s32 %s43, 1
      %p47 = scmp.eq.s32.totalorder %s9, 1
      %p48 = scmp.ne.s32.totalorder %s43, %s45
      %p49 = scmp.eq.s32.totalorder %s9, 0
      %p50 = por %p48, %p49
      %p51 = scmp.ne.s32.totalorder %s43, %s45
      %p52 = scmp.eq.s32.totalorder %s14, 1
      %p53 = por %p51, %p52
      %p54 = scmp.ne.s32.totalorder %s45, %s46
      %p55 = scmp.eq.s32.totalorder %s14, 0
      %p56 = por %p54, %p55
      %p57 = scmp.ne.s32.totalorder %s45, %s46
      %p58 = scmp.eq.s32.totalorder %s15, 1
      %p59 = por %p57, %p58
      %p61 = scmp.ne.s32.totalorder %s46, %s60
      %p62 = scmp.eq.s32.totalorder %s15, 0
      %p63 = por %p61, %p62
      %s65 = sadd.s32 %s64, 1
      %p68 = scmp.eq.s32.totalorder %s9, 1
      %p69 = scmp.ne.s32.totalorder %s64, %s66
      %p70 = scmp.eq.s32.totalorder %s9, 0
      %p71 = por %p69, %p70
      %p72 = scmp.ne.s32.totalorder %s64, %s66
      %p73 = scmp.eq.s32.totalorder %s14, 1
      %p74 = por %p72, %p73
      %p75 = scmp.ne.s32.totalorder %s66, %s67
      %p76 = scmp.eq.s32.totalorder %s14, 0
      %p77 = por %p75, %p76
      %p78 = scmp.ne.s32.totalorder %s66, %s67
      %p79 = scmp.eq.s32.totalorder %s15, 1
      %p80 = por %p78, %p79
      %p82 = scmp.ne.s32.totalorder %s67, %s81
      %p83 = scmp.eq.s32.totalorder %s15, 0
      %p84 = por %p82, %p83
      %s85 = ssub.s32 %s9, %s16
      %p86 = scmp.eq.s32.totalorder %s85, 0
      %s88 = sadd.s32 %s87, 1
      %s89 = scalar_select %p86, %s87, %s88
      %p92 = pneg %p86
      %p93 = scmp.eq.s32.totalorder %s9, 1
      %p94 = por %p92, %p93
      %p95 = scmp.ne.s32.totalorder %s87, %s90
      %p96 = scmp.eq.s32.totalorder %s9, 0
      %p97 = por %p95, %p96
      %p98 = scmp.ne.s32.totalorder %s87, %s90
      %p99 = scmp.eq.s32.totalorder %s14, 1
      %p100 = por %p98, %p99
      %p101 = scmp.ne.s32.totalorder %s90, %s91
      %p102 = scmp.eq.s32.totalorder %s14, 0
      %p103 = por %p101, %p102
      %p104 = scmp.ne.s32.totalorder %s90, %s91
      %p105 = scmp.eq.s32.totalorder %s15, 1
      %p106 = por %p104, %p105
      %p108 = scmp.ne.s32.totalorder %s91, %s107
      %p109 = scmp.eq.s32.totalorder %s15, 0
      %p110 = por %p108, %p109
      %p111 = scmp.le.s32.totalorder 1, %s9
      %p112 = scmp.lt.s32.totalorder %s9, 3
      %p113 = pnand %p111, %p112
      %p114 = pneg %p113
      // Predicated region
      $region9: #{fno2d_forward.8} parent=5 // pred_check
        _
      $region10: #{fno2d_forward.8} parent=5 // pred_check_branch
        %116 = sbr.rel (%p113) target = $region12
      $region11: #{fno2d_forward.8} parent=5 // pred_region
        %s117 = ssub.s32 %s9, 1
        // Predicated region
        $region13: #{fno2d_forward.8} parent=11 // pred_check
          %p118 = pneg %p56
        $region14: #{fno2d_forward.8} parent=11 // pred_check_branch
          %120 = sbr.rel (%p118) target = $region16
        $region15: #{fno2d_forward.8} parent=11 // pred_region
          _
        $region16: #{fno2d_forward.8} parent=11 // pred_fallthru
          _
        // Predicated region
        $region17: #{fno2d_forward.8} parent=11 // pred_check
          %p121 = pneg %p77
        $region18: #{fno2d_forward.8} parent=11 // pred_check_branch
          %123 = sbr.rel (%p121) target = $region20
        $region19: #{fno2d_forward.8} parent=11 // pred_region
          _
        $region20: #{fno2d_forward.8} parent=11 // pred_fallthru
          _
      $region12: #{fno2d_forward.8} parent=5 // pred_fallthru
        _
      %p124 = scmp.lt.s32.totalorder %s9, 2
      // Predicated region
      $region21: #{fno2d_forward.8} parent=5 // pred_check
        %p125 = pneg %p124
      $region22: #{fno2d_forward.8} parent=5 // pred_check_branch
        %127 = sbr.rel (%p125) target = $region24
      $region23: #{fno2d_forward.8} parent=5 // pred_region
        // Predicated region
        $region25: #{fno2d_forward.8} parent=23 // pred_check
          %p128 = pneg %p29
        $region26: #{fno2d_forward.8} parent=23 // pred_check_branch
          %130 = sbr.rel (%p128) target = $region28
        $region27: #{fno2d_forward.8} parent=23 // pred_region
          %s131 = smul.u32 2, %s9
          %p132 = scmp.lt.s32.totalorder %s131, 3
          %s133 = scalar_select %p132, %s131, 3
          %s134 = smul.addr %s133, 4
          %s135 = scalar_lea.vmem %s0, %s134
          %s136 = smul.u32 2, %s9
        $region28: #{fno2d_forward.8} parent=23 // pred_fallthru
          _
      $region24: #{fno2d_forward.8} parent=5 // pred_fallthru
        _
      %p137 = scmp.le.s32.totalorder 1, %s9
      %p138 = scmp.lt.s32.totalorder %s9, 3
      %p139 = pnand %p137, %p138
      %p140 = pneg %p139
      // Predicated region
      $region29: #{fno2d_forward.8} parent=5 // pred_check
        _
      $region30: #{fno2d_forward.8} parent=5 // pred_check_branch
        %142 = sbr.rel (%p139) target = $region32
      $region31: #{fno2d_forward.8} parent=5 // pred_region
        %s143 = ssub.s32 %s9, 1
        %s144 = smul.u32 2, %s14
        %p145 = scmp.lt.s32.totalorder %s144, 3
        %s146 = scalar_select %p145, %s144, 3
        %s147 = smul.addr %s146, 4
        %s148 = scalar_lea.vmem %s0, %s147
        %p149 = pneg %p35
        %p150 = pneg %p32
        %p151 = pneg %p56
        %p152 = pneg %p53
        %p153 = pneg %p77
        %p154 = pneg %p74
        %p155 = pneg %p103
        %p156 = pneg %p100
        %s157 = sand.u32 %s90, 1
        %s158 = sand.u32 %s90, 1
        %s159 = smul.addr %s158, 64
        %s160 = scalar_lea.vmem [#allocation2], %s159
        %s161 = smul.u32 2, %s14
        %p162 = scmp.lt.s32.totalorder %s161, 3
        %s163 = scalar_select %p162, %s161, 3
        %s164 = smul.addr %s163, 4
        %s165 = scalar_lea.vmem %s0, %s164
        %s166 = smul.u32 2, %s14
        %s167 = smul.u32 2, %s14
        %v168 = vld [vmem:[%s1] sm:$0xff]
        %v169 = vld [vmem:[%s1 + $0x8] sm:$0xff]
        %v170 = vld [vmem:[%s1 + $0x10] sm:$0xff]
        %v171 = vld [vmem:[%s1 + $0x18] sm:$0xff]
        %v172 = vld [vmem:[%s165] sm:$0x77]
        %v173 = vld [vmem:[%s2] sm:$0xff]
        %v174 = vld [vmem:[%s2 + $0x8] sm:$0xff]
        %v175 = vld [vmem:[%s2 + $0x10] sm:$0xff]
        %v176 = vld [vmem:[%s2 + $0x18] sm:$0xff]
        %178 = vset.pattern.permute.xlu0 0
        %179 = vperm.xlu0 %178, %v173
        %v180 = vpop.permute.xlu0 %179
        %183 = vset.pattern.permute.xlu0 0
        %184 = vperm.xlu0 %183, %v174
        %v185 = vpop.permute.xlu0 %184
        %188 = vset.pattern.permute.xlu0 0
        %189 = vperm.xlu0 %188, %v175
        %v190 = vpop.permute.xlu0 %189
        %193 = vset.pattern.permute.xlu0 0
        %194 = vperm.xlu0 %193, %v176
        %v195 = vpop.permute.xlu0 %194
        %v198 = vcombine.high %v172, %v172
        %vm199 = vcmask 23552
        %v201 = vsel %vm199, %v168, 0
        %v204 = vsel %vm199, %v169, 0
        %v207 = vsel %vm199, %v170, 0
        %v210 = vsel %vm199, %v171, 0
        %vm212 = vcmask 1042432
        %v213 = vsel %vm212, %v172, 0
        %v215 = vsel %vm212, %v198, 0
        %217 = vmatprep.subr.mxu0 %v215
        %218 = vmatpush1.msra.mxu0 %v213
        %219 = vmatprep.subr.mxu0 0.0
        %220 = vmatpush1.msra.mxu0 0.0
        %221 = vmatprep.subr.mxu0 0.0
        %222 = vmatpush1.msra.mxu0 0.0
        %223 = vmatprep.subr.mxu0 0.0
        %224 = vmatpush1.msra.mxu0 0.0
        %225 = vmatprep.subr.mxu0 0.0
        %226 = vmatpush1.msra.mxu0 0.0
        %227 = vmatprep.subr.mxu0 0.0
        %228 = vmatpush1.msra.mxu0 0.0
        %229 = vmatprep.subr.mxu0 0.0
        %230 = vmatpush1.msra.mxu0 0.0
        %231 = vmatprep.subr.mxu0 0.0
        %232 = vmatpush1.msra.mxu0 0.0
        %233 = vmatprep.subr.mxu0 0.0
        %234 = vmatpush1.msra.mxu0 0.0
        %235 = vmatprep.subr.mxu0 0.0
        %236 = vmatpush1.msra.mxu0 0.0
        %237 = vmatprep.subr.mxu0 0.0
        %238 = vmatpush1.msra.mxu0 0.0
        %239 = vmatprep.subr.mxu0 0.0
        %240 = vmatpush1.msra.mxu0 0.0
        %241 = vmatprep.subr.mxu0 0.0
        %242 = vmatpush1.msra.mxu0 0.0
        %243 = vmatprep.subr.mxu0 0.0
        %244 = vmatpush1.msra.mxu0 0.0
        %245 = vmatprep.subr.mxu0 0.0
        %246 = vmatpush1.msra.mxu0 0.0
        %247 = vmatprep.subr.mxu0 0.0
        %248 = vmatpush1.msra.mxu0 0.0
        %249 = vmatprep.subr.mxu0 0.0
        %250 = vmatpush1.msra.mxu0 0.0
        %251 = vmatprep.subr.mxu0 0.0
        %252 = vmatpush1.msra.mxu0 0.0
        %253 = vmatprep.subr.mxu0 0.0
        %254 = vmatpush1.msra.mxu0 0.0
        %255 = vmatprep.subr.mxu0 0.0
        %256 = vmatpush1.msra.mxu0 0.0
        %257 = vmatprep.subr.mxu0 0.0
        %258 = vmatpush1.msra.mxu0 0.0
        %259 = vmatprep.subr.mxu0 0.0
        %260 = vmatpush1.msra.mxu0 0.0
        %261 = vmatprep.subr.mxu0 0.0
        %262 = vmatpush1.msra.mxu0 0.0
        %263 = vmatprep.subr.mxu0 0.0
        %264 = vmatpush1.msra.mxu0 0.0
        %265 = vmatprep.subr.mxu0 0.0
        %266 = vmatpush1.msra.mxu0 0.0
        %267 = vmatprep.subr.mxu0 0.0
        %268 = vmatpush1.msra.mxu0 0.0
        %269 = vmatprep.subr.mxu0 0.0
        %270 = vmatpush1.msra.mxu0 0.0
        %271 = vmatprep.subr.mxu0 0.0
        %272 = vmatpush1.msra.mxu0 0.0
        %273 = vmatprep.subr.mxu0 0.0
        %274 = vmatpush1.msra.mxu0 0.0
        %275 = vmatprep.subr.mxu0 0.0
        %276 = vmatpush1.msra.mxu0 0.0
        %277 = vmatprep.subr.mxu0 0.0
        %278 = vmatpush1.msra.mxu0 0.0
        %279 = vmatprep.subr.mxu0 0.0
        %280 = vmatpush1.msra.mxu0 0.0
        %281 = vmatprep.mubr.f32.mxu0 0.0
        %282 = vmatmul.mubr.f32.gmra.mrb[0].mxu0 %v201
        %v283 = vpop.f32.mrb[0].mxu0
        %v284 = vadd.f32 %v180, %v283
        %v285 = vpop.f32.mrb[0].mxu0
        %v286 = vadd.f32 %v180, %v285
        %287 = vmatprep.mubr.f32.mxu0 0.0
        %288 = vmatmul.mubr.f32.gmra.mrb[0].mxu0 %v204
        %v289 = vpop.f32.mrb[0].mxu0
        %v290 = vadd.f32 %v185, %v289
        %v291 = vpop.f32.mrb[0].mxu0
        %v292 = vadd.f32 %v185, %v291
        %293 = vmatprep.mubr.f32.mxu0 0.0
        %294 = vmatmul.mubr.f32.gmra.mrb[0].mxu0 %v207
        %v295 = vpop.f32.mrb[0].mxu0
        %v296 = vadd.f32 %v190, %v295
        %v297 = vpop.f32.mrb[0].mxu0
        %v298 = vadd.f32 %v190, %v297
        %299 = vmatprep.mubr.f32.mxu0 0.0
        %300 = vmatmul.mubr.f32.gmra.mrb[0].mxu0 %v210
        %v301 = vpop.f32.mrb[0].mxu0
        %v302 = vadd.f32 %v195, %v301
        %v303 = vpop.f32.mrb[0].mxu0
        %v304 = vadd.f32 %v195, %v303
        %305 = vdwg.mxu0
        %306 = vst [vmem:[%s160] sm:$0xff] %v284
        %307 = vst [vmem:[%s160 + $0x8] sm:$0xff] %v286
        %308 = vst [vmem:[%s160 + $0x10] sm:$0xff] %v290
        %309 = vst [vmem:[%s160 + $0x18] sm:$0xff] %v292
        %310 = vst [vmem:[%s160 + $0x20] sm:$0xff] %v296
        %311 = vst [vmem:[%s160 + $0x28] sm:$0xff] %v298
        %312 = vst [vmem:[%s160 + $0x30] sm:$0xff] %v302
        %313 = vst [vmem:[%s160 + $0x38] sm:$0xff] %v304
        %s314 = sand.u32 %s90, 1
        %s315 = sand.u32 %s90, 1
        %s316 = smul.addr %s315, 64
        %s317 = scalar_lea.vmem [#allocation2], %s316
        // Predicated region
        $region33: #{fno2d_forward.8} parent=31 // pred_check
          %p318 = pneg %p100
        $region34: #{fno2d_forward.8} parent=31 // pred_check_branch
          %320 = sbr.rel (%p318) target = $region36
        $region35: #{fno2d_forward.8} parent=31 // pred_region
          %s321 = smul.u32 2, %s14
          %s322 = smul.addr %s321, 8
          %s323 = scalar_lea.vmem %s3, %s322
          // Predicated region
          $region37: #{fno2d_forward.8} parent=35 // pred_check
            _
          $region38: #{fno2d_forward.8} parent=35 // pred_check_branch
            %325 = sbr.rel (0) target = $region40
          $region39: #{fno2d_forward.8} parent=35 // pred_region
            // Predicated region
            $region41: #{fno2d_forward.8} parent=39 // pred_check
              _
            $region42: #{fno2d_forward.8} parent=39 // pred_check_branch
              %327 = sbr.rel (0) target = $region44
            $region43: #{fno2d_forward.8} parent=39 // pred_region
              loop: start=0, step=1, limit=1
              $region45: #{fno2d_forward.8} parent=43 // loop_pre_header
                _
              $region46: #{fno2d_forward.8} parent=43 // loop_header
                %s329 = sphi 0, %s333
                %p330 = scmp.ge.s32.totalorder %s329, 1
                %s334 = sphi %s317, %s317
                %s335 = sphi %s323, %s323
              $region47: #{fno2d_forward.8} parent=43 // loop_header_branch
                %332 = sbr.rel (%p330) target = $region51
              $region48: #{fno2d_forward.8} parent=43 // loop_body
                %v336 = vld [vmem:[%s334] sm:$0xff]
                %337 = vst [vmem:[%s335] sm:$0xff] %v336
                %v338 = vld [vmem:[%s334 + $0x8] sm:$0xff]
                %339 = vst [vmem:[%s335 + $0x8] sm:$0xff] %v338
                %v340 = vld [vmem:[%s334 + $0x10] sm:$0xff]
                %341 = vst [vmem:[%s335 + $0x20] sm:$0xff] %v340
                %v342 = vld [vmem:[%s334 + $0x18] sm:$0xff]
                %343 = vst [vmem:[%s335 + $0x28] sm:$0xff] %v342
                %v344 = vld [vmem:[%s334 + $0x20] sm:$0xff]
                %345 = vst [vmem:[%s335 + $0x40] sm:$0xff] %v344
                %v346 = vld [vmem:[%s334 + $0x28] sm:$0xff]
                %347 = vst [vmem:[%s335 + $0x48] sm:$0xff] %v346
                %v348 = vld [vmem:[%s334 + $0x30] sm:$0xff]
                %349 = vst [vmem:[%s335 + $0x60] sm:$0xff] %v348
                %v350 = vld [vmem:[%s334 + $0x38] sm:$0xff]
                %351 = vst [vmem:[%s335 + $0x68] sm:$0xff] %v350
              $region49: #{fno2d_forward.8} parent=43 // loop_footer
                %s333 = sadd.s32 1, %s329
              $region50: #{fno2d_forward.8} parent=43 // loop_footer_branch
                %328 = sbr.rel target = $region46
              $region51: #{fno2d_forward.8} parent=43 // loop_exit
                _
            $region44: #{fno2d_forward.8} parent=39 // pred_fallthru
              _
            // Predicated region
            $region52: #{fno2d_forward.8} parent=39 // pred_check
              _
            $region53: #{fno2d_forward.8} parent=39 // pred_check_branch
              %353 = sbr.rel target = $region55
            $region54: #{fno2d_forward.8} parent=39 // pred_region
              _
            $region55: #{fno2d_forward.8} parent=39 // pred_fallthru
              _
          $region40: #{fno2d_forward.8} parent=35 // pred_fallthru
            _
          %354 = vnop
        $region36: #{fno2d_forward.8} parent=31 // pred_fallthru
          _
      $region32: #{fno2d_forward.8} parent=5 // pred_fallthru
        _
      %p355 = scmp.le.s32.totalorder 2, %s9
      // Predicated region
      $region56: #{fno2d_forward.8} parent=5 // pred_check
        %p356 = pneg %p355
      $region57: #{fno2d_forward.8} parent=5 // pred_check_branch
        %358 = sbr.rel (%p356) target = $region59
      $region58: #{fno2d_forward.8} parent=5 // pred_region
        %s359 = ssub.s32 %s9, 2
        // Predicated region
        $region60: #{fno2d_forward.8} parent=58 // pred_check
          %p360 = pneg %p106
        $region61: #{fno2d_forward.8} parent=58 // pred_check_branch
          %362 = sbr.rel (%p360) target = $region63
        $region62: #{fno2d_forward.8} parent=58 // pred_region
          %s363 = sand.u32 %s91, 1
          %s364 = sand.u32 %s91, 1
          %s365 = smul.addr %s364, 64
          %s366 = scalar_lea.vmem [#allocation2], %s365
        $region63: #{fno2d_forward.8} parent=58 // pred_fallthru
          _
      $region59: #{fno2d_forward.8} parent=5 // pred_fallthru
        _
    $region6: #{fno2d_forward.8} parent=1 // loop_footer
      %s13 = sadd.s32 1, %s9
    $region7: #{fno2d_forward.8} parent=1 // loop_footer_branch
      %8 = sbr.rel target = $region3
    $region8: #{fno2d_forward.8} parent=1 // loop_exit
      _

// kernel: fno2d_forward.9
$region0: #{fno2d_forward.9}
  #allocation0 [shape = 'u32[]', space=smem, size = 0x4, offset = 0x4, fixed_abs, tag = 'smem constant byte address 0x4 - core index']
  #allocation1 [shape = 'u32[144,128]{1,0:T(1,128)}', space=vmem, size = 0x12000, scoped, tag = 'internal scratch']
  %s0 = inlined_call_operand.vmem [shape: f32[32,2,64], index: 0, kind: input, shape index: {}]
  %s1 = inlined_call_operand.vmem [shape: f32[32,64,64], index: 1, kind: input, shape index: {}]
  %s2 = inlined_call_operand.vmem [shape: f32[32,2,64], index: 2, kind: output, shape index: {}]
  %s3 = sld [smem:[#allocation0]]
  $region41: #{fno2d_forward.9} parent=0
    _
  %s5 = ssub.s32 1, %s3
  %s6 = scalar_select 0, %s5, %s3
  loop: start=0, step=1, limit=4
  $region2: #{fno2d_forward.9} parent=0 // loop_pre_header
    _
  $region3: #{fno2d_forward.9} parent=0 // loop_header
    %s8 = sphi 0, %s12
    %p9 = scmp.ge.s32.totalorder %s8, 4
    %s18 = sphi 0, %s20
    %s21 = sphi 0, %s18
    %s22 = sphi 0, %s21
    %s38 = sphi 0, %s22
    %s44 = sphi 0, %s46
    %s47 = sphi 0, %s44
    %s48 = sphi 0, %s47
    %s64 = sphi 0, %s48
    %s70 = sphi 0, %s72
    %s73 = sphi 0, %s70
    %s74 = sphi 0, %s73
    %s90 = sphi 0, %s74
  $region4: #{fno2d_forward.9} parent=0 // loop_header_branch
    %11 = sbr.rel (%p9) target = $region8
  $region5: #{fno2d_forward.9} parent=0 // loop_body
    %s13 = ssub.s32 %s8, 1
    %s14 = ssub.s32 %s8, 2
    %s15 = sadd.s32 %s8, 1
    %s16 = ssub.s32 %s8, %s15
    %p17 = scmp.eq.s32.totalorder %s16, 0
    %s19 = sadd.s32 %s18, 1
    %s20 = scalar_select %p17, %s18, %s19
    %p23 = pneg %p17
    %p24 = scmp.eq.s32.totalorder %s8, 1
    %p25 = por %p23, %p24
    %p26 = scmp.ne.s32.totalorder %s18, %s21
    %p27 = scmp.eq.s32.totalorder %s8, 0
    %p28 = por %p26, %p27
    %p29 = scmp.ne.s32.totalorder %s18, %s21
    %p30 = scmp.eq.s32.totalorder %s13, 1
    %p31 = por %p29, %p30
    %p32 = scmp.ne.s32.totalorder %s21, %s22
    %p33 = scmp.eq.s32.totalorder %s13, 0
    %p34 = por %p32, %p33
    %p35 = scmp.ne.s32.totalorder %s21, %s22
    %p36 = scmp.eq.s32.totalorder %s14, 1
    %p37 = por %p35, %p36
    %p39 = scmp.ne.s32.totalorder %s22, %s38
    %p40 = scmp.eq.s32.totalorder %s14, 0
    %p41 = por %p39, %p40
    %s42 = ssub.s32 %s8, %s15
    %p43 = scmp.eq.s32.totalorder %s42, 0
    %s45 = sadd.s32 %s44, 1
    %s46 = scalar_select %p43, %s44, %s45
    %p49 = pneg %p43
    %p50 = scmp.eq.s32.totalorder %s8, 1
    %p51 = por %p49, %p50
    %p52 = scmp.ne.s32.totalorder %s44, %s47
    %p53 = scmp.eq.s32.totalorder %s8, 0
    %p54 = por %p52, %p53
    %p55 = scmp.ne.s32.totalorder %s44, %s47
    %p56 = scmp.eq.s32.totalorder %s13, 1
    %p57 = por %p55, %p56
    %p58 = scmp.ne.s32.totalorder %s47, %s48
    %p59 = scmp.eq.s32.totalorder %s13, 0
    %p60 = por %p58, %p59
    %p61 = scmp.ne.s32.totalorder %s47, %s48
    %p62 = scmp.eq.s32.totalorder %s14, 1
    %p63 = por %p61, %p62
    %p65 = scmp.ne.s32.totalorder %s48, %s64
    %p66 = scmp.eq.s32.totalorder %s14, 0
    %p67 = por %p65, %p66
    %s68 = ssub.s32 %s8, %s15
    %p69 = scmp.eq.s32.totalorder %s68, 0
    %s71 = sadd.s32 %s70, 1
    %s72 = scalar_select %p69, %s70, %s71
    %p75 = pneg %p69
    %p76 = scmp.eq.s32.totalorder %s8, 1
    %p77 = por %p75, %p76
    %p78 = scmp.ne.s32.totalorder %s70, %s73
    %p79 = scmp.eq.s32.totalorder %s8, 0
    %p80 = por %p78, %p79
    %p81 = scmp.ne.s32.totalorder %s70, %s73
    %p82 = scmp.eq.s32.totalorder %s13, 1
    %p83 = por %p81, %p82
    %p84 = scmp.ne.s32.totalorder %s73, %s74
    %p85 = scmp.eq.s32.totalorder %s13, 0
    %p86 = por %p84, %p85
    %p87 = scmp.ne.s32.totalorder %s73, %s74
    %p88 = scmp.eq.s32.totalorder %s14, 1
    %p89 = por %p87, %p88
    %p91 = scmp.ne.s32.totalorder %s74, %s90
    %p92 = scmp.eq.s32.totalorder %s14, 0
    %p93 = por %p91, %p92
    %p94 = scmp.le.s32.totalorder 1, %s8
    %p95 = scmp.lt.s32.totalorder %s8, 3
    %p96 = pnand %p94, %p95
    %p97 = pneg %p96
    // Predicated region
    $region9: #{fno2d_forward.9} parent=5 // pred_check
      _
    $region10: #{fno2d_forward.9} parent=5 // pred_check_branch
      %99 = sbr.rel (%p96) target = $region12
    $region11: #{fno2d_forward.9} parent=5 // pred_region
      %s100 = ssub.s32 %s8, 1
    $region12: #{fno2d_forward.9} parent=5 // pred_fallthru
      _
    %p101 = scmp.lt.s32.totalorder %s8, 2
    // Predicated region
    $region13: #{fno2d_forward.9} parent=5 // pred_check
      %p102 = pneg %p101
    $region14: #{fno2d_forward.9} parent=5 // pred_check_branch
      %104 = sbr.rel (%p102) target = $region16
    $region15: #{fno2d_forward.9} parent=5 // pred_region
      // Predicated region
      $region17: #{fno2d_forward.9} parent=15 // pred_check
        %p105 = pneg %p28
      $region18: #{fno2d_forward.9} parent=15 // pred_check_branch
        %107 = sbr.rel (%p105) target = $region20
      $region19: #{fno2d_forward.9} parent=15 // pred_region
        %s108 = smul.u32 16, %s8
        %p109 = scmp.lt.s32.totalorder %s108, 31
        %s110 = scalar_select %p109, %s108, 31
        %s111 = smul.addr %s110, 2
        %s112 = scalar_lea.vmem %s0, %s111
        %s113 = smul.u32 16, %s8
      $region20: #{fno2d_forward.9} parent=15 // pred_fallthru
        _
      // Predicated region
      $region21: #{fno2d_forward.9} parent=15 // pred_check
        %p114 = pneg %p54
      $region22: #{fno2d_forward.9} parent=15 // pred_check_branch
        %116 = sbr.rel (%p114) target = $region24
      $region23: #{fno2d_forward.9} parent=15 // pred_region
        %s117 = smul.u32 16, %s8
        %p118 = scmp.lt.s32.totalorder %s117, 31
        %s119 = scalar_select %p118, %s117, 31
        %s120 = smul.addr %s119, 8
        %s121 = smul.addr %s120, 8
        %s122 = scalar_lea.vmem %s1, %s121
        %s123 = smul.u32 16, %s8
      $region24: #{fno2d_forward.9} parent=15 // pred_fallthru
        _
    $region16: #{fno2d_forward.9} parent=5 // pred_fallthru
      _
    %p124 = scmp.le.s32.totalorder 1, %s8
    %p125 = scmp.lt.s32.totalorder %s8, 3
    %p126 = pnand %p124, %p125
    %p127 = pneg %p126
    // Predicated region
    $region25: #{fno2d_forward.9} parent=5 // pred_check
      _
    $region26: #{fno2d_forward.9} parent=5 // pred_check_branch
      %129 = sbr.rel (%p126) target = $region28
    $region27: #{fno2d_forward.9} parent=5 // pred_region
      %s130 = ssub.s32 %s8, 1
      %s131 = smul.u32 16, %s13
      %p132 = scmp.lt.s32.totalorder %s131, 31
      %s133 = scalar_select %p132, %s131, 31
      %s134 = smul.addr %s133, 2
      %s135 = scalar_lea.vmem %s0, %s134
      %p136 = pneg %p34
      %p137 = pneg %p31
      %s138 = smul.u32 16, %s13
      %p139 = scmp.lt.s32.totalorder %s138, 31
      %s140 = scalar_select %p139, %s138, 31
      %s141 = smul.addr %s140, 8
      %s142 = smul.addr %s141, 8
      %s143 = scalar_lea.vmem %s1, %s142
      %p144 = pneg %p60
      %p145 = pneg %p57
      %p146 = pneg %p86
      %p147 = pneg %p83
      %s148 = smul.u32 16, %s13
      %p149 = scmp.lt.s32.totalorder %s148, 31
      %s150 = scalar_select %p149, %s148, 31
      %s151 = smul.addr %s150, 2
      %s152 = scalar_lea.vmem %s2, %s151
      %s153 = smul.u32 16, %s13
      %p154 = scmp.lt.s32.totalorder %s153, 31
      %s155 = scalar_select %p154, %s153, 31
      %s156 = smul.addr %s155, 2
      %s157 = scalar_lea.vmem %s0, %s156
      %s158 = smul.u32 16, %s13
      %s159 = smul.u32 16, %s13
      %p160 = scmp.lt.s32.totalorder %s159, 31
      %s161 = scalar_select %p160, %s159, 31
      %s162 = smul.addr %s161, 8
      %s163 = smul.addr %s162, 8
      %s164 = scalar_lea.vmem %s1, %s163
      %s165 = smul.u32 16, %s13
      %s166 = smul.u32 16, %s13
      %p167 = scmp.lt.s32.totalorder %s166, 31
      %s168 = scalar_select %p167, %s166, 31
      %s169 = smul.addr %s168, 2
      %s170 = scalar_lea.vmem %s2, %s169
      %s171 = smul.u32 16, %s13
      %v172 = vld [vmem:[%s157] sm:$0x3]
      %v173 = vld [vmem:[%s157 + $0x2] sm:$0x3]
      %v174 = vld [vmem:[%s157 + $0x4] sm:$0x3]
      %v175 = vld [vmem:[%s157 + $0x6] sm:$0x3]
      %v176 = vld [vmem:[%s157 + $0x8] sm:$0x3]
      %v177 = vld [vmem:[%s157 + $0xa] sm:$0x3]
      %v178 = vld [vmem:[%s157 + $0xc] sm:$0x3]
      %v179 = vld [vmem:[%s157 + $0xe] sm:$0x3]
      %v180 = vld [vmem:[%s157 + $0x10] sm:$0x3]
      %v181 = vld [vmem:[%s157 + $0x12] sm:$0x3]
      %v182 = vld [vmem:[%s157 + $0x14] sm:$0x3]
      %v183 = vld [vmem:[%s157 + $0x16] sm:$0x3]
      %v184 = vld [vmem:[%s157 + $0x18] sm:$0x3]
      %v185 = vld [vmem:[%s157 + $0x1a] sm:$0x3]
      %v186 = vld [vmem:[%s157 + $0x1c] sm:$0x3]
      %v187 = vld [vmem:[%s157 + $0x1e] sm:$0x3]
      %v188 = vld [vmem:[%s164] sm:$0xff]
      %v189 = vld [vmem:[%s164 + $0x8] sm:$0xff]
      %v190 = vld [vmem:[%s164 + $0x10] sm:$0xff]
      %v191 = vld [vmem:[%s164 + $0x18] sm:$0xff]
      %v192 = vld [vmem:[%s164 + $0x20] sm:$0xff]
      %v193 = vld [vmem:[%s164 + $0x28] sm:$0xff]
      %v194 = vld [vmem:[%s164 + $0x30] sm:$0xff]
      %v195 = vld [vmem:[%s164 + $0x38] sm:$0xff]
      %v196 = vld [vmem:[%s164 + $0x40] sm:$0xff]
      %v197 = vld [vmem:[%s164 + $0x48] sm:$0xff]
      %v198 = vld [vmem:[%s164 + $0x50] sm:$0xff]
      %v199 = vld [vmem:[%s164 + $0x58] sm:$0xff]
      %v200 = vld [vmem:[%s164 + $0x60] sm:$0xff]
      %v201 = vld [vmem:[%s164 + $0x68] sm:$0xff]
      %v202 = vld [vmem:[%s164 + $0x70] sm:$0xff]
      %v203 = vld [vmem:[%s164 + $0x78] sm:$0xff]
      %v204 = vld [vmem:[%s164 + $0x80] sm:$0xff]
      %v205 = vld [vmem:[%s164 + $0x88] sm:$0xff]
      %v206 = vld [vmem:[%s164 + $0x90] sm:$0xff]
      %v207 = vld [vmem:[%s164 + $0x98] sm:$0xff]
      %v208 = vld [vmem:[%s164 + $0xa0] sm:$0xff]
      %v209 = vld [vmem:[%s164 + $0xa8] sm:$0xff]
      %v210 = vld [vmem:[%s164 + $0xb0] sm:$0xff]
      %v211 = vld [vmem:[%s164 + $0xb8] sm:$0xff]
      %v212 = vld [vmem:[%s164 + $0xc0] sm:$0xff]
      %v213 = vld [vmem:[%s164 + $0xc8] sm:$0xff]
      %v214 = vld [vmem:[%s164 + $0xd0] sm:$0xff]
      %v215 = vld [vmem:[%s164 + $0xd8] sm:$0xff]
      %v216 = vld [vmem:[%s164 + $0xe0] sm:$0xff]
      %v217 = vld [vmem:[%s164 + $0xe8] sm:$0xff]
      %v218 = vld [vmem:[%s164 + $0xf0] sm:$0xff]
      %v219 = vld [vmem:[%s164 + $0xf8] sm:$0xff]
      %v220 = vld [vmem:[%s164 + $0x100] sm:$0xff]
      %v221 = vld [vmem:[%s164 + $0x108] sm:$0xff]
      %v222 = vld [vmem:[%s164 + $0x110] sm:$0xff]
      %v223 = vld [vmem:[%s164 + $0x118] sm:$0xff]
      %v224 = vld [vmem:[%s164 + $0x120] sm:$0xff]
      %v225 = vld [vmem:[%s164 + $0x128] sm:$0xff]
      %v226 = vld [vmem:[%s164 + $0x130] sm:$0xff]
      %v227 = vld [vmem:[%s164 + $0x138] sm:$0xff]
      %v228 = vld [vmem:[%s164 + $0x140] sm:$0xff]
      %v229 = vld [vmem:[%s164 + $0x148] sm:$0xff]
      %v230 = vld [vmem:[%s164 + $0x150] sm:$0xff]
      %v231 = vld [vmem:[%s164 + $0x158] sm:$0xff]
      %v232 = vld [vmem:[%s164 + $0x160] sm:$0xff]
      %v233 = vld [vmem:[%s164 + $0x168] sm:$0xff]
      %v234 = vld [vmem:[%s164 + $0x170] sm:$0xff]
      %v235 = vld [vmem:[%s164 + $0x178] sm:$0xff]
      %v236 = vld [vmem:[%s164 + $0x180] sm:$0xff]
      %v237 = vld [vmem:[%s164 + $0x188] sm:$0xff]
      %v238 = vld [vmem:[%s164 + $0x190] sm:$0xff]
      %v239 = vld [vmem:[%s164 + $0x198] sm:$0xff]
      %v240 = vld [vmem:[%s164 + $0x1a0] sm:$0xff]
      %v241 = vld [vmem:[%s164 + $0x1a8] sm:$0xff]
      %v242 = vld [vmem:[%s164 + $0x1b0] sm:$0xff]
      %v243 = vld [vmem:[%s164 + $0x1b8] sm:$0xff]
      %v244 = vld [vmem:[%s164 + $0x1c0] sm:$0xff]
      %v245 = vld [vmem:[%s164 + $0x1c8] sm:$0xff]
      %v246 = vld [vmem:[%s164 + $0x1d0] sm:$0xff]
      %v247 = vld [vmem:[%s164 + $0x1d8] sm:$0xff]
      %v248 = vld [vmem:[%s164 + $0x1e0] sm:$0xff]
      %v249 = vld [vmem:[%s164 + $0x1e8] sm:$0xff]
      %v250 = vld [vmem:[%s164 + $0x1f0] sm:$0xff]
      %v251 = vld [vmem:[%s164 + $0x1f8] sm:$0xff]
      %v252 = vld [vmem:[%s164 + $0x200] sm:$0xff]
      %v253 = vld [vmem:[%s164 + $0x208] sm:$0xff]
      %v254 = vld [vmem:[%s164 + $0x210] sm:$0xff]
      %v255 = vld [vmem:[%s164 + $0x218] sm:$0xff]
      %v256 = vld [vmem:[%s164 + $0x220] sm:$0xff]
      %v257 = vld [vmem:[%s164 + $0x228] sm:$0xff]
      %v258 = vld [vmem:[%s164 + $0x230] sm:$0xff]
      %v259 = vld [vmem:[%s164 + $0x238] sm:$0xff]
      %v260 = vld [vmem:[%s164 + $0x240] sm:$0xff]
      %v261 = vld [vmem:[%s164 + $0x248] sm:$0xff]
      %v262 = vld [vmem:[%s164 + $0x250] sm:$0xff]
      %v263 = vld [vmem:[%s164 + $0x258] sm:$0xff]
      %v264 = vld [vmem:[%s164 + $0x260] sm:$0xff]
      %v265 = vld [vmem:[%s164 + $0x268] sm:$0xff]
      %v266 = vld [vmem:[%s164 + $0x270] sm:$0xff]
      %v267 = vld [vmem:[%s164 + $0x278] sm:$0xff]
      %v268 = vld [vmem:[%s164 + $0x280] sm:$0xff]
      %v269 = vld [vmem:[%s164 + $0x288] sm:$0xff]
      %v270 = vld [vmem:[%s164 + $0x290] sm:$0xff]
      %v271 = vld [vmem:[%s164 + $0x298] sm:$0xff]
      %v272 = vld [vmem:[%s164 + $0x2a0] sm:$0xff]
      %v273 = vld [vmem:[%s164 + $0x2a8] sm:$0xff]
      %v274 = vld [vmem:[%s164 + $0x2b0] sm:$0xff]
      %v275 = vld [vmem:[%s164 + $0x2b8] sm:$0xff]
      %v276 = vld [vmem:[%s164 + $0x2c0] sm:$0xff]
      %v277 = vld [vmem:[%s164 + $0x2c8] sm:$0xff]
      %v278 = vld [vmem:[%s164 + $0x2d0] sm:$0xff]
      %v279 = vld [vmem:[%s164 + $0x2d8] sm:$0xff]
      %v280 = vld [vmem:[%s164 + $0x2e0] sm:$0xff]
      %v281 = vld [vmem:[%s164 + $0x2e8] sm:$0xff]
      %v282 = vld [vmem:[%s164 + $0x2f0] sm:$0xff]
      %v283 = vld [vmem:[%s164 + $0x2f8] sm:$0xff]
      %v284 = vld [vmem:[%s164 + $0x300] sm:$0xff]
      %v285 = vld [vmem:[%s164 + $0x308] sm:$0xff]
      %v286 = vld [vmem:[%s164 + $0x310] sm:$0xff]
      %v287 = vld [vmem:[%s164 + $0x318] sm:$0xff]
      %v288 = vld [vmem:[%s164 + $0x320] sm:$0xff]
      %v289 = vld [vmem:[%s164 + $0x328] sm:$0xff]
      %v290 = vld [vmem:[%s164 + $0x330] sm:$0xff]
      %v291 = vld [vmem:[%s164 + $0x338] sm:$0xff]
      %v292 = vld [vmem:[%s164 + $0x340] sm:$0xff]
      %v293 = vld [vmem:[%s164 + $0x348] sm:$0xff]
      %v294 = vld [vmem:[%s164 + $0x350] sm:$0xff]
      %v295 = vld [vmem:[%s164 + $0x358] sm:$0xff]
      %v296 = vld [vmem:[%s164 + $0x360] sm:$0xff]
      %v297 = vld [vmem:[%s164 + $0x368] sm:$0xff]
      %v298 = vld [vmem:[%s164 + $0x370] sm:$0xff]
      %v299 = vld [vmem:[%s164 + $0x378] sm:$0xff]
      %v300 = vld [vmem:[%s164 + $0x380] sm:$0xff]
      %v301 = vld [vmem:[%s164 + $0x388] sm:$0xff]
      %v302 = vld [vmem:[%s164 + $0x390] sm:$0xff]
      %v303 = vld [vmem:[%s164 + $0x398] sm:$0xff]
      %v304 = vld [vmem:[%s164 + $0x3a0] sm:$0xff]
      %v305 = vld [vmem:[%s164 + $0x3a8] sm:$0xff]
      %v306 = vld [vmem:[%s164 + $0x3b0] sm:$0xff]
      %v307 = vld [vmem:[%s164 + $0x3b8] sm:$0xff]
      %v308 = vld [vmem:[%s164 + $0x3c0] sm:$0xff]
      %v309 = vld [vmem:[%s164 + $0x3c8] sm:$0xff]
      %v310 = vld [vmem:[%s164 + $0x3d0] sm:$0xff]
      %v311 = vld [vmem:[%s164 + $0x3d8] sm:$0xff]
      %v312 = vld [vmem:[%s164 + $0x3e0] sm:$0xff]
      %v313 = vld [vmem:[%s164 + $0x3e8] sm:$0xff]
      %v314 = vld [vmem:[%s164 + $0x3f0] sm:$0xff]
      %v315 = vld [vmem:[%s164 + $0x3f8] sm:$0xff]
      %vm316 = vcmask 523264
      %v318 = vsel %vm316, %v172, 0
      %320 = vmatprep.subr.mxu0 0.0
      %321 = vmatpush1.msra.mxu0 %v188
      %322 = vmatprep.subr.mxu0 0.0
      %323 = vmatpush1.msra.mxu0 %v189
      %324 = vmatprep.subr.mxu0 0.0
      %325 = vmatpush1.msra.mxu0 %v190
      %326 = vmatprep.subr.mxu0 0.0
      %327 = vmatpush1.msra.mxu0 %v191
      %328 = vmatprep.subr.mxu0 0.0
      %329 = vmatpush1.msra.mxu0 %v192
      %330 = vmatprep.subr.mxu0 0.0
      %331 = vmatpush1.msra.mxu0 %v193
      %332 = vmatprep.subr.mxu0 0.0
      %333 = vmatpush1.msra.mxu0 %v194
      %334 = vmatprep.subr.mxu0 0.0
      %335 = vmatpush1.msra.mxu0 %v195
      %336 = vmatprep.subr.mxu0 0.0
      %337 = vmatpush1.msra.mxu0 0.0
      %338 = vmatprep.subr.mxu0 0.0
      %339 = vmatpush1.msra.mxu0 0.0
      %340 = vmatprep.subr.mxu0 0.0
      %341 = vmatpush1.msra.mxu0 0.0
      %342 = vmatprep.subr.mxu0 0.0
      %343 = vmatpush1.msra.mxu0 0.0
      %344 = vmatprep.subr.mxu0 0.0
      %345 = vmatpush1.msra.mxu0 0.0
      %346 = vmatprep.subr.mxu0 0.0
      %347 = vmatpush1.msra.mxu0 0.0
      %348 = vmatprep.subr.mxu0 0.0
      %349 = vmatpush1.msra.mxu0 0.0
      %350 = vmatprep.subr.mxu0 0.0
      %351 = vmatpush1.msra.mxu0 0.0
      %352 = vmatprep.subr.mxu0 0.0
      %353 = vmatpush1.msra.mxu0 0.0
      %354 = vmatprep.subr.mxu0 0.0
      %355 = vmatpush1.msra.mxu0 0.0
      %356 = vmatprep.subr.mxu0 0.0
      %357 = vmatpush1.msra.mxu0 0.0
      %358 = vmatprep.subr.mxu0 0.0
      %359 = vmatpush1.msra.mxu0 0.0
      %360 = vmatprep.subr.mxu0 0.0
      %361 = vmatpush1.msra.mxu0 0.0
      %362 = vmatprep.subr.mxu0 0.0
      %363 = vmatpush1.msra.mxu0 0.0
      %364 = vmatprep.subr.mxu0 0.0
      %365 = vmatpush1.msra.mxu0 0.0
      %366 = vmatprep.subr.mxu0 0.0
      %367 = vmatpush1.msra.mxu0 0.0
      %368 = vmatprep.subr.mxu0 0.0
      %369 = vmatpush1.msra.mxu0 0.0
      %370 = vmatprep.subr.mxu0 0.0
      %371 = vmatpush1.msra.mxu0 0.0
      %372 = vmatprep.subr.mxu0 0.0
      %373 = vmatpush1.msra.mxu0 0.0
      %374 = vmatprep.subr.mxu0 0.0
      %375 = vmatpush1.msra.mxu0 0.0
      %376 = vmatprep.subr.mxu0 0.0
      %377 = vmatpush1.msra.mxu0 0.0
      %378 = vmatprep.subr.mxu0 0.0
      %379 = vmatpush1.msra.mxu0 0.0
      %380 = vmatprep.subr.mxu0 0.0
      %381 = vmatpush1.msra.mxu0 0.0
      %382 = vmatprep.subr.mxu0 0.0
      %383 = vmatpush1.msra.mxu0 0.0
      %384 = vmatprep.mubr.f32.mxu0 0.0
      %385 = vmatmul.mubr.f32.gmra.mrb[0].mxu0 %v318
      %v386 = vpop.f32.mrb[0].mxu0
      %v387 = vadd.f32 0.0, %v386
      %v388 = vpop.f32.mrb[0].mxu0
      %389 = vdwg.mxu0
      %v391 = vsel %vm316, %v173, 0
      %393 = vmatprep.subr.mxu0 0.0
      %394 = vmatpush1.msra.mxu0 %v196
      %395 = vmatprep.subr.mxu0 0.0
      %396 = vmatpush1.msra.mxu0 %v197
      %397 = vmatprep.subr.mxu0 0.0
      %398 = vmatpush1.msra.mxu0 %v198
      %399 = vmatprep.subr.mxu0 0.0
      %400 = vmatpush1.msra.mxu0 %v199
      %401 = vmatprep.subr.mxu0 0.0
      %402 = vmatpush1.msra.mxu0 %v200
      %403 = vmatprep.subr.mxu0 0.0
      %404 = vmatpush1.msra.mxu0 %v201
      %405 = vmatprep.subr.mxu0 0.0
      %406 = vmatpush1.msra.mxu0 %v202
      %407 = vmatprep.subr.mxu0 0.0
      %408 = vmatpush1.msra.mxu0 %v203
      %409 = vmatprep.subr.mxu0 0.0
      %410 = vmatpush1.msra.mxu0 0.0
      %411 = vmatprep.subr.mxu0 0.0
      %412 = vmatpush1.msra.mxu0 0.0
      %413 = vmatprep.subr.mxu0 0.0
      %414 = vmatpush1.msra.mxu0 0.0
      %415 = vmatprep.subr.mxu0 0.0
      %416 = vmatpush1.msra.mxu0 0.0
      %417 = vmatprep.subr.mxu0 0.0
      %418 = vmatpush1.msra.mxu0 0.0
      %419 = vmatprep.subr.mxu0 0.0
      %420 = vmatpush1.msra.mxu0 0.0
      %421 = vmatprep.subr.mxu0 0.0
      %422 = vmatpush1.msra.mxu0 0.0
      %423 = vmatprep.subr.mxu0 0.0
      %424 = vmatpush1.msra.mxu0 0.0
      %425 = vmatprep.subr.mxu0 0.0
      %426 = vmatpush1.msra.mxu0 0.0
      %427 = vmatprep.subr.mxu0 0.0
      %428 = vmatpush1.msra.mxu0 0.0
      %429 = vmatprep.subr.mxu0 0.0
      %430 = vmatpush1.msra.mxu0 0.0
      %431 = vmatprep.subr.mxu0 0.0
      %432 = vmatpush1.msra.mxu0 0.0
      %433 = vmatprep.subr.mxu0 0.0
      %434 = vmatpush1.msra.mxu0 0.0
      %435 = vmatprep.subr.mxu0 0.0
      %436 = vmatpush1.msra.mxu0 0.0
      %437 = vmatprep.subr.mxu0 0.0
      %438 = vmatpush1.msra.mxu0 0.0
      %439 = vmatprep.subr.mxu0 0.0
      %440 = vmatpush1.msra.mxu0 0.0
      %441 = vmatprep.subr.mxu0 0.0
      %442 = vmatpush1.msra.mxu0 0.0
      %443 = vmatprep.subr.mxu0 0.0
      %444 = vmatpush1.msra.mxu0 0.0
      %445 = vmatprep.subr.mxu0 0.0
      %446 = vmatpush1.msra.mxu0 0.0
      %447 = vmatprep.subr.mxu0 0.0
      %448 = vmatpush1.msra.mxu0 0.0
      %449 = vmatprep.subr.mxu0 0.0
      %450 = vmatpush1.msra.mxu0 0.0
      %451 = vmatprep.subr.mxu0 0.0
      %452 = vmatpush1.msra.mxu0 0.0
      %453 = vmatprep.subr.mxu0 0.0
      %454 = vmatpush1.msra.mxu0 0.0
      %455 = vmatprep.subr.mxu0 0.0
      %456 = vmatpush1.msra.mxu0 0.0
      %457 = vmatprep.mubr.f32.mxu0 0.0
      %458 = vmatmul.mubr.f32.gmra.mrb[0].mxu0 %v391
      %v459 = vpop.f32.mrb[0].mxu0
      %v460 = vadd.f32 0.0, %v459
      %v461 = vpop.f32.mrb[0].mxu0
      %462 = vdwg.mxu0
      %v464 = vsel %vm316, %v174, 0
      %466 = vmatprep.subr.mxu0 0.0
      %467 = vmatpush1.msra.mxu0 %v204
      %468 = vmatprep.subr.mxu0 0.0
      %469 = vmatpush1.msra.mxu0 %v205
      %470 = vmatprep.subr.mxu0 0.0
      %471 = vmatpush1.msra.mxu0 %v206
      %472 = vmatprep.subr.mxu0 0.0
      %473 = vmatpush1.msra.mxu0 %v207
      %474 = vmatprep.subr.mxu0 0.0
      %475 = vmatpush1.msra.mxu0 %v208
      %476 = vmatprep.subr.mxu0 0.0
      %477 = vmatpush1.msra.mxu0 %v209
      %478 = vmatprep.subr.mxu0 0.0
      %479 = vmatpush1.msra.mxu0 %v210
      %480 = vmatprep.subr.mxu0 0.0
      %481 = vmatpush1.msra.mxu0 %v211
      %482 = vmatprep.subr.mxu0 0.0
      %483 = vmatpush1.msra.mxu0 0.0
      %484 = vmatprep.subr.mxu0 0.0
      %485 = vmatpush1.msra.mxu0 0.0
      %486 = vmatprep.subr.mxu0 0.0
      %487 = vmatpush1.msra.mxu0 0.0
      %488 = vmatprep.subr.mxu0 0.0
      %489 = vmatpush1.msra.mxu0 0.0
      %490 = vmatprep.subr.mxu0 0.0
      %491 = vmatpush1.msra.mxu0 0.0
      %492 = vmatprep.subr.mxu0 0.0
      %493 = vmatpush1.msra.mxu0 0.0
      %494 = vmatprep.subr.mxu0 0.0
      %495 = vmatpush1.msra.mxu0 0.0
      %496 = vmatprep.subr.mxu0 0.0
      %497 = vmatpush1.msra.mxu0 0.0
      %498 = vmatprep.subr.mxu0 0.0
      %499 = vmatpush1.msra.mxu0 0.0
      %500 = vmatprep.subr.mxu0 0.0
      %501 = vmatpush1.msra.mxu0 0.0
      %502 = vmatprep.subr.mxu0 0.0
      %503 = vmatpush1.msra.mxu0 0.0
      %504 = vmatprep.subr.mxu0 0.0
      %505 = vmatpush1.msra.mxu0 0.0
      %506 = vmatprep.subr.mxu0 0.0
      %507 = vmatpush1.msra.mxu0 0.0
      %508 = vmatprep.subr.mxu0 0.0
      %509 = vmatpush1.msra.mxu0 0.0
      %510 = vmatprep.subr.mxu0 0.0
      %511 = vmatpush1.msra.mxu0 0.0
      %512 = vmatprep.subr.mxu0 0.0
      %513 = vmatpush1.msra.mxu0 0.0
      %514 = vmatprep.subr.mxu0 0.0
      %515 = vmatpush1.msra.mxu0 0.0
      %516 = vmatprep.subr.mxu0 0.0
      %517 = vmatpush1.msra.mxu0 0.0
      %518 = vmatprep.subr.mxu0 0.0
      %519 = vmatpush1.msra.mxu0 0.0
      %520 = vmatprep.subr.mxu0 0.0
      %521 = vmatpush1.msra.mxu0 0.0
      %522 = vmatprep.subr.mxu0 0.0
      %523 = vmatpush1.msra.mxu0 0.0
      %524 = vmatprep.subr.mxu0 0.0
      %525 = vmatpush1.msra.mxu0 0.0
      %526 = vmatprep.subr.mxu0 0.0
      %527 = vmatpush1.msra.mxu0 0.0
      %528 = vmatprep.subr.mxu0 0.0
      %529 = vmatpush1.msra.mxu0 0.0
      %530 = vmatprep.mubr.f32.mxu0 0.0
      %531 = vmatmul.mubr.f32.gmra.mrb[0].mxu0 %v464
      %v532 = vpop.f32.mrb[0].mxu0
      %v533 = vadd.f32 0.0, %v532
      %v534 = vpop.f32.mrb[0].mxu0
      %535 = vdwg.mxu0
      %v537 = vsel %vm316, %v175, 0
      %539 = vmatprep.subr.mxu0 0.0
      %540 = vmatpush1.msra.mxu0 %v212
      %541 = vmatprep.subr.mxu0 0.0
      %542 = vmatpush1.msra.mxu0 %v213
      %543 = vmatprep.subr.mxu0 0.0
      %544 = vmatpush1.msra.mxu0 %v214
      %545 = vmatprep.subr.mxu0 0.0
      %546 = vmatpush1.msra.mxu0 %v215
      %547 = vmatprep.subr.mxu0 0.0
      %548 = vmatpush1.msra.mxu0 %v216
      %549 = vmatprep.subr.mxu0 0.0
      %550 = vmatpush1.msra.mxu0 %v217
      %551 = vmatprep.subr.mxu0 0.0
      %552 = vmatpush1.msra.mxu0 %v218
      %553 = vmatprep.subr.mxu0 0.0
      %554 = vmatpush1.msra.mxu0 %v219
      %555 = vmatprep.subr.mxu0 0.0
      %556 = vmatpush1.msra.mxu0 0.0
      %557 = vmatprep.subr.mxu0 0.0
      %558 = vmatpush1.msra.mxu0 0.0
      %559 = vmatprep.subr.mxu0 0.0
      %560 = vmatpush1.msra.mxu0 0.0
      %561 = vmatprep.subr.mxu0 0.0
      %562 = vmatpush1.msra.mxu0 0.0
      %563 = vmatprep.subr.mxu0 0.0
      %564 = vmatpush1.msra.mxu0 0.0
      %565 = vmatprep.subr.mxu0 0.0
      %566 = vmatpush1.msra.mxu0 0.0
      %567 = vmatprep.subr.mxu0 0.0
      %568 = vmatpush1.msra.mxu0 0.0
      %569 = vmatprep.subr.mxu0 0.0
      %570 = vmatpush1.msra.mxu0 0.0
      %571 = vmatprep.subr.mxu0 0.0
      %572 = vmatpush1.msra.mxu0 0.0
      %573 = vmatprep.subr.mxu0 0.0
      %574 = vmatpush1.msra.mxu0 0.0
      %575 = vmatprep.subr.mxu0 0.0
      %576 = vmatpush1.msra.mxu0 0.0
      %577 = vmatprep.subr.mxu0 0.0
      %578 = vmatpush1.msra.mxu0 0.0
      %579 = vmatprep.subr.mxu0 0.0
      %580 = vmatpush1.msra.mxu0 0.0
      %581 = vmatprep.subr.mxu0 0.0
      %582 = vmatpush1.msra.mxu0 0.0
      %583 = vmatprep.subr.mxu0 0.0
      %584 = vmatpush1.msra.mxu0 0.0
      %585 = vmatprep.subr.mxu0 0.0
      %586 = vmatpush1.msra.mxu0 0.0
      %587 = vmatprep.subr.mxu0 0.0
      %588 = vmatpush1.msra.mxu0 0.0
      %589 = vmatprep.subr.mxu0 0.0
      %590 = vmatpush1.msra.mxu0 0.0
      %591 = vmatprep.subr.mxu0 0.0
      %592 = vmatpush1.msra.mxu0 0.0
      %593 = vmatprep.subr.mxu0 0.0
      %594 = vmatpush1.msra.mxu0 0.0
      %595 = vmatprep.subr.mxu0 0.0
      %596 = vmatpush1.msra.mxu0 0.0
      %597 = vmatprep.subr.mxu0 0.0
      %598 = vmatpush1.msra.mxu0 0.0
      %599 = vmatprep.subr.mxu0 0.0
      %600 = vmatpush1.msra.mxu0 0.0
      %601 = vmatprep.subr.mxu0 0.0
      %602 = vmatpush1.msra.mxu0 0.0
      %603 = vmatprep.mubr.f32.mxu0 0.0
      %604 = vmatmul.mubr.f32.gmra.mrb[0].mxu0 %v537
      %v605 = vpop.f32.mrb[0].mxu0
      %v606 = vadd.f32 0.0, %v605
      %v607 = vpop.f32.mrb[0].mxu0
      %608 = vdwg.mxu0
      %v610 = vsel %vm316, %v176, 0
      %612 = vmatprep.subr.mxu0 0.0
      %613 = vmatpush1.msra.mxu0 %v220
      %614 = vmatprep.subr.mxu0 0.0
      %615 = vmatpush1.msra.mxu0 %v221
      %616 = vmatprep.subr.mxu0 0.0
      %617 = vmatpush1.msra.mxu0 %v222
      %618 = vmatprep.subr.mxu0 0.0
      %619 = vmatpush1.msra.mxu0 %v223
      %620 = vmatprep.subr.mxu0 0.0
      %621 = vmatpush1.msra.mxu0 %v224
      %622 = vmatprep.subr.mxu0 0.0
      %623 = vmatpush1.msra.mxu0 %v225
      %624 = vmatprep.subr.mxu0 0.0
      %625 = vmatpush1.msra.mxu0 %v226
      %626 = vmatprep.subr.mxu0 0.0
      %627 = vmatpush1.msra.mxu0 %v227
      %628 = vmatprep.subr.mxu0 0.0
      %629 = vmatpush1.msra.mxu0 0.0
      %630 = vmatprep.subr.mxu0 0.0
      %631 = vmatpush1.msra.mxu0 0.0
      %632 = vmatprep.subr.mxu0 0.0
      %633 = vmatpush1.msra.mxu0 0.0
      %634 = vmatprep.subr.mxu0 0.0
      %635 = vmatpush1.msra.mxu0 0.0
      %636 = vmatprep.subr.mxu0 0.0
      %637 = vmatpush1.msra.mxu0 0.0
      %638 = vmatprep.subr.mxu0 0.0
      %639 = vmatpush1.msra.mxu0 0.0
      %640 = vmatprep.subr.mxu0 0.0
      %641 = vmatpush1.msra.mxu0 0.0
      %642 = vmatprep.subr.mxu0 0.0
      %643 = vmatpush1.msra.mxu0 0.0
      %644 = vmatprep.subr.mxu0 0.0
      %645 = vmatpush1.msra.mxu0 0.0
      %646 = vmatprep.subr.mxu0 0.0
      %647 = vmatpush1.msra.mxu0 0.0
      %648 = vmatprep.subr.mxu0 0.0
      %649 = vmatpush1.msra.mxu0 0.0
      %650 = vmatprep.subr.mxu0 0.0
      %651 = vmatpush1.msra.mxu0 0.0
      %652 = vmatprep.subr.mxu0 0.0
      %653 = vmatpush1.msra.mxu0 0.0
      %654 = vmatprep.subr.mxu0 0.0
      %655 = vmatpush1.msra.mxu0 0.0
      %656 = vmatprep.subr.mxu0 0.0
      %657 = vmatpush1.msra.mxu0 0.0
      %658 = vmatprep.subr.mxu0 0.0
      %659 = vmatpush1.msra.mxu0 0.0
      %660 = vmatprep.subr.mxu0 0.0
      %661 = vmatpush1.msra.mxu0 0.0
      %662 = vmatprep.subr.mxu0 0.0
      %663 = vmatpush1.msra.mxu0 0.0
      %664 = vmatprep.subr.mxu0 0.0
      %665 = vmatpush1.msra.mxu0 0.0
      %666 = vmatprep.subr.mxu0 0.0
      %667 = vmatpush1.msra.mxu0 0.0
      %668 = vmatprep.subr.mxu0 0.0
      %669 = vmatpush1.msra.mxu0 0.0
      %670 = vmatprep.subr.mxu0 0.0
      %671 = vmatpush1.msra.mxu0 0.0
      %672 = vmatprep.subr.mxu0 0.0
      %673 = vmatpush1.msra.mxu0 0.0
      %674 = vmatprep.subr.mxu0 0.0
      %675 = vmatpush1.msra.mxu0 0.0
      %676 = vmatprep.mubr.f32.mxu0 0.0
      %677 = vmatmul.mubr.f32.gmra.mrb[0].mxu0 %v610
      %v678 = vpop.f32.mrb[0].mxu0
      %v679 = vadd.f32 0.0, %v678
      %v680 = vpop.f32.mrb[0].mxu0
      %681 = vdwg.mxu0
      %v683 = vsel %vm316, %v177, 0
      %685 = vmatprep.subr.mxu0 0.0
      %686 = vmatpush1.msra.mxu0 %v228
      %687 = vmatprep.subr.mxu0 0.0
      %688 = vmatpush1.msra.mxu0 %v229
      %689 = vmatprep.subr.mxu0 0.0
      %690 = vmatpush1.msra.mxu0 %v230
      %691 = vmatprep.subr.mxu0 0.0
      %692 = vmatpush1.msra.mxu0 %v231
      %693 = vmatprep.subr.mxu0 0.0
      %694 = vmatpush1.msra.mxu0 %v232
      %695 = vmatprep.subr.mxu0 0.0
      %696 = vmatpush1.msra.mxu0 %v233
      %697 = vmatprep.subr.mxu0 0.0
      %698 = vmatpush1.msra.mxu0 %v234
      %699 = vmatprep.subr.mxu0 0.0
      %700 = vmatpush1.msra.mxu0 %v235
      %701 = vmatprep.subr.mxu0 0.0
      %702 = vmatpush1.msra.mxu0 0.0
      %703 = vmatprep.subr.mxu0 0.0
      %704 = vmatpush1.msra.mxu0 0.0
      %705 = vmatprep.subr.mxu0 0.0
      %706 = vmatpush1.msra.mxu0 0.0
      %707 = vmatprep.subr.mxu0 0.0
      %708 = vmatpush1.msra.mxu0 0.0
      %709 = vmatprep.subr.mxu0 0.0
      %710 = vmatpush1.msra.mxu0 0.0
      %711 = vmatprep.subr.mxu0 0.0
      %712 = vmatpush1.msra.mxu0 0.0
      %713 = vmatprep.subr.mxu0 0.0
      %714 = vmatpush1.msra.mxu0 0.0
      %715 = vmatprep.subr.mxu0 0.0
      %716 = vmatpush1.msra.mxu0 0.0
      %717 = vmatprep.subr.mxu0 0.0
      %718 = vmatpush1.msra.mxu0 0.0
      %719 = vmatprep.subr.mxu0 0.0
      %720 = vmatpush1.msra.mxu0 0.0
      %721 = vmatprep.subr.mxu0 0.0
      %722 = vmatpush1.msra.mxu0 0.0
      %723 = vmatprep.subr.mxu0 0.0
      %724 = vmatpush1.msra.mxu0 0.0
      %725 = vmatprep.subr.mxu0 0.0
      %726 = vmatpush1.msra.mxu0 0.0
      %727 = vmatprep.subr.mxu0 0.0
      %728 = vmatpush1.msra.mxu0 0.0
      %729 = vmatprep.subr.mxu0 0.0
      %730 = vmatpush1.msra.mxu0 0.0
      %731 = vmatprep.subr.mxu0 0.0
      %732 = vmatpush1.msra.mxu0 0.0
      %733 = vmatprep.subr.mxu0 0.0
      %734 = vmatpush1.msra.mxu0 0.0
      %735 = vmatprep.subr.mxu0 0.0
      %736 = vmatpush1.msra.mxu0 0.0
      %737 = vmatprep.subr.mxu0 0.0
      %738 = vmatpush1.msra.mxu0 0.0
      %739 = vmatprep.subr.mxu0 0.0
      %740 = vmatpush1.msra.mxu0 0.0
      %741 = vmatprep.subr.mxu0 0.0
      %742 = vmatpush1.msra.mxu0 0.0
      %743 = vmatprep.subr.mxu0 0.0
      %744 = vmatpush1.msra.mxu0 0.0
      %745 = vmatprep.subr.mxu0 0.0
      %746 = vmatpush1.msra.mxu0 0.0
      %747 = vmatprep.subr.mxu0 0.0
      %748 = vmatpush1.msra.mxu0 0.0
      %749 = vmatprep.mubr.f32.mxu0 0.0
      %750 = vmatmul.mubr.f32.gmra.mrb[0].mxu0 %v683
      %v751 = vpop.f32.mrb[0].mxu0
      %v752 = vadd.f32 0.0, %v751
      %v753 = vpop.f32.mrb[0].mxu0
      %754 = vdwg.mxu0
      %v756 = vsel %vm316, %v178, 0
      %758 = vmatprep.subr.mxu0 0.0
      %759 = vmatpush1.msra.mxu0 %v236
      %760 = vmatprep.subr.mxu0 0.0
      %761 = vmatpush1.msra.mxu0 %v237
      %762 = vmatprep.subr.mxu0 0.0
      %763 = vmatpush1.msra.mxu0 %v238
      %764 = vmatprep.subr.mxu0 0.0
      %765 = vmatpush1.msra.mxu0 %v239
      %766 = vmatprep.subr.mxu0 0.0
      %767 = vmatpush1.msra.mxu0 %v240
      %768 = vmatprep.subr.mxu0 0.0
      %769 = vmatpush1.msra.mxu0 %v241
      %770 = vmatprep.subr.mxu0 0.0
      %771 = vmatpush1.msra.mxu0 %v242
      %772 = vmatprep.subr.mxu0 0.0
      %773 = vmatpush1.msra.mxu0 %v243
      %774 = vmatprep.subr.mxu0 0.0
      %775 = vmatpush1.msra.mxu0 0.0
      %776 = vmatprep.subr.mxu0 0.0
      %777 = vmatpush1.msra.mxu0 0.0
      %778 = vmatprep.subr.mxu0 0.0
      %779 = vmatpush1.msra.mxu0 0.0
      %780 = vmatprep.subr.mxu0 0.0
      %781 = vmatpush1.msra.mxu0 0.0
      %782 = vmatprep.subr.mxu0 0.0
      %783 = vmatpush1.msra.mxu0 0.0
      %784 = vmatprep.subr.mxu0 0.0
      %785 = vmatpush1.msra.mxu0 0.0
      %786 = vmatprep.subr.mxu0 0.0
      %787 = vmatpush1.msra.mxu0 0.0
      %788 = vmatprep.subr.mxu0 0.0
      %789 = vmatpush1.msra.mxu0 0.0
      %790 = vmatprep.subr.mxu0 0.0
      %791 = vmatpush1.msra.mxu0 0.0
      %792 = vmatprep.subr.mxu0 0.0
      %793 = vmatpush1.msra.mxu0 0.0
      %794 = vmatprep.subr.mxu0 0.0
      %795 = vmatpush1.msra.mxu0 0.0
      %796 = vmatprep.subr.mxu0 0.0
      %797 = vmatpush1.msra.mxu0 0.0
      %798 = vmatprep.subr.mxu0 0.0
      %799 = vmatpush1.msra.mxu0 0.0
      %800 = vmatprep.subr.mxu0 0.0
      %801 = vmatpush1.msra.mxu0 0.0
      %802 = vmatprep.subr.mxu0 0.0
      %803 = vmatpush1.msra.mxu0 0.0
      %804 = vmatprep.subr.mxu0 0.0
      %805 = vmatpush1.msra.mxu0 0.0
      %806 = vmatprep.subr.mxu0 0.0
      %807 = vmatpush1.msra.mxu0 0.0
      %808 = vmatprep.subr.mxu0 0.0
      %809 = vmatpush1.msra.mxu0 0.0
      %810 = vmatprep.subr.mxu0 0.0
      %811 = vmatpush1.msra.mxu0 0.0
      %812 = vmatprep.subr.mxu0 0.0
      %813 = vmatpush1.msra.mxu0 0.0
      %814 = vmatprep.subr.mxu0 0.0
      %815 = vmatpush1.msra.mxu0 0.0
      %816 = vmatprep.subr.mxu0 0.0
      %817 = vmatpush1.msra.mxu0 0.0
      %818 = vmatprep.subr.mxu0 0.0
      %819 = vmatpush1.msra.mxu0 0.0
      %820 = vmatprep.subr.mxu0 0.0
      %821 = vmatpush1.msra.mxu0 0.0
      %822 = vmatprep.mubr.f32.mxu0 0.0
      %823 = vmatmul.mubr.f32.gmra.mrb[0].mxu0 %v756
      %v824 = vpop.f32.mrb[0].mxu0
      %v825 = vadd.f32 0.0, %v824
      %v826 = vpop.f32.mrb[0].mxu0
      %827 = vdwg.mxu0
      %v829 = vsel %vm316, %v179, 0
      %831 = vmatprep.subr.mxu0 0.0
      %832 = vmatpush1.msra.mxu0 %v244
      %833 = vmatprep.subr.mxu0 0.0
      %834 = vmatpush1.msra.mxu0 %v245
      %835 = vmatprep.subr.mxu0 0.0
      %836 = vmatpush1.msra.mxu0 %v246
      %837 = vmatprep.subr.mxu0 0.0
      %838 = vmatpush1.msra.mxu0 %v247
      %839 = vmatprep.subr.mxu0 0.0
      %840 = vmatpush1.msra.mxu0 %v248
      %841 = vmatprep.subr.mxu0 0.0
      %842 = vmatpush1.msra.mxu0 %v249
      %843 = vmatprep.subr.mxu0 0.0
      %844 = vmatpush1.msra.mxu0 %v250
      %845 = vmatprep.subr.mxu0 0.0
      %846 = vmatpush1.msra.mxu0 %v251
      %847 = vmatprep.subr.mxu0 0.0
      %848 = vmatpush1.msra.mxu0 0.0
      %849 = vmatprep.subr.mxu0 0.0
      %850 = vmatpush1.msra.mxu0 0.0
      %851 = vmatprep.subr.mxu0 0.0
      %852 = vmatpush1.msra.mxu0 0.0
      %853 = vmatprep.subr.mxu0 0.0
      %854 = vmatpush1.msra.mxu0 0.0
      %855 = vmatprep.subr.mxu0 0.0
      %856 = vmatpush1.msra.mxu0 0.0
      %857 = vmatprep.subr.mxu0 0.0
      %858 = vmatpush1.msra.mxu0 0.0
      %859 = vmatprep.subr.mxu0 0.0
      %860 = vmatpush1.msra.mxu0 0.0
      %861 = vmatprep.subr.mxu0 0.0
      %862 = vmatpush1.msra.mxu0 0.0
      %863 = vmatprep.subr.mxu0 0.0
      %864 = vmatpush1.msra.mxu0 0.0
      %865 = vmatprep.subr.mxu0 0.0
      %866 = vmatpush1.msra.mxu0 0.0
      %867 = vmatprep.subr.mxu0 0.0
      %868 = vmatpush1.msra.mxu0 0.0
      %869 = vmatprep.subr.mxu0 0.0
      %870 = vmatpush1.msra.mxu0 0.0
      %871 = vmatprep.subr.mxu0 0.0
      %872 = vmatpush1.msra.mxu0 0.0
      %873 = vmatprep.subr.mxu0 0.0
      %874 = vmatpush1.msra.mxu0 0.0
      %875 = vmatprep.subr.mxu0 0.0
      %876 = vmatpush1.msra.mxu0 0.0
      %877 = vmatprep.subr.mxu0 0.0
      %878 = vmatpush1.msra.mxu0 0.0
      %879 = vmatprep.subr.mxu0 0.0
      %880 = vmatpush1.msra.mxu0 0.0
      %881 = vmatprep.subr.mxu0 0.0
      %882 = vmatpush1.msra.mxu0 0.0
      %883 = vmatprep.subr.mxu0 0.0
      %884 = vmatpush1.msra.mxu0 0.0
      %885 = vmatprep.subr.mxu0 0.0
      %886 = vmatpush1.msra.mxu0 0.0
      %887 = vmatprep.subr.mxu0 0.0
      %888 = vmatpush1.msra.mxu0 0.0
      %889 = vmatprep.subr.mxu0 0.0
      %890 = vmatpush1.msra.mxu0 0.0
      %891 = vmatprep.subr.mxu0 0.0
      %892 = vmatpush1.msra.mxu0 0.0
      %893 = vmatprep.subr.mxu0 0.0
      %894 = vmatpush1.msra.mxu0 0.0
      %895 = vmatprep.mubr.f32.mxu0 0.0
      %896 = vmatmul.mubr.f32.gmra.mrb[0].mxu0 %v829
      %v897 = vpop.f32.mrb[0].mxu0
      %v898 = vadd.f32 0.0, %v897
      %v899 = vpop.f32.mrb[0].mxu0
      %900 = vdwg.mxu0
      %v902 = vsel %vm316, %v180, 0
      %904 = vmatprep.subr.mxu0 0.0
      %905 = vmatpush1.msra.mxu0 %v252
      %906 = vmatprep.subr.mxu0 0.0
      %907 = vmatpush1.msra.mxu0 %v253
      %908 = vmatprep.subr.mxu0 0.0
      %909 = vmatpush1.msra.mxu0 %v254
      %910 = vmatprep.subr.mxu0 0.0
      %911 = vmatpush1.msra.mxu0 %v255
      %912 = vmatprep.subr.mxu0 0.0
      %913 = vmatpush1.msra.mxu0 %v256
      %914 = vmatprep.subr.mxu0 0.0
      %915 = vmatpush1.msra.mxu0 %v257
      %916 = vmatprep.subr.mxu0 0.0
      %917 = vmatpush1.msra.mxu0 %v258
      %918 = vmatprep.subr.mxu0 0.0
      %919 = vmatpush1.msra.mxu0 %v259
      %920 = vmatprep.subr.mxu0 0.0
      %921 = vmatpush1.msra.mxu0 0.0
      %922 = vmatprep.subr.mxu0 0.0
      %923 = vmatpush1.msra.mxu0 0.0
      %924 = vmatprep.subr.mxu0 0.0
      %925 = vmatpush1.msra.mxu0 0.0
      %926 = vmatprep.subr.mxu0 0.0
      %927 = vmatpush1.msra.mxu0 0.0
      %928 = vmatprep.subr.mxu0 0.0
      %929 = vmatpush1.msra.mxu0 0.0
      %930 = vmatprep.subr.mxu0 0.0
      %931 = vmatpush1.msra.mxu0 0.0
      %932 = vmatprep.subr.mxu0 0.0
      %933 = vmatpush1.msra.mxu0 0.0
      %934 = vmatprep.subr.mxu0 0.0
      %935 = vmatpush1.msra.mxu0 0.0
      %936 = vmatprep.subr.mxu0 0.0
      %937 = vmatpush1.msra.mxu0 0.0
      %938 = vmatprep.subr.mxu0 0.0
      %939 = vmatpush1.msra.mxu0 0.0
      %940 = vmatprep.subr.mxu0 0.0
      %941 = vmatpush1.msra.mxu0 0.0
      %942 = vmatprep.subr.mxu0 0.0
      %943 = vmatpush1.msra.mxu0 0.0
      %944 = vmatprep.subr.mxu0 0.0
      %945 = vmatpush1.msra.mxu0 0.0
      %946 = vmatprep.subr.mxu0 0.0
      %947 = vmatpush1.msra.mxu0 0.0
      %948 = vmatprep.subr.mxu0 0.0
      %949 = vmatpush1.msra.mxu0 0.0
      %950 = vmatprep.subr.mxu0 0.0
      %951 = vmatpush1.msra.mxu0 0.0
      %952 = vmatprep.subr.mxu0 0.0
      %953 = vmatpush1.msra.mxu0 0.0
      %954 = vmatprep.subr.mxu0 0.0
      %955 = vmatpush1.msra.mxu0 0.0
      %956 = vmatprep.subr.mxu0 0.0
      %957 = vmatpush1.msra.mxu0 0.0
      %958 = vmatprep.subr.mxu0 0.0
      %959 = vmatpush1.msra.mxu0 0.0
      %960 = vmatprep.subr.mxu0 0.0
      %961 = vmatpush1.msra.mxu0 0.0
      %962 = vmatprep.subr.mxu0 0.0
      %963 = vmatpush1.msra.mxu0 0.0
      %964 = vmatprep.subr.mxu0 0.0
      %965 = vmatpush1.msra.mxu0 0.0
      %966 = vmatprep.subr.mxu0 0.0
      %967 = vmatpush1.msra.mxu0 0.0
      %968 = vmatprep.mubr.f32.mxu0 0.0
      %969 = vmatmul.mubr.f32.gmra.mrb[0].mxu0 %v902
      %v970 = vpop.f32.mrb[0].mxu0
      %v971 = vadd.f32 0.0, %v970
      %v972 = vpop.f32.mrb[0].mxu0
      %973 = vdwg.mxu0
      %v975 = vsel %vm316, %v181, 0
      %977 = vmatprep.subr.mxu0 0.0
      %978 = vmatpush1.msra.mxu0 %v260
      %979 = vmatprep.subr.mxu0 0.0
      %980 = vmatpush1.msra.mxu0 %v261
      %981 = vmatprep.subr.mxu0 0.0
      %982 = vmatpush1.msra.mxu0 %v262
      %983 = vmatprep.subr.mxu0 0.0
      %984 = vmatpush1.msra.mxu0 %v263
      %985 = vmatprep.subr.mxu0 0.0
      %986 = vmatpush1.msra.mxu0 %v264
      %987 = vmatprep.subr.mxu0 0.0
      %988 = vmatpush1.msra.mxu0 %v265
      %989 = vmatprep.subr.mxu0 0.0
      %990 = vmatpush1.msra.mxu0 %v266
      %991 = vmatprep.subr.mxu0 0.0
      %992 = vmatpush1.msra.mxu0 %v267
      %993 = vmatprep.subr.mxu0 0.0
      %994 = vmatpush1.msra.mxu0 0.0
      %995 = vmatprep.subr.mxu0 0.0
      %996 = vmatpush1.msra.mxu0 0.0
      %997 = vmatprep.subr.mxu0 0.0
      %998 = vmatpush1.msra.mxu0 0.0
      %999 = vmatprep.subr.mxu0 0.0
      %1000 = vmatpush1.msra.mxu0 0.0
      %1001 = vmatprep.subr.mxu0 0.0
      %1002 = vmatpush1.msra.mxu0 0.0
      %1003 = vmatprep.subr.mxu0 0.0
      %1004 = vmatpush1.msra.mxu0 0.0
      %1005 = vmatprep.subr.mxu0 0.0
      %1006 = vmatpush1.msra.mxu0 0.0
      %1007 = vmatprep.subr.mxu0 0.0
      %1008 = vmatpush1.msra.mxu0 0.0
      %1009 = vmatprep.subr.mxu0 0.0
      %1010 = vmatpush1.msra.mxu0 0.0
      %1011 = vmatprep.subr.mxu0 0.0
      %1012 = vmatpush1.msra.mxu0 0.0
      %1013 = vmatprep.subr.mxu0 0.0
      %1014 = vmatpush1.msra.mxu0 0.0
      %1015 = vmatprep.subr.mxu0 0.0
      %1016 = vmatpush1.msra.mxu0 0.0
      %1017 = vmatprep.subr.mxu0 0.0
      %1018 = vmatpush1.msra.mxu0 0.0
      %1019 = vmatprep.subr.mxu0 0.0
      %1020 = vmatpush1.msra.mxu0 0.0
      %1021 = vmatprep.subr.mxu0 0.0
      %1022 = vmatpush1.msra.mxu0 0.0
      %1023 = vmatprep.subr.mxu0 0.0
      %1024 = vmatpush1.msra.mxu0 0.0
      %1025 = vmatprep.subr.mxu0 0.0
      %1026 = vmatpush1.msra.mxu0 0.0
      %1027 = vmatprep.subr.mxu0 0.0
      %1028 = vmatpush1.msra.mxu0 0.0
      %1029 = vmatprep.subr.mxu0 0.0
      %1030 = vmatpush1.msra.mxu0 0.0
      %1031 = vmatprep.subr.mxu0 0.0
      %1032 = vmatpush1.msra.mxu0 0.0
      %1033 = vmatprep.subr.mxu0 0.0
      %1034 = vmatpush1.msra.mxu0 0.0
      %1035 = vmatprep.subr.mxu0 0.0
      %1036 = vmatpush1.msra.mxu0 0.0
      %1037 = vmatprep.subr.mxu0 0.0
      %1038 = vmatpush1.msra.mxu0 0.0
      %1039 = vmatprep.subr.mxu0 0.0
      %1040 = vmatpush1.msra.mxu0 0.0
      %1041 = vmatprep.mubr.f32.mxu0 0.0
      %1042 = vmatmul.mubr.f32.gmra.mrb[0].mxu0 %v975
      %v1043 = vpop.f32.mrb[0].mxu0
      %v1044 = vadd.f32 0.0, %v1043
      %v1045 = vpop.f32.mrb[0].mxu0
      %1046 = vdwg.mxu0
      %v1048 = vsel %vm316, %v182, 0
      %1050 = vmatprep.subr.mxu0 0.0
      %1051 = vmatpush1.msra.mxu0 %v268
      %1052 = vmatprep.subr.mxu0 0.0
      %1053 = vmatpush1.msra.mxu0 %v269
      %1054 = vmatprep.subr.mxu0 0.0
      %1055 = vmatpush1.msra.mxu0 %v270
      %1056 = vmatprep.subr.mxu0 0.0
      %1057 = vmatpush1.msra.mxu0 %v271
      %1058 = vmatprep.subr.mxu0 0.0
      %1059 = vmatpush1.msra.mxu0 %v272
      %1060 = vmatprep.subr.mxu0 0.0
      %1061 = vmatpush1.msra.mxu0 %v273
      %1062 = vmatprep.subr.mxu0 0.0
      %1063 = vmatpush1.msra.mxu0 %v274
      %1064 = vmatprep.subr.mxu0 0.0
      %1065 = vmatpush1.msra.mxu0 %v275
      %1066 = vmatprep.subr.mxu0 0.0
      %1067 = vmatpush1.msra.mxu0 0.0
      %1068 = vmatprep.subr.mxu0 0.0
      %1069 = vmatpush1.msra.mxu0 0.0
      %1070 = vmatprep.subr.mxu0 0.0
      %1071 = vmatpush1.msra.mxu0 0.0
      %1072 = vmatprep.subr.mxu0 0.0
      %1073 = vmatpush1.msra.mxu0 0.0
      %1074 = vmatprep.subr.mxu0 0.0
      %1075 = vmatpush1.msra.mxu0 0.0
      %1076 = vmatprep.subr.mxu0 0.0
      %1077 = vmatpush1.msra.mxu0 0.0
      %1078 = vmatprep.subr.mxu0 0.0
      %1079 = vmatpush1.msra.mxu0 0.0
      %1080 = vmatprep.subr.mxu0 0.0
      %1081 = vmatpush1.msra.mxu0 0.0
      %1082 = vmatprep.subr.mxu0 0.0
      %1083 = vmatpush1.msra.mxu0 0.0
      %1084 = vmatprep.subr.mxu0 0.0
      %1085 = vmatpush1.msra.mxu0 0.0
      %1086 = vmatprep.subr.mxu0 0.0
      %1087 = vmatpush1.msra.mxu0 0.0
      %1088 = vmatprep.subr.mxu0 0.0
      %1089 = vmatpush1.msra.mxu0 0.0
      %1090 = vmatprep.subr.mxu0 0.0
      %1091 = vmatpush1.msra.mxu0 0.0
      %1092 = vmatprep.subr.mxu0 0.0
      %1093 = vmatpush1.msra.mxu0 0.0
      %1094 = vmatprep.subr.mxu0 0.0
      %1095 = vmatpush1.msra.mxu0 0.0
      %1096 = vmatprep.subr.mxu0 0.0
      %1097 = vmatpush1.msra.mxu0 0.0
      %1098 = vmatprep.subr.mxu0 0.0
      %1099 = vmatpush1.msra.mxu0 0.0
      %1100 = vmatprep.subr.mxu0 0.0
      %1101 = vmatpush1.msra.mxu0 0.0
      %1102 = vmatprep.subr.mxu0 0.0
      %1103 = vmatpush1.msra.mxu0 0.0
      %1104 = vmatprep.subr.mxu0 0.0
      %1105 = vmatpush1.msra.mxu0 0.0
      %1106 = vmatprep.subr.mxu0 0.0
      %1107 = vmatpush1.msra.mxu0 0.0
      %1108 = vmatprep.subr.mxu0 0.0
      %1109 = vmatpush1.msra.mxu0 0.0
      %1110 = vmatprep.subr.mxu0 0.0
      %1111 = vmatpush1.msra.mxu0 0.0
      %1112 = vmatprep.subr.mxu0 0.0
      %1113 = vmatpush1.msra.mxu0 0.0
      %1114 = vmatprep.mubr.f32.mxu0 0.0
      %1115 = vmatmul.mubr.f32.gmra.mrb[0].mxu0 %v1048
      %v1116 = vpop.f32.mrb[0].mxu0
      %v1117 = vadd.f32 0.0, %v1116
      %v1118 = vpop.f32.mrb[0].mxu0
      %1119 = vdwg.mxu0
      %v1121 = vsel %vm316, %v183, 0
      %1123 = vmatprep.subr.mxu0 0.0
      %1124 = vmatpush1.msra.mxu0 %v276
      %1125 = vmatprep.subr.mxu0 0.0
      %1126 = vmatpush1.msra.mxu0 %v277
      %1127 = vmatprep.subr.mxu0 0.0
      %1128 = vmatpush1.msra.mxu0 %v278
      %1129 = vmatprep.subr.mxu0 0.0
      %1130 = vmatpush1.msra.mxu0 %v279
      %1131 = vmatprep.subr.mxu0 0.0
      %1132 = vmatpush1.msra.mxu0 %v280
      %1133 = vmatprep.subr.mxu0 0.0
      %1134 = vmatpush1.msra.mxu0 %v281
      %1135 = vmatprep.subr.mxu0 0.0
      %1136 = vmatpush1.msra.mxu0 %v282
      %1137 = vmatprep.subr.mxu0 0.0
      %1138 = vmatpush1.msra.mxu0 %v283
      %1139 = vmatprep.subr.mxu0 0.0
      %1140 = vmatpush1.msra.mxu0 0.0
      %1141 = vmatprep.subr.mxu0 0.0
      %1142 = vmatpush1.msra.mxu0 0.0
      %1143 = vmatprep.subr.mxu0 0.0
      %1144 = vmatpush1.msra.mxu0 0.0
      %1145 = vmatprep.subr.mxu0 0.0
      %1146 = vmatpush1.msra.mxu0 0.0
      %1147 = vmatprep.subr.mxu0 0.0
      %1148 = vmatpush1.msra.mxu0 0.0
      %1149 = vmatprep.subr.mxu0 0.0
      %1150 = vmatpush1.msra.mxu0 0.0
      %1151 = vmatprep.subr.mxu0 0.0
      %1152 = vmatpush1.msra.mxu0 0.0
      %1153 = vmatprep.subr.mxu0 0.0
      %1154 = vmatpush1.msra.mxu0 0.0
      %1155 = vmatprep.subr.mxu0 0.0
      %1156 = vmatpush1.msra.mxu0 0.0
      %1157 = vmatprep.subr.mxu0 0.0
      %1158 = vmatpush1.msra.mxu0 0.0
      %1159 = vmatprep.subr.mxu0 0.0
      %1160 = vmatpush1.msra.mxu0 0.0
      %1161 = vmatprep.subr.mxu0 0.0
      %1162 = vmatpush1.msra.mxu0 0.0
      %1163 = vmatprep.subr.mxu0 0.0
      %1164 = vmatpush1.msra.mxu0 0.0
      %1165 = vmatprep.subr.mxu0 0.0
      %1166 = vmatpush1.msra.mxu0 0.0
      %1167 = vmatprep.subr.mxu0 0.0
      %1168 = vmatpush1.msra.mxu0 0.0
      %1169 = vmatprep.subr.mxu0 0.0
      %1170 = vmatpush1.msra.mxu0 0.0
      %1171 = vmatprep.subr.mxu0 0.0
      %1172 = vmatpush1.msra.mxu0 0.0
      %1173 = vmatprep.subr.mxu0 0.0
      %1174 = vmatpush1.msra.mxu0 0.0
      %1175 = vmatprep.subr.mxu0 0.0
      %1176 = vmatpush1.msra.mxu0 0.0
      %1177 = vmatprep.subr.mxu0 0.0
      %1178 = vmatpush1.msra.mxu0 0.0
      %1179 = vmatprep.subr.mxu0 0.0
      %1180 = vmatpush1.msra.mxu0 0.0
      %1181 = vmatprep.subr.mxu0 0.0
      %1182 = vmatpush1.msra.mxu0 0.0
      %1183 = vmatprep.subr.mxu0 0.0
      %1184 = vmatpush1.msra.mxu0 0.0
      %1185 = vmatprep.subr.mxu0 0.0
      %1186 = vmatpush1.msra.mxu0 0.0
      %1187 = vmatprep.mubr.f32.mxu0 0.0
      %1188 = vmatmul.mubr.f32.gmra.mrb[0].mxu0 %v1121
      %v1189 = vpop.f32.mrb[0].mxu0
      %v1190 = vadd.f32 0.0, %v1189
      %v1191 = vpop.f32.mrb[0].mxu0
      %1192 = vdwg.mxu0
      %v1194 = vsel %vm316, %v184, 0
      %1196 = vmatprep.subr.mxu0 0.0
      %1197 = vmatpush1.msra.mxu0 %v284
      %1198 = vmatprep.subr.mxu0 0.0
      %1199 = vmatpush1.msra.mxu0 %v285
      %1200 = vmatprep.subr.mxu0 0.0
      %1201 = vmatpush1.msra.mxu0 %v286
      %1202 = vmatprep.subr.mxu0 0.0
      %1203 = vmatpush1.msra.mxu0 %v287
      %1204 = vmatprep.subr.mxu0 0.0
      %1205 = vmatpush1.msra.mxu0 %v288
      %1206 = vmatprep.subr.mxu0 0.0
      %1207 = vmatpush1.msra.mxu0 %v289
      %1208 = vmatprep.subr.mxu0 0.0
      %1209 = vmatpush1.msra.mxu0 %v290
      %1210 = vmatprep.subr.mxu0 0.0
      %1211 = vmatpush1.msra.mxu0 %v291
      %1212 = vmatprep.subr.mxu0 0.0
      %1213 = vmatpush1.msra.mxu0 0.0
      %1214 = vmatprep.subr.mxu0 0.0
      %1215 = vmatpush1.msra.mxu0 0.0
      %1216 = vmatprep.subr.mxu0 0.0
      %1217 = vmatpush1.msra.mxu0 0.0
      %1218 = vmatprep.subr.mxu0 0.0
      %1219 = vmatpush1.msra.mxu0 0.0
      %1220 = vmatprep.subr.mxu0 0.0
      %1221 = vmatpush1.msra.mxu0 0.0
      %1222 = vmatprep.subr.mxu0 0.0
      %1223 = vmatpush1.msra.mxu0 0.0
      %1224 = vmatprep.subr.mxu0 0.0
      %1225 = vmatpush1.msra.mxu0 0.0
      %1226 = vmatprep.subr.mxu0 0.0
      %1227 = vmatpush1.msra.mxu0 0.0
      %1228 = vmatprep.subr.mxu0 0.0
      %1229 = vmatpush1.msra.mxu0 0.0
      %1230 = vmatprep.subr.mxu0 0.0
      %1231 = vmatpush1.msra.mxu0 0.0
      %1232 = vmatprep.subr.mxu0 0.0
      %1233 = vmatpush1.msra.mxu0 0.0
      %1234 = vmatprep.subr.mxu0 0.0
      %1235 = vmatpush1.msra.mxu0 0.0
      %1236 = vmatprep.subr.mxu0 0.0
      %1237 = vmatpush1.msra.mxu0 0.0
      %1238 = vmatprep.subr.mxu0 0.0
      %1239 = vmatpush1.msra.mxu0 0.0
      %1240 = vmatprep.subr.mxu0 0.0
      %1241 = vmatpush1.msra.mxu0 0.0
      %1242 = vmatprep.subr.mxu0 0.0
      %1243 = vmatpush1.msra.mxu0 0.0
      %1244 = vmatprep.subr.mxu0 0.0
      %1245 = vmatpush1.msra.mxu0 0.0
      %1246 = vmatprep.subr.mxu0 0.0
      %1247 = vmatpush1.msra.mxu0 0.0
      %1248 = vmatprep.subr.mxu0 0.0
      %1249 = vmatpush1.msra.mxu0 0.0
      %1250 = vmatprep.subr.mxu0 0.0
      %1251 = vmatpush1.msra.mxu0 0.0
      %1252 = vmatprep.subr.mxu0 0.0
      %1253 = vmatpush1.msra.mxu0 0.0
      %1254 = vmatprep.subr.mxu0 0.0
      %1255 = vmatpush1.msra.mxu0 0.0
      %1256 = vmatprep.subr.mxu0 0.0
      %1257 = vmatpush1.msra.mxu0 0.0
      %1258 = vmatprep.subr.mxu0 0.0
      %1259 = vmatpush1.msra.mxu0 0.0
      %1260 = vmatprep.mubr.f32.mxu0 0.0
      %1261 = vmatmul.mubr.f32.gmra.mrb[0].mxu0 %v1194
      %v1262 = vpop.f32.mrb[0].mxu0
      %v1263 = vadd.f32 0.0, %v1262
      %v1264 = vpop.f32.mrb[0].mxu0
      %1265 = vdwg.mxu0
      %v1267 = vsel %vm316, %v185, 0
      %1269 = vmatprep.subr.mxu0 0.0
      %1270 = vmatpush1.msra.mxu0 %v292
      %1271 = vmatprep.subr.mxu0 0.0
      %1272 = vmatpush1.msra.mxu0 %v293
      %1273 = vmatprep.subr.mxu0 0.0
      %1274 = vmatpush1.msra.mxu0 %v294
      %1275 = vmatprep.subr.mxu0 0.0
      %1276 = vmatpush1.msra.mxu0 %v295
      %1277 = vmatprep.subr.mxu0 0.0
      %1278 = vmatpush1.msra.mxu0 %v296
      %1279 = vmatprep.subr.mxu0 0.0
      %1280 = vmatpush1.msra.mxu0 %v297
      %1281 = vmatprep.subr.mxu0 0.0
      %1282 = vmatpush1.msra.mxu0 %v298
      %1283 = vmatprep.subr.mxu0 0.0
      %1284 = vmatpush1.msra.mxu0 %v299
      %1285 = vmatprep.subr.mxu0 0.0
      %1286 = vmatpush1.msra.mxu0 0.0
      %1287 = vmatprep.subr.mxu0 0.0
      %1288 = vmatpush1.msra.mxu0 0.0
      %1289 = vmatprep.subr.mxu0 0.0
      %1290 = vmatpush1.msra.mxu0 0.0
      %1291 = vmatprep.subr.mxu0 0.0
      %1292 = vmatpush1.msra.mxu0 0.0
      %1293 = vmatprep.subr.mxu0 0.0
      %1294 = vmatpush1.msra.mxu0 0.0
      %1295 = vmatprep.subr.mxu0 0.0
      %1296 = vmatpush1.msra.mxu0 0.0
      %1297 = vmatprep.subr.mxu0 0.0
      %1298 = vmatpush1.msra.mxu0 0.0
      %1299 = vmatprep.subr.mxu0 0.0
      %1300 = vmatpush1.msra.mxu0 0.0
      %1301 = vmatprep.subr.mxu0 0.0
      %1302 = vmatpush1.msra.mxu0 0.0
      %1303 = vmatprep.subr.mxu0 0.0
      %1304 = vmatpush1.msra.mxu0 0.0
      %1305 = vmatprep.subr.mxu0 0.0
      %1306 = vmatpush1.msra.mxu0 0.0
      %1307 = vmatprep.subr.mxu0 0.0
      %1308 = vmatpush1.msra.mxu0 0.0
      %1309 = vmatprep.subr.mxu0 0.0
      %1310 = vmatpush1.msra.mxu0 0.0
      %1311 = vmatprep.subr.mxu0 0.0
      %1312 = vmatpush1.msra.mxu0 0.0
      %1313 = vmatprep.subr.mxu0 0.0
      %1314 = vmatpush1.msra.mxu0 0.0
      %1315 = vmatprep.subr.mxu0 0.0
      %1316 = vmatpush1.msra.mxu0 0.0
      %1317 = vmatprep.subr.mxu0 0.0
      %1318 = vmatpush1.msra.mxu0 0.0
      %1319 = vmatprep.subr.mxu0 0.0
      %1320 = vmatpush1.msra.mxu0 0.0
      %1321 = vmatprep.subr.mxu0 0.0
      %1322 = vmatpush1.msra.mxu0 0.0
      %1323 = vmatprep.subr.mxu0 0.0
      %1324 = vmatpush1.msra.mxu0 0.0
      %1325 = vmatprep.subr.mxu0 0.0
      %1326 = vmatpush1.msra.mxu0 0.0
      %1327 = vmatprep.subr.mxu0 0.0
      %1328 = vmatpush1.msra.mxu0 0.0
      %1329 = vmatprep.subr.mxu0 0.0
      %1330 = vmatpush1.msra.mxu0 0.0
      %1331 = vmatprep.subr.mxu0 0.0
      %1332 = vmatpush1.msra.mxu0 0.0
      %1333 = vmatprep.mubr.f32.mxu0 0.0
      %1334 = vmatmul.mubr.f32.gmra.mrb[0].mxu0 %v1267
      %v1335 = vpop.f32.mrb[0].mxu0
      %v1336 = vadd.f32 0.0, %v1335
      %v1337 = vpop.f32.mrb[0].mxu0
      %1338 = vdwg.mxu0
      %v1340 = vsel %vm316, %v186, 0
      %1342 = vmatprep.subr.mxu0 0.0
      %1343 = vmatpush1.msra.mxu0 %v300
      %1344 = vmatprep.subr.mxu0 0.0
      %1345 = vmatpush1.msra.mxu0 %v301
      %1346 = vmatprep.subr.mxu0 0.0
      %1347 = vmatpush1.msra.mxu0 %v302
      %1348 = vmatprep.subr.mxu0 0.0
      %1349 = vmatpush1.msra.mxu0 %v303
      %1350 = vmatprep.subr.mxu0 0.0
      %1351 = vmatpush1.msra.mxu0 %v304
      %1352 = vmatprep.subr.mxu0 0.0
      %1353 = vmatpush1.msra.mxu0 %v305
      %1354 = vmatprep.subr.mxu0 0.0
      %1355 = vmatpush1.msra.mxu0 %v306
      %1356 = vmatprep.subr.mxu0 0.0
      %1357 = vmatpush1.msra.mxu0 %v307
      %1358 = vmatprep.subr.mxu0 0.0
      %1359 = vmatpush1.msra.mxu0 0.0
      %1360 = vmatprep.subr.mxu0 0.0
      %1361 = vmatpush1.msra.mxu0 0.0
      %1362 = vmatprep.subr.mxu0 0.0
      %1363 = vmatpush1.msra.mxu0 0.0
      %1364 = vmatprep.subr.mxu0 0.0
      %1365 = vmatpush1.msra.mxu0 0.0
      %1366 = vmatprep.subr.mxu0 0.0
      %1367 = vmatpush1.msra.mxu0 0.0
      %1368 = vmatprep.subr.mxu0 0.0
      %1369 = vmatpush1.msra.mxu0 0.0
      %1370 = vmatprep.subr.mxu0 0.0
      %1371 = vmatpush1.msra.mxu0 0.0
      %1372 = vmatprep.subr.mxu0 0.0
      %1373 = vmatpush1.msra.mxu0 0.0
      %1374 = vmatprep.subr.mxu0 0.0
      %1375 = vmatpush1.msra.mxu0 0.0
      %1376 = vmatprep.subr.mxu0 0.0
      %1377 = vmatpush1.msra.mxu0 0.0
      %1378 = vmatprep.subr.mxu0 0.0
      %1379 = vmatpush1.msra.mxu0 0.0
      %1380 = vmatprep.subr.mxu0 0.0
      %1381 = vmatpush1.msra.mxu0 0.0
      %1382 = vmatprep.subr.mxu0 0.0
      %1383 = vmatpush1.msra.mxu0 0.0
      %1384 = vmatprep.subr.mxu0 0.0
      %1385 = vmatpush1.msra.mxu0 0.0
      %1386 = vmatprep.subr.mxu0 0.0
      %1387 = vmatpush1.msra.mxu0 0.0
      %1388 = vmatprep.subr.mxu0 0.0
      %1389 = vmatpush1.msra.mxu0 0.0
      %1390 = vmatprep.subr.mxu0 0.0
      %1391 = vmatpush1.msra.mxu0 0.0
      %1392 = vmatprep.subr.mxu0 0.0
      %1393 = vmatpush1.msra.mxu0 0.0
      %1394 = vmatprep.subr.mxu0 0.0
      %1395 = vmatpush1.msra.mxu0 0.0
      %1396 = vmatprep.subr.mxu0 0.0
      %1397 = vmatpush1.msra.mxu0 0.0
      %1398 = vmatprep.subr.mxu0 0.0
      %1399 = vmatpush1.msra.mxu0 0.0
      %1400 = vmatprep.subr.mxu0 0.0
      %1401 = vmatpush1.msra.mxu0 0.0
      %1402 = vmatprep.subr.mxu0 0.0
      %1403 = vmatpush1.msra.mxu0 0.0
      %1404 = vmatprep.subr.mxu0 0.0
      %1405 = vmatpush1.msra.mxu0 0.0
      %1406 = vmatprep.mubr.f32.mxu0 0.0
      %1407 = vmatmul.mubr.f32.gmra.mrb[0].mxu0 %v1340
      %v1408 = vpop.f32.mrb[0].mxu0
      %v1409 = vadd.f32 0.0, %v1408
      %v1410 = vpop.f32.mrb[0].mxu0
      %1411 = vdwg.mxu0
      %v1413 = vsel %vm316, %v187, 0
      %1415 = vmatprep.subr.mxu0 0.0
      %1416 = vmatpush1.msra.mxu0 %v308
      %1417 = vmatprep.subr.mxu0 0.0
      %1418 = vmatpush1.msra.mxu0 %v309
      %1419 = vmatprep.subr.mxu0 0.0
      %1420 = vmatpush1.msra.mxu0 %v310
      %1421 = vmatprep.subr.mxu0 0.0
      %1422 = vmatpush1.msra.mxu0 %v311
      %1423 = vmatprep.subr.mxu0 0.0
      %1424 = vmatpush1.msra.mxu0 %v312
      %1425 = vmatprep.subr.mxu0 0.0
      %1426 = vmatpush1.msra.mxu0 %v313
      %1427 = vmatprep.subr.mxu0 0.0
      %1428 = vmatpush1.msra.mxu0 %v314
      %1429 = vmatprep.subr.mxu0 0.0
      %1430 = vmatpush1.msra.mxu0 %v315
      %1431 = vmatprep.subr.mxu0 0.0
      %1432 = vmatpush1.msra.mxu0 0.0
      %1433 = vmatprep.subr.mxu0 0.0
      %1434 = vmatpush1.msra.mxu0 0.0
      %1435 = vmatprep.subr.mxu0 0.0
      %1436 = vmatpush1.msra.mxu0 0.0
      %1437 = vmatprep.subr.mxu0 0.0
      %1438 = vmatpush1.msra.mxu0 0.0
      %1439 = vmatprep.subr.mxu0 0.0
      %1440 = vmatpush1.msra.mxu0 0.0
      %1441 = vmatprep.subr.mxu0 0.0
      %1442 = vmatpush1.msra.mxu0 0.0
      %1443 = vmatprep.subr.mxu0 0.0
      %1444 = vmatpush1.msra.mxu0 0.0
      %1445 = vmatprep.subr.mxu0 0.0
      %1446 = vmatpush1.msra.mxu0 0.0
      %1447 = vmatprep.subr.mxu0 0.0
      %1448 = vmatpush1.msra.mxu0 0.0
      %1449 = vmatprep.subr.mxu0 0.0
      %1450 = vmatpush1.msra.mxu0 0.0
      %1451 = vmatprep.subr.mxu0 0.0
      %1452 = vmatpush1.msra.mxu0 0.0
      %1453 = vmatprep.subr.mxu0 0.0
      %1454 = vmatpush1.msra.mxu0 0.0
      %1455 = vmatprep.subr.mxu0 0.0
      %1456 = vmatpush1.msra.mxu0 0.0
      %1457 = vmatprep.subr.mxu0 0.0
      %1458 = vmatpush1.msra.mxu0 0.0
      %1459 = vmatprep.subr.mxu0 0.0
      %1460 = vmatpush1.msra.mxu0 0.0
      %1461 = vmatprep.subr.mxu0 0.0
      %1462 = vmatpush1.msra.mxu0 0.0
      %1463 = vmatprep.subr.mxu0 0.0
      %1464 = vmatpush1.msra.mxu0 0.0
      %1465 = vmatprep.subr.mxu0 0.0
      %1466 = vmatpush1.msra.mxu0 0.0
      %1467 = vmatprep.subr.mxu0 0.0
      %1468 = vmatpush1.msra.mxu0 0.0
      %1469 = vmatprep.subr.mxu0 0.0
      %1470 = vmatpush1.msra.mxu0 0.0
      %1471 = vmatprep.subr.mxu0 0.0
      %1472 = vmatpush1.msra.mxu0 0.0
      %1473 = vmatprep.subr.mxu0 0.0
      %1474 = vmatpush1.msra.mxu0 0.0
      %1475 = vmatprep.subr.mxu0 0.0
      %1476 = vmatpush1.msra.mxu0 0.0
      %1477 = vmatprep.subr.mxu0 0.0
      %1478 = vmatpush1.msra.mxu0 0.0
      %1479 = vmatprep.mubr.f32.mxu0 0.0
      %1480 = vmatmul.mubr.f32.gmra.mrb[0].mxu0 %v1413
      %v1481 = vpop.f32.mrb[0].mxu0
      %v1482 = vadd.f32 0.0, %v1481
      %v1483 = vpop.f32.mrb[0].mxu0
      %1484 = vdwg.mxu0
      %vm1485 = vcmask 517120
      %1486 = vst.msk [vmem:[%s170] sm:$0x3] %vm1485, %v387
      %1487 = vst.msk [vmem:[%s170 + $0x2] sm:$0x3] %vm1485, %v460
      %1488 = vst.msk [vmem:[%s170 + $0x4] sm:$0x3] %vm1485, %v533
      %1489 = vst.msk [vmem:[%s170 + $0x6] sm:$0x3] %vm1485, %v606
      %1490 = vst.msk [vmem:[%s170 + $0x8] sm:$0x3] %vm1485, %v679
      %1491 = vst.msk [vmem:[%s170 + $0xa] sm:$0x3] %vm1485, %v752
      %1492 = vst.msk [vmem:[%s170 + $0xc] sm:$0x3] %vm1485, %v825
      %1493 = vst.msk [vmem:[%s170 + $0xe] sm:$0x3] %vm1485, %v898
      %1494 = vst.msk [vmem:[%s170 + $0x10] sm:$0x3] %vm1485, %v971
      %1495 = vst.msk [vmem:[%s170 + $0x12] sm:$0x3] %vm1485, %v1044
      %1496 = vst.msk [vmem:[%s170 + $0x14] sm:$0x3] %vm1485, %v1117
      %1497 = vst.msk [vmem:[%s170 + $0x16] sm:$0x3] %vm1485, %v1190
      %1498 = vst.msk [vmem:[%s170 + $0x18] sm:$0x3] %vm1485, %v1263
      %1499 = vst.msk [vmem:[%s170 + $0x1a] sm:$0x3] %vm1485, %v1336
      %1500 = vst.msk [vmem:[%s170 + $0x1c] sm:$0x3] %vm1485, %v1409
      %1501 = vst.msk [vmem:[%s170 + $0x1e] sm:$0x3] %vm1485, %v1482
      %s1502 = smul.u32 16, %s13
      %p1503 = scmp.lt.s32.totalorder %s1502, 31
      %s1504 = scalar_select %p1503, %s1502, 31
      %s1505 = smul.addr %s1504, 2
      %s1506 = scalar_lea.vmem %s2, %s1505
      // Predicated region
      $region29: #{fno2d_forward.9} parent=27 // pred_check
        %p1507 = pneg %p83
      $region30: #{fno2d_forward.9} parent=27 // pred_check_branch
        %1509 = sbr.rel (%p1507) target = $region32
      $region31: #{fno2d_forward.9} parent=27 // pred_region
        %s1510 = smul.u32 16, %s13
      $region32: #{fno2d_forward.9} parent=27 // pred_fallthru
        _
    $region28: #{fno2d_forward.9} parent=5 // pred_fallthru
      _
    %p1511 = scmp.le.s32.totalorder 2, %s8
    // Predicated region
    $region33: #{fno2d_forward.9} parent=5 // pred_check
      %p1512 = pneg %p1511
    $region34: #{fno2d_forward.9} parent=5 // pred_check_branch
      %1514 = sbr.rel (%p1512) target = $region36
    $region35: #{fno2d_forward.9} parent=5 // pred_region
      %s1515 = ssub.s32 %s8, 2
      // Predicated region
      $region37: #{fno2d_forward.9} parent=35 // pred_check
        %p1516 = pneg %p89
      $region38: #{fno2d_forward.9} parent=35 // pred_check_branch
        %1518 = sbr.rel (%p1516) target = $region40
      $region39: #{fno2d_forward.9} parent=35 // pred_region
        %s1519 = smul.u32 16, %s14
        %p1520 = scmp.lt.s32.totalorder %s1519, 31
        %s1521 = scalar_select %p1520, %s1519, 31
        %s1522 = smul.addr %s1521, 2
        %s1523 = scalar_lea.vmem %s2, %s1522
      $region40: #{fno2d_forward.9} parent=35 // pred_fallthru
        _
    $region36: #{fno2d_forward.9} parent=5 // pred_fallthru
      _
  $region6: #{fno2d_forward.9} parent=0 // loop_footer
    %s12 = sadd.s32 1, %s8
  $region7: #{fno2d_forward.9} parent=0 // loop_footer_branch
    %7 = sbr.rel target = $region3
  $region8: #{fno2d_forward.9} parent=0 // loop_exit
    _

// kernel: reverse.6
$region0: #{reverse.6}
  #allocation0 [shape = 's32[1]{0}', space=sflag, size = 0x4, scoped, tag = 'scoped memory for reverse.6']
  %s0 = inlined_call_operand.vmem [shape: f32[32,2,16,7], index: 0, kind: input, shape index: {}]
  %s1 = inlined_call_operand.vmem [shape: f32[32,2,16,7], index: 1, kind: output, shape index: {}]
  %s2 = scalar_lea.vmem %s0, 96
  %v3 = vld [vmem:[%s2] sm:$0xff]
  %4 = vst [vmem:[%s1] sm:$0xff] %v3
  %s5 = scalar_lea.vmem %s0, 208
  %v6 = vld [vmem:[%s5] sm:$0xff]
  %s7 = scalar_lea.vmem %s1, 112
  %8 = vst [vmem:[%s7] sm:$0xff] %v6
  %s9 = scalar_lea.vmem %s0, 80
  %v10 = vld [vmem:[%s9] sm:$0xff]
  %s11 = scalar_lea.vmem %s1, 16
  %12 = vst [vmem:[%s11] sm:$0xff] %v10
  %s13 = scalar_lea.vmem %s0, 192
  %v14 = vld [vmem:[%s13] sm:$0xff]
  %s15 = scalar_lea.vmem %s1, 128
  %16 = vst [vmem:[%s15] sm:$0xff] %v14
  %s17 = scalar_lea.vmem %s0, 64
  %v18 = vld [vmem:[%s17] sm:$0xff]
  %s19 = scalar_lea.vmem %s1, 32
  %20 = vst [vmem:[%s19] sm:$0xff] %v18
  %s21 = scalar_lea.vmem %s0, 176
  %v22 = vld [vmem:[%s21] sm:$0xff]
  %s23 = scalar_lea.vmem %s1, 144
  %24 = vst [vmem:[%s23] sm:$0xff] %v22
  %s25 = scalar_lea.vmem %s0, 48
  %v26 = vld [vmem:[%s25] sm:$0xff]
  %s27 = scalar_lea.vmem %s1, 48
  %28 = vst [vmem:[%s27] sm:$0xff] %v26
  %s29 = scalar_lea.vmem %s0, 160
  %v30 = vld [vmem:[%s29] sm:$0xff]
  %s31 = scalar_lea.vmem %s1, 160
  %32 = vst [vmem:[%s31] sm:$0xff] %v30
  %s33 = scalar_lea.vmem %s0, 32
  %v34 = vld [vmem:[%s33] sm:$0xff]
  %s35 = scalar_lea.vmem %s1, 64
  %36 = vst [vmem:[%s35] sm:$0xff] %v34
  %s37 = scalar_lea.vmem %s0, 144
  %v38 = vld [vmem:[%s37] sm:$0xff]
  %s39 = scalar_lea.vmem %s1, 176
  %40 = vst [vmem:[%s39] sm:$0xff] %v38
  %s41 = scalar_lea.vmem %s0, 16
  %v42 = vld [vmem:[%s41] sm:$0xff]
  %s43 = scalar_lea.vmem %s1, 80
  %44 = vst [vmem:[%s43] sm:$0xff] %v42
  %s45 = scalar_lea.vmem %s0, 128
  %v46 = vld [vmem:[%s45] sm:$0xff]
  %s47 = scalar_lea.vmem %s1, 192
  %48 = vst [vmem:[%s47] sm:$0xff] %v46
  %v49 = vld [vmem:[%s0] sm:$0xff]
  %s50 = scalar_lea.vmem %s1, 96
  %51 = vst [vmem:[%s50] sm:$0xff] %v49
  %s52 = scalar_lea.vmem %s0, 112
  %v53 = vld [vmem:[%s52] sm:$0xff]
  %s54 = scalar_lea.vmem %s1, 208
  %55 = vst [vmem:[%s54] sm:$0xff] %v53
  %s56 = scalar_lea.vmem %s0, 104
  %v57 = vld [vmem:[%s56] sm:$0xff]
  %s58 = scalar_lea.vmem %s1, 8
  %59 = vst [vmem:[%s58] sm:$0xff] %v57
  %s60 = scalar_lea.vmem %s0, 216
  %v61 = vld [vmem:[%s60] sm:$0xff]
  %s62 = scalar_lea.vmem %s1, 120
  %63 = vst [vmem:[%s62] sm:$0xff] %v61
  %s64 = scalar_lea.vmem %s0, 88
  %v65 = vld [vmem:[%s64] sm:$0xff]
  %s66 = scalar_lea.vmem %s1, 24
  %67 = vst [vmem:[%s66] sm:$0xff] %v65
  %s68 = scalar_lea.vmem %s0, 200
  %v69 = vld [vmem:[%s68] sm:$0xff]
  %s70 = scalar_lea.vmem %s1, 136
  %71 = vst [vmem:[%s70] sm:$0xff] %v69
  %s72 = scalar_lea.vmem %s0, 72
  %v73 = vld [vmem:[%s72] sm:$0xff]
  %s74 = scalar_lea.vmem %s1, 40
  %75 = vst [vmem:[%s74] sm:$0xff] %v73
  %s76 = scalar_lea.vmem %s0, 184
  %v77 = vld [vmem:[%s76] sm:$0xff]
  %s78 = scalar_lea.vmem %s1, 152
  %79 = vst [vmem:[%s78] sm:$0xff] %v77
  %s80 = scalar_lea.vmem %s0, 56
  %v81 = vld [vmem:[%s80] sm:$0xff]
  %s82 = scalar_lea.vmem %s1, 56
  %83 = vst [vmem:[%s82] sm:$0xff] %v81
  %s84 = scalar_lea.vmem %s0, 168
  %v85 = vld [vmem:[%s84] sm:$0xff]
  %s86 = scalar_lea.vmem %s1, 168
  %87 = vst [vmem:[%s86] sm:$0xff] %v85
  %s88 = scalar_lea.vmem %s0, 40
  %v89 = vld [vmem:[%s88] sm:$0xff]
  %s90 = scalar_lea.vmem %s1, 72
  %91 = vst [vmem:[%s90] sm:$0xff] %v89
  %s92 = scalar_lea.vmem %s0, 152
  %v93 = vld [vmem:[%s92] sm:$0xff]
  %s94 = scalar_lea.vmem %s1, 184
  %95 = vst [vmem:[%s94] sm:$0xff] %v93
  %s96 = scalar_lea.vmem %s0, 24
  %v97 = vld [vmem:[%s96] sm:$0xff]
  %s98 = scalar_lea.vmem %s1, 88
  %99 = vst [vmem:[%s98] sm:$0xff] %v97
  %s100 = scalar_lea.vmem %s0, 136
  %v101 = vld [vmem:[%s100] sm:$0xff]
  %s102 = scalar_lea.vmem %s1, 200
  %103 = vst [vmem:[%s102] sm:$0xff] %v101
  %s104 = scalar_lea.vmem %s0, 8
  %v105 = vld [vmem:[%s104] sm:$0xff]
  %s106 = scalar_lea.vmem %s1, 104
  %107 = vst [vmem:[%s106] sm:$0xff] %v105
  %s108 = scalar_lea.vmem %s0, 120
  %v109 = vld [vmem:[%s108] sm:$0xff]
  %s110 = scalar_lea.vmem %s1, 216
  %111 = vst [vmem:[%s110] sm:$0xff] %v109

// kernel: fno2d_forward.10
$region0: #{fno2d_forward.10}
  #allocation0 [shape = 'u32[]', space=smem, size = 0x4, offset = 0x4, fixed_abs, tag = 'smem constant byte address 0x4 - core index']
  #allocation1 [shape = 'u32[144,128]{1,0:T(1,128)}', space=vmem, size = 0x12000, scoped, tag = 'internal scratch']
  %s0 = inlined_call_operand.vmem [shape: f32[32,512], index: 0, kind: input, shape index: {}]
  %s1 = inlined_call_operand.vmem [shape: f32[32,32], index: 1, kind: input, shape index: {}]
  %s2 = inlined_call_operand.vmem [shape: f32[32,1], index: 2, kind: input, shape index: {}]
  %s3 = inlined_call_operand.vmem [shape: f32[32,512], index: 3, kind: input, shape index: {}]
  %s4 = inlined_call_operand.vmem [shape: f32[32,512], index: 4, kind: output, shape index: {}]
  %s5 = sld [smem:[#allocation0]]
  $region114: #{fno2d_forward.10} parent=0
    _
  %s7 = ssub.s32 1, %s5
  %s8 = scalar_select 0, %s7, %s5
  $region1: #{fno2d_forward.10} parent=0
    #allocation2 [shape = 'u8[65536]{0}', space=vmem, size = 0x10000, scoped, tag = 'input window, operand 0']
    #allocation3 [shape = 'u8[65536]{0}', space=vmem, size = 0x10000, scoped, tag = 'input window, operand 3']
    #allocation4 [shape = 'u8[65536]{0}', space=vmem, size = 0x10000, scoped, tag = 'output window, operand 0']
    loop: start=0, step=1, limit=4
    $region2: #{fno2d_forward.10} parent=1 // loop_pre_header
      _
    $region3: #{fno2d_forward.10} parent=1 // loop_header
      %s10 = sphi 0, %s14
      %p11 = scmp.ge.s32.totalorder %s10, 4
      %s20 = sphi 0, %s22
      %s23 = sphi 0, %s20
      %s24 = sphi 0, %s23
      %s40 = sphi 0, %s24
      %s44 = sphi 0, %s44
      %s46 = sphi 0, %s44
      %s47 = sphi 0, %s46
      %s61 = sphi 0, %s47
      %s65 = sphi 0, %s65
      %s67 = sphi 0, %s65
      %s68 = sphi 0, %s67
      %s82 = sphi 0, %s68
      %s88 = sphi 0, %s90
      %s91 = sphi 0, %s88
      %s92 = sphi 0, %s91
      %s108 = sphi 0, %s92
      %s114 = sphi 0, %s116
      %s117 = sphi 0, %s114
      %s118 = sphi 0, %s117
      %s134 = sphi 0, %s118
    $region4: #{fno2d_forward.10} parent=1 // loop_header_branch
      %13 = sbr.rel (%p11) target = $region8
    $region5: #{fno2d_forward.10} parent=1 // loop_body
      %s15 = ssub.s32 %s10, 1
      %s16 = ssub.s32 %s10, 2
      %s17 = sadd.s32 %s10, 1
      %s18 = ssub.s32 %s10, %s17
      %p19 = scmp.eq.s32.totalorder %s18, 0
      %s21 = sadd.s32 %s20, 1
      %s22 = scalar_select %p19, %s20, %s21
      %p25 = pneg %p19
      %p26 = scmp.eq.s32.totalorder %s10, 1
      %p27 = por %p25, %p26
      %p28 = scmp.ne.s32.totalorder %s20, %s23
      %p29 = scmp.eq.s32.totalorder %s10, 0
      %p30 = por %p28, %p29
      %p31 = scmp.ne.s32.totalorder %s20, %s23
      %p32 = scmp.eq.s32.totalorder %s15, 1
      %p33 = por %p31, %p32
      %p34 = scmp.ne.s32.totalorder %s23, %s24
      %p35 = scmp.eq.s32.totalorder %s15, 0
      %p36 = por %p34, %p35
      %p37 = scmp.ne.s32.totalorder %s23, %s24
      %p38 = scmp.eq.s32.totalorder %s16, 1
      %p39 = por %p37, %p38
      %p41 = scmp.ne.s32.totalorder %s24, %s40
      %p42 = scmp.eq.s32.totalorder %s16, 0
      %p43 = por %p41, %p42
      %s45 = sadd.s32 %s44, 1
      %p48 = scmp.eq.s32.totalorder %s10, 1
      %p49 = scmp.ne.s32.totalorder %s44, %s46
      %p50 = scmp.eq.s32.totalorder %s10, 0
      %p51 = por %p49, %p50
      %p52 = scmp.ne.s32.totalorder %s44, %s46
      %p53 = scmp.eq.s32.totalorder %s15, 1
      %p54 = por %p52, %p53
      %p55 = scmp.ne.s32.totalorder %s46, %s47
      %p56 = scmp.eq.s32.totalorder %s15, 0
      %p57 = por %p55, %p56
      %p58 = scmp.ne.s32.totalorder %s46, %s47
      %p59 = scmp.eq.s32.totalorder %s16, 1
      %p60 = por %p58, %p59
      %p62 = scmp.ne.s32.totalorder %s47, %s61
      %p63 = scmp.eq.s32.totalorder %s16, 0
      %p64 = por %p62, %p63
      %s66 = sadd.s32 %s65, 1
      %p69 = scmp.eq.s32.totalorder %s10, 1
      %p70 = scmp.ne.s32.totalorder %s65, %s67
      %p71 = scmp.eq.s32.totalorder %s10, 0
      %p72 = por %p70, %p71
      %p73 = scmp.ne.s32.totalorder %s65, %s67
      %p74 = scmp.eq.s32.totalorder %s15, 1
      %p75 = por %p73, %p74
      %p76 = scmp.ne.s32.totalorder %s67, %s68
      %p77 = scmp.eq.s32.totalorder %s15, 0
      %p78 = por %p76, %p77
      %p79 = scmp.ne.s32.totalorder %s67, %s68
      %p80 = scmp.eq.s32.totalorder %s16, 1
      %p81 = por %p79, %p80
      %p83 = scmp.ne.s32.totalorder %s68, %s82
      %p84 = scmp.eq.s32.totalorder %s16, 0
      %p85 = por %p83, %p84
      %s86 = ssub.s32 %s10, %s17
      %p87 = scmp.eq.s32.totalorder %s86, 0
      %s89 = sadd.s32 %s88, 1
      %s90 = scalar_select %p87, %s88, %s89
      %p93 = pneg %p87
      %p94 = scmp.eq.s32.totalorder %s10, 1
      %p95 = por %p93, %p94
      %p96 = scmp.ne.s32.totalorder %s88, %s91
      %p97 = scmp.eq.s32.totalorder %s10, 0
      %p98 = por %p96, %p97
      %p99 = scmp.ne.s32.totalorder %s88, %s91
      %p100 = scmp.eq.s32.totalorder %s15, 1
      %p101 = por %p99, %p100
      %p102 = scmp.ne.s32.totalorder %s91, %s92
      %p103 = scmp.eq.s32.totalorder %s15, 0
      %p104 = por %p102, %p103
      %p105 = scmp.ne.s32.totalorder %s91, %s92
      %p106 = scmp.eq.s32.totalorder %s16, 1
      %p107 = por %p105, %p106
      %p109 = scmp.ne.s32.totalorder %s92, %s108
      %p110 = scmp.eq.s32.totalorder %s16, 0
      %p111 = por %p109, %p110
      %s112 = ssub.s32 %s10, %s17
      %p113 = scmp.eq.s32.totalorder %s112, 0
      %s115 = sadd.s32 %s114, 1
      %s116 = scalar_select %p113, %s114, %s115
      %p119 = pneg %p113
      %p120 = scmp.eq.s32.totalorder %s10, 1
      %p121 = por %p119, %p120
      %p122 = scmp.ne.s32.totalorder %s114, %s117
      %p123 = scmp.eq.s32.totalorder %s10, 0
      %p124 = por %p122, %p123
      %p125 = scmp.ne.s32.totalorder %s114, %s117
      %p126 = scmp.eq.s32.totalorder %s15, 1
      %p127 = por %p125, %p126
      %p128 = scmp.ne.s32.totalorder %s117, %s118
      %p129 = scmp.eq.s32.totalorder %s15, 0
      %p130 = por %p128, %p129
      %p131 = scmp.ne.s32.totalorder %s117, %s118
      %p132 = scmp.eq.s32.totalorder %s16, 1
      %p133 = por %p131, %p132
      %p135 = scmp.ne.s32.totalorder %s118, %s134
      %p136 = scmp.eq.s32.totalorder %s16, 0
      %p137 = por %p135, %p136
      %p138 = scmp.le.s32.totalorder 1, %s10
      %p139 = scmp.lt.s32.totalorder %s10, 3
      %p140 = pnand %p138, %p139
      %p141 = pneg %p140
      // Predicated region
      $region9: #{fno2d_forward.10} parent=5 // pred_check
        _
      $region10: #{fno2d_forward.10} parent=5 // pred_check_branch
        %143 = sbr.rel (%p140) target = $region12
      $region11: #{fno2d_forward.10} parent=5 // pred_region
        %s144 = ssub.s32 %s10, 1
        // Predicated region
        $region13: #{fno2d_forward.10} parent=11 // pred_check
          %p145 = pneg %p57
        $region14: #{fno2d_forward.10} parent=11 // pred_check_branch
          %147 = sbr.rel (%p145) target = $region16
        $region15: #{fno2d_forward.10} parent=11 // pred_region
          _
        $region16: #{fno2d_forward.10} parent=11 // pred_fallthru
          _
        // Predicated region
        $region17: #{fno2d_forward.10} parent=11 // pred_check
          %p148 = pneg %p78
        $region18: #{fno2d_forward.10} parent=11 // pred_check_branch
          %150 = sbr.rel (%p148) target = $region20
        $region19: #{fno2d_forward.10} parent=11 // pred_region
          _
        $region20: #{fno2d_forward.10} parent=11 // pred_fallthru
          _
      $region12: #{fno2d_forward.10} parent=5 // pred_fallthru
        _
      %p151 = scmp.lt.s32.totalorder %s10, 2
      // Predicated region
      $region21: #{fno2d_forward.10} parent=5 // pred_check
        %p152 = pneg %p151
      $region22: #{fno2d_forward.10} parent=5 // pred_check_branch
        %154 = sbr.rel (%p152) target = $region24
      $region23: #{fno2d_forward.10} parent=5 // pred_region
        // Predicated region
        $region25: #{fno2d_forward.10} parent=23 // pred_check
          %p155 = pneg %p30
        $region26: #{fno2d_forward.10} parent=23 // pred_check_branch
          %157 = sbr.rel (%p155) target = $region28
        $region27: #{fno2d_forward.10} parent=23 // pred_region
          %s158 = sand.u32 %s20, 1
          %s159 = sand.u32 %s20, 1
          %s160 = smul.addr %s159, 64
          %s161 = scalar_lea.vmem [#allocation2], %s160
          %s162 = smul.u32 2, %s10
          %s163 = smul.addr %s162, 8
          %s164 = scalar_lea.vmem %s0, %s163
          // Predicated region
          $region29: #{fno2d_forward.10} parent=27 // pred_check
            _
          $region30: #{fno2d_forward.10} parent=27 // pred_check_branch
            %166 = sbr.rel (0) target = $region32
          $region31: #{fno2d_forward.10} parent=27 // pred_region
            // Predicated region
            $region33: #{fno2d_forward.10} parent=31 // pred_check
              _
            $region34: #{fno2d_forward.10} parent=31 // pred_check_branch
              %168 = sbr.rel (0) target = $region36
            $region35: #{fno2d_forward.10} parent=31 // pred_region
              loop: start=0, step=1, limit=1
              $region37: #{fno2d_forward.10} parent=35 // loop_pre_header
                _
              $region38: #{fno2d_forward.10} parent=35 // loop_header
                %s170 = sphi 0, %s174
                %p171 = scmp.ge.s32.totalorder %s170, 1
                %s175 = sphi %s164, %s164
                %s176 = sphi %s161, %s161
              $region39: #{fno2d_forward.10} parent=35 // loop_header_branch
                %173 = sbr.rel (%p171) target = $region43
              $region40: #{fno2d_forward.10} parent=35 // loop_body
                %v177 = vld [vmem:[%s175] sm:$0xff]
                %178 = vst [vmem:[%s176] sm:$0xff] %v177
                %v179 = vld [vmem:[%s175 + $0x8] sm:$0xff]
                %180 = vst [vmem:[%s176 + $0x8] sm:$0xff] %v179
                %v181 = vld [vmem:[%s175 + $0x20] sm:$0xff]
                %182 = vst [vmem:[%s176 + $0x10] sm:$0xff] %v181
                %v183 = vld [vmem:[%s175 + $0x28] sm:$0xff]
                %184 = vst [vmem:[%s176 + $0x18] sm:$0xff] %v183
                %v185 = vld [vmem:[%s175 + $0x40] sm:$0xff]
                %186 = vst [vmem:[%s176 + $0x20] sm:$0xff] %v185
                %v187 = vld [vmem:[%s175 + $0x48] sm:$0xff]
                %188 = vst [vmem:[%s176 + $0x28] sm:$0xff] %v187
                %v189 = vld [vmem:[%s175 + $0x60] sm:$0xff]
                %190 = vst [vmem:[%s176 + $0x30] sm:$0xff] %v189
                %v191 = vld [vmem:[%s175 + $0x68] sm:$0xff]
                %192 = vst [vmem:[%s176 + $0x38] sm:$0xff] %v191
              $region41: #{fno2d_forward.10} parent=35 // loop_footer
                %s174 = sadd.s32 1, %s170
              $region42: #{fno2d_forward.10} parent=35 // loop_footer_branch
                %169 = sbr.rel target = $region38
              $region43: #{fno2d_forward.10} parent=35 // loop_exit
                _
            $region36: #{fno2d_forward.10} parent=31 // pred_fallthru
              _
            // Predicated region
            $region44: #{fno2d_forward.10} parent=31 // pred_check
              _
            $region45: #{fno2d_forward.10} parent=31 // pred_check_branch
              %194 = sbr.rel target = $region47
            $region46: #{fno2d_forward.10} parent=31 // pred_region
              _
            $region47: #{fno2d_forward.10} parent=31 // pred_fallthru
              _
          $region32: #{fno2d_forward.10} parent=27 // pred_fallthru
            _
          %195 = vnop
        $region28: #{fno2d_forward.10} parent=23 // pred_fallthru
          _
        // Predicated region
        $region48: #{fno2d_forward.10} parent=23 // pred_check
          %p196 = pneg %p98
        $region49: #{fno2d_forward.10} parent=23 // pred_check_branch
          %198 = sbr.rel (%p196) target = $region51
        $region50: #{fno2d_forward.10} parent=23 // pred_region
          %s199 = sand.u32 %s88, 1
          %s200 = sand.u32 %s88, 1
          %s201 = smul.addr %s200, 64
          %s202 = scalar_lea.vmem [#allocation3], %s201
          %s203 = smul.u32 2, %s10
          %s204 = smul.addr %s203, 8
          %s205 = scalar_lea.vmem %s3, %s204
          // Predicated region
          $region52: #{fno2d_forward.10} parent=50 // pred_check
            _
          $region53: #{fno2d_forward.10} parent=50 // pred_check_branch
            %207 = sbr.rel (0) target = $region55
          $region54: #{fno2d_forward.10} parent=50 // pred_region
            // Predicated region
            $region56: #{fno2d_forward.10} parent=54 // pred_check
              _
            $region57: #{fno2d_forward.10} parent=54 // pred_check_branch
              %209 = sbr.rel (0) target = $region59
            $region58: #{fno2d_forward.10} parent=54 // pred_region
              loop: start=0, step=1, limit=1
              $region60: #{fno2d_forward.10} parent=58 // loop_pre_header
                _
              $region61: #{fno2d_forward.10} parent=58 // loop_header
                %s211 = sphi 0, %s215
                %p212 = scmp.ge.s32.totalorder %s211, 1
                %s216 = sphi %s205, %s205
                %s217 = sphi %s202, %s202
              $region62: #{fno2d_forward.10} parent=58 // loop_header_branch
                %214 = sbr.rel (%p212) target = $region66
              $region63: #{fno2d_forward.10} parent=58 // loop_body
                %v218 = vld [vmem:[%s216] sm:$0xff]
                %219 = vst [vmem:[%s217] sm:$0xff] %v218
                %v220 = vld [vmem:[%s216 + $0x8] sm:$0xff]
                %221 = vst [vmem:[%s217 + $0x8] sm:$0xff] %v220
                %v222 = vld [vmem:[%s216 + $0x20] sm:$0xff]
                %223 = vst [vmem:[%s217 + $0x10] sm:$0xff] %v222
                %v224 = vld [vmem:[%s216 + $0x28] sm:$0xff]
                %225 = vst [vmem:[%s217 + $0x18] sm:$0xff] %v224
                %v226 = vld [vmem:[%s216 + $0x40] sm:$0xff]
                %227 = vst [vmem:[%s217 + $0x20] sm:$0xff] %v226
                %v228 = vld [vmem:[%s216 + $0x48] sm:$0xff]
                %229 = vst [vmem:[%s217 + $0x28] sm:$0xff] %v228
                %v230 = vld [vmem:[%s216 + $0x60] sm:$0xff]
                %231 = vst [vmem:[%s217 + $0x30] sm:$0xff] %v230
                %v232 = vld [vmem:[%s216 + $0x68] sm:$0xff]
                %233 = vst [vmem:[%s217 + $0x38] sm:$0xff] %v232
              $region64: #{fno2d_forward.10} parent=58 // loop_footer
                %s215 = sadd.s32 1, %s211
              $region65: #{fno2d_forward.10} parent=58 // loop_footer_branch
                %210 = sbr.rel target = $region61
              $region66: #{fno2d_forward.10} parent=58 // loop_exit
                _
            $region59: #{fno2d_forward.10} parent=54 // pred_fallthru
              _
            // Predicated region
            $region67: #{fno2d_forward.10} parent=54 // pred_check
              _
            $region68: #{fno2d_forward.10} parent=54 // pred_check_branch
              %235 = sbr.rel target = $region70
            $region69: #{fno2d_forward.10} parent=54 // pred_region
              _
            $region70: #{fno2d_forward.10} parent=54 // pred_fallthru
              _
          $region55: #{fno2d_forward.10} parent=50 // pred_fallthru
            _
          %236 = vnop
        $region51: #{fno2d_forward.10} parent=23 // pred_fallthru
          _
      $region24: #{fno2d_forward.10} parent=5 // pred_fallthru
        _
      %p237 = scmp.le.s32.totalorder 1, %s10
      %p238 = scmp.lt.s32.totalorder %s10, 3
      %p239 = pnand %p237, %p238
      %p240 = pneg %p239
      // Predicated region
      $region71: #{fno2d_forward.10} parent=5 // pred_check
        _
      $region72: #{fno2d_forward.10} parent=5 // pred_check_branch
        %242 = sbr.rel (%p239) target = $region74
      $region73: #{fno2d_forward.10} parent=5 // pred_region
        %s243 = ssub.s32 %s10, 1
        %s244 = sand.u32 %s23, 1
        %s245 = sand.u32 %s23, 1
        %s246 = smul.addr %s245, 64
        %s247 = scalar_lea.vmem [#allocation2], %s246
        // Predicated region
        $region75: #{fno2d_forward.10} parent=73 // pred_check
          %p248 = pneg %p36
        $region76: #{fno2d_forward.10} parent=73 // pred_check_branch
          %250 = sbr.rel (%p248) target = $region78
        $region77: #{fno2d_forward.10} parent=73 // pred_region
          _
        $region78: #{fno2d_forward.10} parent=73 // pred_fallthru
          _
        %s251 = sand.u32 %s91, 1
        %s252 = sand.u32 %s91, 1
        %s253 = smul.addr %s252, 64
        %s254 = scalar_lea.vmem [#allocation3], %s253
        // Predicated region
        $region79: #{fno2d_forward.10} parent=73 // pred_check
          %p255 = pneg %p104
        $region80: #{fno2d_forward.10} parent=73 // pred_check_branch
          %257 = sbr.rel (%p255) target = $region82
        $region81: #{fno2d_forward.10} parent=73 // pred_region
          _
        $region82: #{fno2d_forward.10} parent=73 // pred_fallthru
          _
        %s258 = sand.u32 %s23, 1
        %s259 = sand.u32 %s23, 1
        %s260 = smul.addr %s259, 64
        %s261 = scalar_lea.vmem [#allocation2], %s260
        %p262 = pneg %p36
        %p263 = pneg %p33
        %p264 = pneg %p57
        %p265 = pneg %p54
        %p266 = pneg %p78
        %p267 = pneg %p75
        %s268 = sand.u32 %s91, 1
        %s269 = sand.u32 %s91, 1
        %s270 = smul.addr %s269, 64
        %s271 = scalar_lea.vmem [#allocation3], %s270
        %p272 = pneg %p104
        %p273 = pneg %p101
        %p274 = pneg %p130
        %p275 = pneg %p127
        %s276 = sand.u32 %s117, 1
        %s277 = sand.u32 %s117, 1
        %s278 = smul.addr %s277, 64
        %s279 = scalar_lea.vmem [#allocation4], %s278
        %s280 = smul.u32 2, %s15
        %s281 = smul.u32 2, %s15
        %s282 = smul.u32 2, %s15
        %v283 = vld [vmem:[%s1] sm:$0xff]
        %v284 = vld [vmem:[%s1 + $0x8] sm:$0xff]
        %v285 = vld [vmem:[%s1 + $0x10] sm:$0xff]
        %v286 = vld [vmem:[%s1 + $0x18] sm:$0xff]
        %v287 = vld [vmem:[%s247] sm:$0xff]
        %v288 = vld [vmem:[%s247 + $0x8] sm:$0xff]
        %v289 = vld [vmem:[%s247 + $0x10] sm:$0xff]
        %v290 = vld [vmem:[%s247 + $0x18] sm:$0xff]
        %v291 = vld [vmem:[%s247 + $0x20] sm:$0xff]
        %v292 = vld [vmem:[%s247 + $0x28] sm:$0xff]
        %v293 = vld [vmem:[%s247 + $0x30] sm:$0xff]
        %v294 = vld [vmem:[%s247 + $0x38] sm:$0xff]
        %v295 = vld [vmem:[%s2] sm:$0xff]
        %v296 = vld [vmem:[%s2 + $0x8] sm:$0xff]
        %v297 = vld [vmem:[%s2 + $0x10] sm:$0xff]
        %v298 = vld [vmem:[%s2 + $0x18] sm:$0xff]
        %300 = vset.pattern.permute.xlu0 0
        %301 = vperm.xlu0 %300, %v295
        %v302 = vpop.permute.xlu0 %301
        %305 = vset.pattern.permute.xlu0 0
        %306 = vperm.xlu0 %305, %v296
        %v307 = vpop.permute.xlu0 %306
        %310 = vset.pattern.permute.xlu0 0
        %311 = vperm.xlu0 %310, %v297
        %v312 = vpop.permute.xlu0 %311
        %315 = vset.pattern.permute.xlu0 0
        %316 = vperm.xlu0 %315, %v298
        %v317 = vpop.permute.xlu0 %316
        %vm319 = vcmask 261120
        %v321 = vsel %vm319, %v283, 0
        %v324 = vsel %vm319, %v284, 0
        %v327 = vsel %vm319, %v285, 0
        %v330 = vsel %vm319, %v286, 0
        %332 = vmatprep.subr.mxu0 %v288
        %333 = vmatpush1.msra.mxu0 %v287
        %334 = vmatprep.subr.mxu0 %v290
        %335 = vmatpush1.msra.mxu0 %v289
        %336 = vmatprep.subr.mxu0 %v292
        %337 = vmatpush1.msra.mxu0 %v291
        %338 = vmatprep.subr.mxu0 %v294
        %339 = vmatpush1.msra.mxu0 %v293
        %340 = vmatprep.subr.mxu0 0.0
        %341 = vmatpush1.msra.mxu0 0.0
        %342 = vmatprep.subr.mxu0 0.0
        %343 = vmatpush1.msra.mxu0 0.0
        %344 = vmatprep.subr.mxu0 0.0
        %345 = vmatpush1.msra.mxu0 0.0
        %346 = vmatprep.subr.mxu0 0.0
        %347 = vmatpush1.msra.mxu0 0.0
        %348 = vmatprep.subr.mxu0 0.0
        %349 = vmatpush1.msra.mxu0 0.0
        %350 = vmatprep.subr.mxu0 0.0
        %351 = vmatpush1.msra.mxu0 0.0
        %352 = vmatprep.subr.mxu0 0.0
        %353 = vmatpush1.msra.mxu0 0.0
        %354 = vmatprep.subr.mxu0 0.0
        %355 = vmatpush1.msra.mxu0 0.0
        %356 = vmatprep.subr.mxu0 0.0
        %357 = vmatpush1.msra.mxu0 0.0
        %358 = vmatprep.subr.mxu0 0.0
        %359 = vmatpush1.msra.mxu0 0.0
        %360 = vmatprep.subr.mxu0 0.0
        %361 = vmatpush1.msra.mxu0 0.0
        %362 = vmatprep.subr.mxu0 0.0
        %363 = vmatpush1.msra.mxu0 0.0
        %364 = vmatprep.subr.mxu0 0.0
        %365 = vmatpush1.msra.mxu0 0.0
        %366 = vmatprep.subr.mxu0 0.0
        %367 = vmatpush1.msra.mxu0 0.0
        %368 = vmatprep.subr.mxu0 0.0
        %369 = vmatpush1.msra.mxu0 0.0
        %370 = vmatprep.subr.mxu0 0.0
        %371 = vmatpush1.msra.mxu0 0.0
        %372 = vmatprep.subr.mxu0 0.0
        %373 = vmatpush1.msra.mxu0 0.0
        %374 = vmatprep.subr.mxu0 0.0
        %375 = vmatpush1.msra.mxu0 0.0
        %376 = vmatprep.subr.mxu0 0.0
        %377 = vmatpush1.msra.mxu0 0.0
        %378 = vmatprep.subr.mxu0 0.0
        %379 = vmatpush1.msra.mxu0 0.0
        %380 = vmatprep.subr.mxu0 0.0
        %381 = vmatpush1.msra.mxu0 0.0
        %382 = vmatprep.subr.mxu0 0.0
        %383 = vmatpush1.msra.mxu0 0.0
        %384 = vmatprep.subr.mxu0 0.0
        %385 = vmatpush1.msra.mxu0 0.0
        %386 = vmatprep.subr.mxu0 0.0
        %387 = vmatpush1.msra.mxu0 0.0
        %388 = vmatprep.subr.mxu0 0.0
        %389 = vmatpush1.msra.mxu0 0.0
        %390 = vmatprep.subr.mxu0 0.0
        %391 = vmatpush1.msra.mxu0 0.0
        %392 = vmatprep.subr.mxu0 0.0
        %393 = vmatpush1.msra.mxu0 0.0
        %394 = vmatprep.subr.mxu0 0.0
        %395 = vmatpush1.msra.mxu0 0.0
        %396 = vmatprep.mubr.f32.mxu0 0.0
        %397 = vmatmul.mubr.f32.gmra.mrb[0].mxu0 %v321
        %v398 = vpop.f32.mrb[0].mxu0
        %v399 = vadd.f32 %v302, %v398
        %v400 = vpop.f32.mrb[0].mxu0
        %v401 = vadd.f32 %v302, %v400
        %402 = vmatprep.mubr.f32.mxu0 0.0
        %403 = vmatmul.mubr.f32.gmra.mrb[0].mxu0 %v324
        %v404 = vpop.f32.mrb[0].mxu0
        %v405 = vadd.f32 %v307, %v404
        %v406 = vpop.f32.mrb[0].mxu0
        %v407 = vadd.f32 %v307, %v406
        %408 = vmatprep.mubr.f32.mxu0 0.0
        %409 = vmatmul.mubr.f32.gmra.mrb[0].mxu0 %v327
        %v410 = vpop.f32.mrb[0].mxu0
        %v411 = vadd.f32 %v312, %v410
        %v412 = vpop.f32.mrb[0].mxu0
        %v413 = vadd.f32 %v312, %v412
        %414 = vmatprep.mubr.f32.mxu0 0.0
        %415 = vmatmul.mubr.f32.gmra.mrb[0].mxu0 %v330
        %v416 = vpop.f32.mrb[0].mxu0
        %v417 = vadd.f32 %v317, %v416
        %v418 = vpop.f32.mrb[0].mxu0
        %v419 = vadd.f32 %v317, %v418
        %420 = vdwg.mxu0
        %v421 = vld [vmem:[%s254] sm:$0xff]
        %v422 = vld [vmem:[%s254 + $0x8] sm:$0xff]
        %v423 = vld [vmem:[%s254 + $0x10] sm:$0xff]
        %v424 = vld [vmem:[%s254 + $0x18] sm:$0xff]
        %v425 = vld [vmem:[%s254 + $0x20] sm:$0xff]
        %v426 = vld [vmem:[%s254 + $0x28] sm:$0xff]
        %v427 = vld [vmem:[%s254 + $0x30] sm:$0xff]
        %v428 = vld [vmem:[%s254 + $0x38] sm:$0xff]
        %v429 = vadd.f32 %v399, %v421
        %v430 = vadd.f32 %v401, %v422
        %v431 = vadd.f32 %v405, %v423
        %v432 = vadd.f32 %v407, %v424
        %v433 = vadd.f32 %v411, %v425
        %v434 = vadd.f32 %v413, %v426
        %v435 = vadd.f32 %v417, %v427
        %v436 = vadd.f32 %v419, %v428
        %v437 = vmul.f32 %v429, 0.5
        %v438 = vmul.f32 %v430, 0.5
        %v439 = vmul.f32 %v431, 0.5
        %v440 = vmul.f32 %v432, 0.5
        %v441 = vmul.f32 %v433, 0.5
        %v442 = vmul.f32 %v434, 0.5
        %v443 = vmul.f32 %v435, 0.5
        %v444 = vmul.f32 %v436, 0.5
        %v445 = vmul.f32 %v429, 0.70710677
        %v446 = vmul.f32 %v430, 0.70710677
        %v447 = vmul.f32 %v431, 0.70710677
        %v448 = vmul.f32 %v432, 0.70710677
        %v449 = vmul.f32 %v433, 0.70710677
        %v450 = vmul.f32 %v434, 0.70710677
        %v451 = vmul.f32 %v435, 0.70710677
        %v452 = vmul.f32 %v436, 0.70710677
        %v453 = verf.f32.pop %v445
        %v454 = verf.f32.pop %v446
        %v455 = verf.f32.pop %v447
        %v456 = verf.f32.pop %v448
        %v457 = verf.f32.pop %v449
        %v458 = verf.f32.pop %v450
        %v459 = verf.f32.pop %v451
        %v460 = verf.f32.pop %v452
        %v461 = vadd.f32 %v453, 1.0
        %v462 = vadd.f32 %v454, 1.0
        %v463 = vadd.f32 %v455, 1.0
        %v464 = vadd.f32 %v456, 1.0
        %v465 = vadd.f32 %v457, 1.0
        %v466 = vadd.f32 %v458, 1.0
        %v467 = vadd.f32 %v459, 1.0
        %v468 = vadd.f32 %v460, 1.0
        %v469 = vmul.f32 %v437, %v461
        %v470 = vmul.f32 %v438, %v462
        %v471 = vmul.f32 %v439, %v463
        %v472 = vmul.f32 %v440, %v464
        %v473 = vmul.f32 %v441, %v465
        %v474 = vmul.f32 %v442, %v466
        %v475 = vmul.f32 %v443, %v467
        %v476 = vmul.f32 %v444, %v468
        %477 = vst [vmem:[%s279] sm:$0xff] %v469
        %478 = vst [vmem:[%s279 + $0x8] sm:$0xff] %v470
        %479 = vst [vmem:[%s279 + $0x10] sm:$0xff] %v471
        %480 = vst [vmem:[%s279 + $0x18] sm:$0xff] %v472
        %481 = vst [vmem:[%s279 + $0x20] sm:$0xff] %v473
        %482 = vst [vmem:[%s279 + $0x28] sm:$0xff] %v474
        %483 = vst [vmem:[%s279 + $0x30] sm:$0xff] %v475
        %484 = vst [vmem:[%s279 + $0x38] sm:$0xff] %v476
        %s485 = sand.u32 %s117, 1
        %s486 = sand.u32 %s117, 1
        %s487 = smul.addr %s486, 64
        %s488 = scalar_lea.vmem [#allocation4], %s487
        // Predicated region
        $region83: #{fno2d_forward.10} parent=73 // pred_check
          %p489 = pneg %p127
        $region84: #{fno2d_forward.10} parent=73 // pred_check_branch
          %491 = sbr.rel (%p489) target = $region86
        $region85: #{fno2d_forward.10} parent=73 // pred_region
          %s492 = smul.u32 2, %s15
          %s493 = smul.addr %s492, 8
          %s494 = scalar_lea.vmem %s4, %s493
          // Predicated region
          $region87: #{fno2d_forward.10} parent=85 // pred_check
            _
          $region88: #{fno2d_forward.10} parent=85 // pred_check_branch
            %496 = sbr.rel (0) target = $region90
          $region89: #{fno2d_forward.10} parent=85 // pred_region
            // Predicated region
            $region91: #{fno2d_forward.10} parent=89 // pred_check
              _
            $region92: #{fno2d_forward.10} parent=89 // pred_check_branch
              %498 = sbr.rel (0) target = $region94
            $region93: #{fno2d_forward.10} parent=89 // pred_region
              loop: start=0, step=1, limit=1
              $region95: #{fno2d_forward.10} parent=93 // loop_pre_header
                _
              $region96: #{fno2d_forward.10} parent=93 // loop_header
                %s500 = sphi 0, %s504
                %p501 = scmp.ge.s32.totalorder %s500, 1
                %s505 = sphi %s488, %s488
                %s506 = sphi %s494, %s494
              $region97: #{fno2d_forward.10} parent=93 // loop_header_branch
                %503 = sbr.rel (%p501) target = $region101
              $region98: #{fno2d_forward.10} parent=93 // loop_body
                %v507 = vld [vmem:[%s505] sm:$0xff]
                %508 = vst [vmem:[%s506] sm:$0xff] %v507
                %v509 = vld [vmem:[%s505 + $0x8] sm:$0xff]
                %510 = vst [vmem:[%s506 + $0x8] sm:$0xff] %v509
                %v511 = vld [vmem:[%s505 + $0x10] sm:$0xff]
                %512 = vst [vmem:[%s506 + $0x20] sm:$0xff] %v511
                %v513 = vld [vmem:[%s505 + $0x18] sm:$0xff]
                %514 = vst [vmem:[%s506 + $0x28] sm:$0xff] %v513
                %v515 = vld [vmem:[%s505 + $0x20] sm:$0xff]
                %516 = vst [vmem:[%s506 + $0x40] sm:$0xff] %v515
                %v517 = vld [vmem:[%s505 + $0x28] sm:$0xff]
                %518 = vst [vmem:[%s506 + $0x48] sm:$0xff] %v517
                %v519 = vld [vmem:[%s505 + $0x30] sm:$0xff]
                %520 = vst [vmem:[%s506 + $0x60] sm:$0xff] %v519
                %v521 = vld [vmem:[%s505 + $0x38] sm:$0xff]
                %522 = vst [vmem:[%s506 + $0x68] sm:$0xff] %v521
              $region99: #{fno2d_forward.10} parent=93 // loop_footer
                %s504 = sadd.s32 1, %s500
              $region100: #{fno2d_forward.10} parent=93 // loop_footer_branch
                %499 = sbr.rel target = $region96
              $region101: #{fno2d_forward.10} parent=93 // loop_exit
                _
            $region94: #{fno2d_forward.10} parent=89 // pred_fallthru
              _
            // Predicated region
            $region102: #{fno2d_forward.10} parent=89 // pred_check
              _
            $region103: #{fno2d_forward.10} parent=89 // pred_check_branch
              %524 = sbr.rel target = $region105
            $region104: #{fno2d_forward.10} parent=89 // pred_region
              _
            $region105: #{fno2d_forward.10} parent=89 // pred_fallthru
              _
          $region90: #{fno2d_forward.10} parent=85 // pred_fallthru
            _
          %525 = vnop
        $region86: #{fno2d_forward.10} parent=73 // pred_fallthru
          _
      $region74: #{fno2d_forward.10} parent=5 // pred_fallthru
        _
      %p526 = scmp.le.s32.totalorder 2, %s10
      // Predicated region
      $region106: #{fno2d_forward.10} parent=5 // pred_check
        %p527 = pneg %p526
      $region107: #{fno2d_forward.10} parent=5 // pred_check_branch
        %529 = sbr.rel (%p527) target = $region109
      $region108: #{fno2d_forward.10} parent=5 // pred_region
        %s530 = ssub.s32 %s10, 2
        // Predicated region
        $region110: #{fno2d_forward.10} parent=108 // pred_check
          %p531 = pneg %p133
        $region111: #{fno2d_forward.10} parent=108 // pred_check_branch
          %533 = sbr.rel (%p531) target = $region113
        $region112: #{fno2d_forward.10} parent=108 // pred_region
          %s534 = sand.u32 %s118, 1
          %s535 = sand.u32 %s118, 1
          %s536 = smul.addr %s535, 64
          %s537 = scalar_lea.vmem [#allocation4], %s536
        $region113: #{fno2d_forward.10} parent=108 // pred_fallthru
          _
      $region109: #{fno2d_forward.10} parent=5 // pred_fallthru
        _
    $region6: #{fno2d_forward.10} parent=1 // loop_footer
      %s14 = sadd.s32 1, %s10
    $region7: #{fno2d_forward.10} parent=1 // loop_footer_branch
      %9 = sbr.rel target = $region3
    $region8: #{fno2d_forward.10} parent=1 // loop_exit
      _

// kernel: fno2d_forward.14
$region0: #{fno2d_forward.14}
  #allocation0 [shape = 'u32[]', space=smem, size = 0x4, offset = 0x4, fixed_abs, tag = 'smem constant byte address 0x4 - core index']
  #allocation1 [shape = 'u32[144,128]{1,0:T(1,128)}', space=vmem, size = 0x12000, scoped, tag = 'internal scratch']
  %s0 = inlined_call_operand.vmem [shape: f32[32,512], index: 0, kind: input, shape index: {}]
  %s1 = inlined_call_operand.vmem [shape: f32[32,32], index: 1, kind: input, shape index: {}]
  %s2 = inlined_call_operand.vmem [shape: f32[32,1], index: 2, kind: input, shape index: {}]
  %s3 = inlined_call_operand.vmem [shape: f32[32,512], index: 3, kind: input, shape index: {}]
  %s4 = inlined_call_operand.vmem [shape: f32[32,512], index: 4, kind: output, shape index: {}]
  %s5 = sld [smem:[#allocation0]]
  $region114: #{fno2d_forward.14} parent=0
    _
  %s7 = ssub.s32 1, %s5
  %s8 = scalar_select 0, %s7, %s5
  $region1: #{fno2d_forward.14} parent=0
    #allocation2 [shape = 'u8[65536]{0}', space=vmem, size = 0x10000, scoped, tag = 'input window, operand 0']
    #allocation3 [shape = 'u8[65536]{0}', space=vmem, size = 0x10000, scoped, tag = 'input window, operand 3']
    #allocation4 [shape = 'u8[65536]{0}', space=vmem, size = 0x10000, scoped, tag = 'output window, operand 0']
    loop: start=0, step=1, limit=4
    $region2: #{fno2d_forward.14} parent=1 // loop_pre_header
      _
    $region3: #{fno2d_forward.14} parent=1 // loop_header
      %s10 = sphi 0, %s14
      %p11 = scmp.ge.s32.totalorder %s10, 4
      %s20 = sphi 0, %s22
      %s23 = sphi 0, %s20
      %s24 = sphi 0, %s23
      %s40 = sphi 0, %s24
      %s44 = sphi 0, %s44
      %s46 = sphi 0, %s44
      %s47 = sphi 0, %s46
      %s61 = sphi 0, %s47
      %s65 = sphi 0, %s65
      %s67 = sphi 0, %s65
      %s68 = sphi 0, %s67
      %s82 = sphi 0, %s68
      %s88 = sphi 0, %s90
      %s91 = sphi 0, %s88
      %s92 = sphi 0, %s91
      %s108 = sphi 0, %s92
      %s114 = sphi 0, %s116
      %s117 = sphi 0, %s114
      %s118 = sphi 0, %s117
      %s134 = sphi 0, %s118
    $region4: #{fno2d_forward.14} parent=1 // loop_header_branch
      %13 = sbr.rel (%p11) target = $region8
    $region5: #{fno2d_forward.14} parent=1 // loop_body
      %s15 = ssub.s32 %s10, 1
      %s16 = ssub.s32 %s10, 2
      %s17 = sadd.s32 %s10, 1
      %s18 = ssub.s32 %s10, %s17
      %p19 = scmp.eq.s32.totalorder %s18, 0
      %s21 = sadd.s32 %s20, 1
      %s22 = scalar_select %p19, %s20, %s21
      %p25 = pneg %p19
      %p26 = scmp.eq.s32.totalorder %s10, 1
      %p27 = por %p25, %p26
      %p28 = scmp.ne.s32.totalorder %s20, %s23
      %p29 = scmp.eq.s32.totalorder %s10, 0
      %p30 = por %p28, %p29
      %p31 = scmp.ne.s32.totalorder %s20, %s23
      %p32 = scmp.eq.s32.totalorder %s15, 1
      %p33 = por %p31, %p32
      %p34 = scmp.ne.s32.totalorder %s23, %s24
      %p35 = scmp.eq.s32.totalorder %s15, 0
      %p36 = por %p34, %p35
      %p37 = scmp.ne.s32.totalorder %s23, %s24
      %p38 = scmp.eq.s32.totalorder %s16, 1
      %p39 = por %p37, %p38
      %p41 = scmp.ne.s32.totalorder %s24, %s40
      %p42 = scmp.eq.s32.totalorder %s16, 0
      %p43 = por %p41, %p42
      %s45 = sadd.s32 %s44, 1
      %p48 = scmp.eq.s32.totalorder %s10, 1
      %p49 = scmp.ne.s32.totalorder %s44, %s46
      %p50 = scmp.eq.s32.totalorder %s10, 0
      %p51 = por %p49, %p50
      %p52 = scmp.ne.s32.totalorder %s44, %s46
      %p53 = scmp.eq.s32.totalorder %s15, 1
      %p54 = por %p52, %p53
      %p55 = scmp.ne.s32.totalorder %s46, %s47
      %p56 = scmp.eq.s32.totalorder %s15, 0
      %p57 = por %p55, %p56
      %p58 = scmp.ne.s32.totalorder %s46, %s47
      %p59 = scmp.eq.s32.totalorder %s16, 1
      %p60 = por %p58, %p59
      %p62 = scmp.ne.s32.totalorder %s47, %s61
      %p63 = scmp.eq.s32.totalorder %s16, 0
      %p64 = por %p62, %p63
      %s66 = sadd.s32 %s65, 1
      %p69 = scmp.eq.s32.totalorder %s10, 1
      %p70 = scmp.ne.s32.totalorder %s65, %s67
      %p71 = scmp.eq.s32.totalorder %s10, 0
      %p72 = por %p70, %p71
      %p73 = scmp.ne.s32.totalorder %s65, %s67
      %p74 = scmp.eq.s32.totalorder %s15, 1
      %p75 = por %p73, %p74
      %p76 = scmp.ne.s32.totalorder %s67, %s68
      %p77 = scmp.eq.s32.totalorder %s15, 0
      %p78 = por %p76, %p77
      %p79 = scmp.ne.s32.totalorder %s67, %s68
      %p80 = scmp.eq.s32.totalorder %s16, 1
      %p81 = por %p79, %p80
      %p83 = scmp.ne.s32.totalorder %s68, %s82
      %p84 = scmp.eq.s32.totalorder %s16, 0
      %p85 = por %p83, %p84
      %s86 = ssub.s32 %s10, %s17
      %p87 = scmp.eq.s32.totalorder %s86, 0
      %s89 = sadd.s32 %s88, 1
      %s90 = scalar_select %p87, %s88, %s89
      %p93 = pneg %p87
      %p94 = scmp.eq.s32.totalorder %s10, 1
      %p95 = por %p93, %p94
      %p96 = scmp.ne.s32.totalorder %s88, %s91
      %p97 = scmp.eq.s32.totalorder %s10, 0
      %p98 = por %p96, %p97
      %p99 = scmp.ne.s32.totalorder %s88, %s91
      %p100 = scmp.eq.s32.totalorder %s15, 1
      %p101 = por %p99, %p100
      %p102 = scmp.ne.s32.totalorder %s91, %s92
      %p103 = scmp.eq.s32.totalorder %s15, 0
      %p104 = por %p102, %p103
      %p105 = scmp.ne.s32.totalorder %s91, %s92
      %p106 = scmp.eq.s32.totalorder %s16, 1
      %p107 = por %p105, %p106
      %p109 = scmp.ne.s32.totalorder %s92, %s108
      %p110 = scmp.eq.s32.totalorder %s16, 0
      %p111 = por %p109, %p110
      %s112 = ssub.s32 %s10, %s17
      %p113 = scmp.eq.s32.totalorder %s112, 0
      %s115 = sadd.s32 %s114, 1
      %s116 = scalar_select %p113, %s114, %s115
      %p119 = pneg %p113
      %p120 = scmp.eq.s32.totalorder %s10, 1
      %p121 = por %p119, %p120
      %p122 = scmp.ne.s32.totalorder %s114, %s117
      %p123 = scmp.eq.s32.totalorder %s10, 0
      %p124 = por %p122, %p123
      %p125 = scmp.ne.s32.totalorder %s114, %s117
      %p126 = scmp.eq.s32.totalorder %s15, 1
      %p127 = por %p125, %p126
      %p128 = scmp.ne.s32.totalorder %s117, %s118
      %p129 = scmp.eq.s32.totalorder %s15, 0
      %p130 = por %p128, %p129
      %p131 = scmp.ne.s32.totalorder %s117, %s118
      %p132 = scmp.eq.s32.totalorder %s16, 1
      %p133 = por %p131, %p132
      %p135 = scmp.ne.s32.totalorder %s118, %s134
      %p136 = scmp.eq.s32.totalorder %s16, 0
      %p137 = por %p135, %p136
      %p138 = scmp.le.s32.totalorder 1, %s10
      %p139 = scmp.lt.s32.totalorder %s10, 3
      %p140 = pnand %p138, %p139
      %p141 = pneg %p140
      // Predicated region
      $region9: #{fno2d_forward.14} parent=5 // pred_check
        _
      $region10: #{fno2d_forward.14} parent=5 // pred_check_branch
        %143 = sbr.rel (%p140) target = $region12
      $region11: #{fno2d_forward.14} parent=5 // pred_region
        %s144 = ssub.s32 %s10, 1
        // Predicated region
        $region13: #{fno2d_forward.14} parent=11 // pred_check
          %p145 = pneg %p57
        $region14: #{fno2d_forward.14} parent=11 // pred_check_branch
          %147 = sbr.rel (%p145) target = $region16
        $region15: #{fno2d_forward.14} parent=11 // pred_region
          _
        $region16: #{fno2d_forward.14} parent=11 // pred_fallthru
          _
        // Predicated region
        $region17: #{fno2d_forward.14} parent=11 // pred_check
          %p148 = pneg %p78
        $region18: #{fno2d_forward.14} parent=11 // pred_check_branch
          %150 = sbr.rel (%p148) target = $region20
        $region19: #{fno2d_forward.14} parent=11 // pred_region
          _
        $region20: #{fno2d_forward.14} parent=11 // pred_fallthru
          _
      $region12: #{fno2d_forward.14} parent=5 // pred_fallthru
        _
      %p151 = scmp.lt.s32.totalorder %s10, 2
      // Predicated region
      $region21: #{fno2d_forward.14} parent=5 // pred_check
        %p152 = pneg %p151
      $region22: #{fno2d_forward.14} parent=5 // pred_check_branch
        %154 = sbr.rel (%p152) target = $region24
      $region23: #{fno2d_forward.14} parent=5 // pred_region
        // Predicated region
        $region25: #{fno2d_forward.14} parent=23 // pred_check
          %p155 = pneg %p30
        $region26: #{fno2d_forward.14} parent=23 // pred_check_branch
          %157 = sbr.rel (%p155) target = $region28
        $region27: #{fno2d_forward.14} parent=23 // pred_region
          %s158 = sand.u32 %s20, 1
          %s159 = sand.u32 %s20, 1
          %s160 = smul.addr %s159, 64
          %s161 = scalar_lea.vmem [#allocation2], %s160
          %s162 = smul.u32 2, %s10
          %s163 = smul.addr %s162, 8
          %s164 = scalar_lea.vmem %s0, %s163
          // Predicated region
          $region29: #{fno2d_forward.14} parent=27 // pred_check
            _
          $region30: #{fno2d_forward.14} parent=27 // pred_check_branch
            %166 = sbr.rel (0) target = $region32
          $region31: #{fno2d_forward.14} parent=27 // pred_region
            // Predicated region
            $region33: #{fno2d_forward.14} parent=31 // pred_check
              _
            $region34: #{fno2d_forward.14} parent=31 // pred_check_branch
              %168 = sbr.rel (0) target = $region36
            $region35: #{fno2d_forward.14} parent=31 // pred_region
              loop: start=0, step=1, limit=1
              $region37: #{fno2d_forward.14} parent=35 // loop_pre_header
                _
              $region38: #{fno2d_forward.14} parent=35 // loop_header
                %s170 = sphi 0, %s174
                %p171 = scmp.ge.s32.totalorder %s170, 1
                %s175 = sphi %s164, %s164
                %s176 = sphi %s161, %s161
              $region39: #{fno2d_forward.14} parent=35 // loop_header_branch
                %173 = sbr.rel (%p171) target = $region43
              $region40: #{fno2d_forward.14} parent=35 // loop_body
                %v177 = vld [vmem:[%s175] sm:$0xff]
                %178 = vst [vmem:[%s176] sm:$0xff] %v177
                %v179 = vld [vmem:[%s175 + $0x8] sm:$0xff]
                %180 = vst [vmem:[%s176 + $0x8] sm:$0xff] %v179
                %v181 = vld [vmem:[%s175 + $0x20] sm:$0xff]
                %182 = vst [vmem:[%s176 + $0x10] sm:$0xff] %v181
                %v183 = vld [vmem:[%s175 + $0x28] sm:$0xff]
                %184 = vst [vmem:[%s176 + $0x18] sm:$0xff] %v183
                %v185 = vld [vmem:[%s175 + $0x40] sm:$0xff]
                %186 = vst [vmem:[%s176 + $0x20] sm:$0xff] %v185
                %v187 = vld [vmem:[%s175 + $0x48] sm:$0xff]
                %188 = vst [vmem:[%s176 + $0x28] sm:$0xff] %v187
                %v189 = vld [vmem:[%s175 + $0x60] sm:$0xff]
                %190 = vst [vmem:[%s176 + $0x30] sm:$0xff] %v189
                %v191 = vld [vmem:[%s175 + $0x68] sm:$0xff]
                %192 = vst [vmem:[%s176 + $0x38] sm:$0xff] %v191
              $region41: #{fno2d_forward.14} parent=35 // loop_footer
                %s174 = sadd.s32 1, %s170
              $region42: #{fno2d_forward.14} parent=35 // loop_footer_branch
                %169 = sbr.rel target = $region38
              $region43: #{fno2d_forward.14} parent=35 // loop_exit
                _
            $region36: #{fno2d_forward.14} parent=31 // pred_fallthru
              _
            // Predicated region
            $region44: #{fno2d_forward.14} parent=31 // pred_check
              _
            $region45: #{fno2d_forward.14} parent=31 // pred_check_branch
              %194 = sbr.rel target = $region47
            $region46: #{fno2d_forward.14} parent=31 // pred_region
              _
            $region47: #{fno2d_forward.14} parent=31 // pred_fallthru
              _
          $region32: #{fno2d_forward.14} parent=27 // pred_fallthru
            _
          %195 = vnop
        $region28: #{fno2d_forward.14} parent=23 // pred_fallthru
          _
        // Predicated region
        $region48: #{fno2d_forward.14} parent=23 // pred_check
          %p196 = pneg %p98
        $region49: #{fno2d_forward.14} parent=23 // pred_check_branch
          %198 = sbr.rel (%p196) target = $region51
        $region50: #{fno2d_forward.14} parent=23 // pred_region
          %s199 = sand.u32 %s88, 1
          %s200 = sand.u32 %s88, 1
          %s201 = smul.addr %s200, 64
          %s202 = scalar_lea.vmem [#allocation3], %s201
          %s203 = smul.u32 2, %s10
          %s204 = smul.addr %s203, 8
          %s205 = scalar_lea.vmem %s3, %s204
          // Predicated region
          $region52: #{fno2d_forward.14} parent=50 // pred_check
            _
          $region53: #{fno2d_forward.14} parent=50 // pred_check_branch
            %207 = sbr.rel (0) target = $region55
          $region54: #{fno2d_forward.14} parent=50 // pred_region
            // Predicated region
            $region56: #{fno2d_forward.14} parent=54 // pred_check
              _
            $region57: #{fno2d_forward.14} parent=54 // pred_check_branch
              %209 = sbr.rel (0) target = $region59
            $region58: #{fno2d_forward.14} parent=54 // pred_region
              loop: start=0, step=1, limit=1
              $region60: #{fno2d_forward.14} parent=58 // loop_pre_header
                _
              $region61: #{fno2d_forward.14} parent=58 // loop_header
                %s211 = sphi 0, %s215
                %p212 = scmp.ge.s32.totalorder %s211, 1
                %s216 = sphi %s205, %s205
                %s217 = sphi %s202, %s202
              $region62: #{fno2d_forward.14} parent=58 // loop_header_branch
                %214 = sbr.rel (%p212) target = $region66
              $region63: #{fno2d_forward.14} parent=58 // loop_body
                %v218 = vld [vmem:[%s216] sm:$0xff]
                %219 = vst [vmem:[%s217] sm:$0xff] %v218
                %v220 = vld [vmem:[%s216 + $0x8] sm:$0xff]
                %221 = vst [vmem:[%s217 + $0x8] sm:$0xff] %v220
                %v222 = vld [vmem:[%s216 + $0x20] sm:$0xff]
                %223 = vst [vmem:[%s217 + $0x10] sm:$0xff] %v222
                %v224 = vld [vmem:[%s216 + $0x28] sm:$0xff]
                %225 = vst [vmem:[%s217 + $0x18] sm:$0xff] %v224
                %v226 = vld [vmem:[%s216 + $0x40] sm:$0xff]
                %227 = vst [vmem:[%s217 + $0x20] sm:$0xff] %v226
                %v228 = vld [vmem:[%s216 + $0x48] sm:$0xff]
                %229 = vst [vmem:[%s217 + $0x28] sm:$0xff] %v228
                %v230 = vld [vmem:[%s216 + $0x60] sm:$0xff]
                %231 = vst [vmem:[%s217 + $0x30] sm:$0xff] %v230
                %v232 = vld [vmem:[%s216 + $0x68] sm:$0xff]
                %233 = vst [vmem:[%s217 + $0x38] sm:$0xff] %v232
              $region64: #{fno2d_forward.14} parent=58 // loop_footer
                %s215 = sadd.s32 1, %s211
              $region65: #{fno2d_forward.14} parent=58 // loop_footer_branch
                %210 = sbr.rel target = $region61
              $region66: #{fno2d_forward.14} parent=58 // loop_exit
                _
            $region59: #{fno2d_forward.14} parent=54 // pred_fallthru
              _
            // Predicated region
            $region67: #{fno2d_forward.14} parent=54 // pred_check
              _
            $region68: #{fno2d_forward.14} parent=54 // pred_check_branch
              %235 = sbr.rel target = $region70
            $region69: #{fno2d_forward.14} parent=54 // pred_region
              _
            $region70: #{fno2d_forward.14} parent=54 // pred_fallthru
              _
          $region55: #{fno2d_forward.14} parent=50 // pred_fallthru
            _
          %236 = vnop
        $region51: #{fno2d_forward.14} parent=23 // pred_fallthru
          _
      $region24: #{fno2d_forward.14} parent=5 // pred_fallthru
        _
      %p237 = scmp.le.s32.totalorder 1, %s10
      %p238 = scmp.lt.s32.totalorder %s10, 3
      %p239 = pnand %p237, %p238
      %p240 = pneg %p239
      // Predicated region
      $region71: #{fno2d_forward.14} parent=5 // pred_check
        _
      $region72: #{fno2d_forward.14} parent=5 // pred_check_branch
        %242 = sbr.rel (%p239) target = $region74
      $region73: #{fno2d_forward.14} parent=5 // pred_region
        %s243 = ssub.s32 %s10, 1
        %s244 = sand.u32 %s23, 1
        %s245 = sand.u32 %s23, 1
        %s246 = smul.addr %s245, 64
        %s247 = scalar_lea.vmem [#allocation2], %s246
        // Predicated region
        $region75: #{fno2d_forward.14} parent=73 // pred_check
          %p248 = pneg %p36
        $region76: #{fno2d_forward.14} parent=73 // pred_check_branch
          %250 = sbr.rel (%p248) target = $region78
        $region77: #{fno2d_forward.14} parent=73 // pred_region
          _
        $region78: #{fno2d_forward.14} parent=73 // pred_fallthru
          _
        %s251 = sand.u32 %s91, 1
        %s252 = sand.u32 %s91, 1
        %s253 = smul.addr %s252, 64
        %s254 = scalar_lea.vmem [#allocation3], %s253
        // Predicated region
        $region79: #{fno2d_forward.14} parent=73 // pred_check
          %p255 = pneg %p104
        $region80: #{fno2d_forward.14} parent=73 // pred_check_branch
          %257 = sbr.rel (%p255) target = $region82
        $region81: #{fno2d_forward.14} parent=73 // pred_region
          _
        $region82: #{fno2d_forward.14} parent=73 // pred_fallthru
          _
        %s258 = sand.u32 %s23, 1
        %s259 = sand.u32 %s23, 1
        %s260 = smul.addr %s259, 64
        %s261 = scalar_lea.vmem [#allocation2], %s260
        %p262 = pneg %p36
        %p263 = pneg %p33
        %p264 = pneg %p57
        %p265 = pneg %p54
        %p266 = pneg %p78
        %p267 = pneg %p75
        %s268 = sand.u32 %s91, 1
        %s269 = sand.u32 %s91, 1
        %s270 = smul.addr %s269, 64
        %s271 = scalar_lea.vmem [#allocation3], %s270
        %p272 = pneg %p104
        %p273 = pneg %p101
        %p274 = pneg %p130
        %p275 = pneg %p127
        %s276 = sand.u32 %s117, 1
        %s277 = sand.u32 %s117, 1
        %s278 = smul.addr %s277, 64
        %s279 = scalar_lea.vmem [#allocation4], %s278
        %s280 = smul.u32 2, %s15
        %s281 = smul.u32 2, %s15
        %s282 = smul.u32 2, %s15
        %v283 = vld [vmem:[%s1] sm:$0xff]
        %v284 = vld [vmem:[%s1 + $0x8] sm:$0xff]
        %v285 = vld [vmem:[%s1 + $0x10] sm:$0xff]
        %v286 = vld [vmem:[%s1 + $0x18] sm:$0xff]
        %v287 = vld [vmem:[%s247] sm:$0xff]
        %v288 = vld [vmem:[%s247 + $0x8] sm:$0xff]
        %v289 = vld [vmem:[%s247 + $0x10] sm:$0xff]
        %v290 = vld [vmem:[%s247 + $0x18] sm:$0xff]
        %v291 = vld [vmem:[%s247 + $0x20] sm:$0xff]
        %v292 = vld [vmem:[%s247 + $0x28] sm:$0xff]
        %v293 = vld [vmem:[%s247 + $0x30] sm:$0xff]
        %v294 = vld [vmem:[%s247 + $0x38] sm:$0xff]
        %v295 = vld [vmem:[%s2] sm:$0xff]
        %v296 = vld [vmem:[%s2 + $0x8] sm:$0xff]
        %v297 = vld [vmem:[%s2 + $0x10] sm:$0xff]
        %v298 = vld [vmem:[%s2 + $0x18] sm:$0xff]
        %300 = vset.pattern.permute.xlu0 0
        %301 = vperm.xlu0 %300, %v295
        %v302 = vpop.permute.xlu0 %301
        %305 = vset.pattern.permute.xlu0 0
        %306 = vperm.xlu0 %305, %v296
        %v307 = vpop.permute.xlu0 %306
        %310 = vset.pattern.permute.xlu0 0
        %311 = vperm.xlu0 %310, %v297
        %v312 = vpop.permute.xlu0 %311
        %315 = vset.pattern.permute.xlu0 0
        %316 = vperm.xlu0 %315, %v298
        %v317 = vpop.permute.xlu0 %316
        %vm319 = vcmask 261120
        %v321 = vsel %vm319, %v283, 0
        %v324 = vsel %vm319, %v284, 0
        %v327 = vsel %vm319, %v285, 0
        %v330 = vsel %vm319, %v286, 0
        %332 = vmatprep.subr.mxu0 %v288
        %333 = vmatpush1.msra.mxu0 %v287
        %334 = vmatprep.subr.mxu0 %v290
        %335 = vmatpush1.msra.mxu0 %v289
        %336 = vmatprep.subr.mxu0 %v292
        %337 = vmatpush1.msra.mxu0 %v291
        %338 = vmatprep.subr.mxu0 %v294
        %339 = vmatpush1.msra.mxu0 %v293
        %340 = vmatprep.subr.mxu0 0.0
        %341 = vmatpush1.msra.mxu0 0.0
        %342 = vmatprep.subr.mxu0 0.0
        %343 = vmatpush1.msra.mxu0 0.0
        %344 = vmatprep.subr.mxu0 0.0
        %345 = vmatpush1.msra.mxu0 0.0
        %346 = vmatprep.subr.mxu0 0.0
        %347 = vmatpush1.msra.mxu0 0.0
        %348 = vmatprep.subr.mxu0 0.0
        %349 = vmatpush1.msra.mxu0 0.0
        %350 = vmatprep.subr.mxu0 0.0
        %351 = vmatpush1.msra.mxu0 0.0
        %352 = vmatprep.subr.mxu0 0.0
        %353 = vmatpush1.msra.mxu0 0.0
        %354 = vmatprep.subr.mxu0 0.0
        %355 = vmatpush1.msra.mxu0 0.0
        %356 = vmatprep.subr.mxu0 0.0
        %357 = vmatpush1.msra.mxu0 0.0
        %358 = vmatprep.subr.mxu0 0.0
        %359 = vmatpush1.msra.mxu0 0.0
        %360 = vmatprep.subr.mxu0 0.0
        %361 = vmatpush1.msra.mxu0 0.0
        %362 = vmatprep.subr.mxu0 0.0
        %363 = vmatpush1.msra.mxu0 0.0
        %364 = vmatprep.subr.mxu0 0.0
        %365 = vmatpush1.msra.mxu0 0.0
        %366 = vmatprep.subr.mxu0 0.0
        %367 = vmatpush1.msra.mxu0 0.0
        %368 = vmatprep.subr.mxu0 0.0
        %369 = vmatpush1.msra.mxu0 0.0
        %370 = vmatprep.subr.mxu0 0.0
        %371 = vmatpush1.msra.mxu0 0.0
        %372 = vmatprep.subr.mxu0 0.0
        %373 = vmatpush1.msra.mxu0 0.0
        %374 = vmatprep.subr.mxu0 0.0
        %375 = vmatpush1.msra.mxu0 0.0
        %376 = vmatprep.subr.mxu0 0.0
        %377 = vmatpush1.msra.mxu0 0.0
        %378 = vmatprep.subr.mxu0 0.0
        %379 = vmatpush1.msra.mxu0 0.0
        %380 = vmatprep.subr.mxu0 0.0
        %381 = vmatpush1.msra.mxu0 0.0
        %382 = vmatprep.subr.mxu0 0.0
        %383 = vmatpush1.msra.mxu0 0.0
        %384 = vmatprep.subr.mxu0 0.0
        %385 = vmatpush1.msra.mxu0 0.0
        %386 = vmatprep.subr.mxu0 0.0
        %387 = vmatpush1.msra.mxu0 0.0
        %388 = vmatprep.subr.mxu0 0.0
        %389 = vmatpush1.msra.mxu0 0.0
        %390 = vmatprep.subr.mxu0 0.0
        %391 = vmatpush1.msra.mxu0 0.0
        %392 = vmatprep.subr.mxu0 0.0
        %393 = vmatpush1.msra.mxu0 0.0
        %394 = vmatprep.subr.mxu0 0.0
        %395 = vmatpush1.msra.mxu0 0.0
        %396 = vmatprep.mubr.f32.mxu0 0.0
        %397 = vmatmul.mubr.f32.gmra.mrb[0].mxu0 %v321
        %v398 = vpop.f32.mrb[0].mxu0
        %v399 = vadd.f32 %v302, %v398
        %v400 = vpop.f32.mrb[0].mxu0
        %v401 = vadd.f32 %v302, %v400
        %402 = vmatprep.mubr.f32.mxu0 0.0
        %403 = vmatmul.mubr.f32.gmra.mrb[0].mxu0 %v324
        %v404 = vpop.f32.mrb[0].mxu0
        %v405 = vadd.f32 %v307, %v404
        %v406 = vpop.f32.mrb[0].mxu0
        %v407 = vadd.f32 %v307, %v406
        %408 = vmatprep.mubr.f32.mxu0 0.0
        %409 = vmatmul.mubr.f32.gmra.mrb[0].mxu0 %v327
        %v410 = vpop.f32.mrb[0].mxu0
        %v411 = vadd.f32 %v312, %v410
        %v412 = vpop.f32.mrb[0].mxu0
        %v413 = vadd.f32 %v312, %v412
        %414 = vmatprep.mubr.f32.mxu0 0.0
        %415 = vmatmul.mubr.f32.gmra.mrb[0].mxu0 %v330
        %v416 = vpop.f32.mrb[0].mxu0
        %v417 = vadd.f32 %v317, %v416
        %v418 = vpop.f32.mrb[0].mxu0
        %v419 = vadd.f32 %v317, %v418
        %420 = vdwg.mxu0
        %v421 = vld [vmem:[%s254] sm:$0xff]
        %v422 = vld [vmem:[%s254 + $0x8] sm:$0xff]
        %v423 = vld [vmem:[%s254 + $0x10] sm:$0xff]
        %v424 = vld [vmem:[%s254 + $0x18] sm:$0xff]
        %v425 = vld [vmem:[%s254 + $0x20] sm:$0xff]
        %v426 = vld [vmem:[%s254 + $0x28] sm:$0xff]
        %v427 = vld [vmem:[%s254 + $0x30] sm:$0xff]
        %v428 = vld [vmem:[%s254 + $0x38] sm:$0xff]
        %v429 = vadd.f32 %v399, %v421
        %v430 = vadd.f32 %v401, %v422
        %v431 = vadd.f32 %v405, %v423
        %v432 = vadd.f32 %v407, %v424
        %v433 = vadd.f32 %v411, %v425
        %v434 = vadd.f32 %v413, %v426
        %v435 = vadd.f32 %v417, %v427
        %v436 = vadd.f32 %v419, %v428
        %437 = vst [vmem:[%s279] sm:$0xff] %v429
        %438 = vst [vmem:[%s279 + $0x8] sm:$0xff] %v430
        %439 = vst [vmem:[%s279 + $0x10] sm:$0xff] %v431
        %440 = vst [vmem:[%s279 + $0x18] sm:$0xff] %v432
        %441 = vst [vmem:[%s279 + $0x20] sm:$0xff] %v433
        %442 = vst [vmem:[%s279 + $0x28] sm:$0xff] %v434
        %443 = vst [vmem:[%s279 + $0x30] sm:$0xff] %v435
        %444 = vst [vmem:[%s279 + $0x38] sm:$0xff] %v436
        %s445 = sand.u32 %s117, 1
        %s446 = sand.u32 %s117, 1
        %s447 = smul.addr %s446, 64
        %s448 = scalar_lea.vmem [#allocation4], %s447
        // Predicated region
        $region83: #{fno2d_forward.14} parent=73 // pred_check
          %p449 = pneg %p127
        $region84: #{fno2d_forward.14} parent=73 // pred_check_branch
          %451 = sbr.rel (%p449) target = $region86
        $region85: #{fno2d_forward.14} parent=73 // pred_region
          %s452 = smul.u32 2, %s15
          %s453 = smul.addr %s452, 8
          %s454 = scalar_lea.vmem %s4, %s453
          // Predicated region
          $region87: #{fno2d_forward.14} parent=85 // pred_check
            _
          $region88: #{fno2d_forward.14} parent=85 // pred_check_branch
            %456 = sbr.rel (0) target = $region90
          $region89: #{fno2d_forward.14} parent=85 // pred_region
            // Predicated region
            $region91: #{fno2d_forward.14} parent=89 // pred_check
              _
            $region92: #{fno2d_forward.14} parent=89 // pred_check_branch
              %458 = sbr.rel (0) target = $region94
            $region93: #{fno2d_forward.14} parent=89 // pred_region
              loop: start=0, step=1, limit=1
              $region95: #{fno2d_forward.14} parent=93 // loop_pre_header
                _
              $region96: #{fno2d_forward.14} parent=93 // loop_header
                %s460 = sphi 0, %s464
                %p461 = scmp.ge.s32.totalorder %s460, 1
                %s465 = sphi %s448, %s448
                %s466 = sphi %s454, %s454
              $region97: #{fno2d_forward.14} parent=93 // loop_header_branch
                %463 = sbr.rel (%p461) target = $region101
              $region98: #{fno2d_forward.14} parent=93 // loop_body
                %v467 = vld [vmem:[%s465] sm:$0xff]
                %468 = vst [vmem:[%s466] sm:$0xff] %v467
                %v469 = vld [vmem:[%s465 + $0x8] sm:$0xff]
                %470 = vst [vmem:[%s466 + $0x8] sm:$0xff] %v469
                %v471 = vld [vmem:[%s465 + $0x10] sm:$0xff]
                %472 = vst [vmem:[%s466 + $0x20] sm:$0xff] %v471
                %v473 = vld [vmem:[%s465 + $0x18] sm:$0xff]
                %474 = vst [vmem:[%s466 + $0x28] sm:$0xff] %v473
                %v475 = vld [vmem:[%s465 + $0x20] sm:$0xff]
                %476 = vst [vmem:[%s466 + $0x40] sm:$0xff] %v475
                %v477 = vld [vmem:[%s465 + $0x28] sm:$0xff]
                %478 = vst [vmem:[%s466 + $0x48] sm:$0xff] %v477
                %v479 = vld [vmem:[%s465 + $0x30] sm:$0xff]
                %480 = vst [vmem:[%s466 + $0x60] sm:$0xff] %v479
                %v481 = vld [vmem:[%s465 + $0x38] sm:$0xff]
                %482 = vst [vmem:[%s466 + $0x68] sm:$0xff] %v481
              $region99: #{fno2d_forward.14} parent=93 // loop_footer
                %s464 = sadd.s32 1, %s460
              $region100: #{fno2d_forward.14} parent=93 // loop_footer_branch
                %459 = sbr.rel target = $region96
              $region101: #{fno2d_forward.14} parent=93 // loop_exit
                _
            $region94: #{fno2d_forward.14} parent=89 // pred_fallthru
              _
            // Predicated region
            $region102: #{fno2d_forward.14} parent=89 // pred_check
              _
            $region103: #{fno2d_forward.14} parent=89 // pred_check_branch
              %484 = sbr.rel target = $region105
            $region104: #{fno2d_forward.14} parent=89 // pred_region
              _
            $region105: #{fno2d_forward.14} parent=89 // pred_fallthru
              _
          $region90: #{fno2d_forward.14} parent=85 // pred_fallthru
            _
          %485 = vnop
        $region86: #{fno2d_forward.14} parent=73 // pred_fallthru
          _
      $region74: #{fno2d_forward.14} parent=5 // pred_fallthru
        _
      %p486 = scmp.le.s32.totalorder 2, %s10
      // Predicated region
      $region106: #{fno2d_forward.14} parent=5 // pred_check
        %p487 = pneg %p486
      $region107: #{fno2d_forward.14} parent=5 // pred_check_branch
        %489 = sbr.rel (%p487) target = $region109
      $region108: #{fno2d_forward.14} parent=5 // pred_region
        %s490 = ssub.s32 %s10, 2
        // Predicated region
        $region110: #{fno2d_forward.14} parent=108 // pred_check
          %p491 = pneg %p133
        $region111: #{fno2d_forward.14} parent=108 // pred_check_branch
          %493 = sbr.rel (%p491) target = $region113
        $region112: #{fno2d_forward.14} parent=108 // pred_region
          %s494 = sand.u32 %s118, 1
          %s495 = sand.u32 %s118, 1
          %s496 = smul.addr %s495, 64
          %s497 = scalar_lea.vmem [#allocation4], %s496
        $region113: #{fno2d_forward.14} parent=108 // pred_fallthru
          _
      $region109: #{fno2d_forward.14} parent=5 // pred_fallthru
        _
    $region6: #{fno2d_forward.14} parent=1 // loop_footer
      %s14 = sadd.s32 1, %s10
    $region7: #{fno2d_forward.14} parent=1 // loop_footer_branch
      %9 = sbr.rel target = $region3
    $region8: #{fno2d_forward.14} parent=1 // loop_exit
      _

// kernel: fno2d_forward.15
$region0: #{fno2d_forward.15}
  #allocation0 [shape = 'u32[]', space=smem, size = 0x4, offset = 0x4, fixed_abs, tag = 'smem constant byte address 0x4 - core index']
  #allocation1 [shape = 'u32[144,128]{1,0:T(1,128)}', space=vmem, size = 0x12000, scoped, tag = 'internal scratch']
  #allocation2 [shape = 'f32[1,1]{1,0:T(1,128)S(1)}', space=vmem, size = 0x200, scoped, tag = 'scoped memory for fno2d_forward.15']
  %s0 = inlined_call_operand.vmem [shape: f32[32,512], index: 0, kind: input, shape index: {}]
  %s1 = inlined_call_operand.vmem [shape: f32[64,32], index: 1, kind: input, shape index: {}]
  %s2 = inlined_call_operand.vmem [shape: f32[64,1], index: 2, kind: input, shape index: {}]
  %s3 = inlined_call_operand.vmem [shape: f32[32,64], index: 3, kind: input, shape index: {}]
  %s4 = inlined_call_operand.vmem [shape: f32[32,1], index: 4, kind: input, shape index: {}]
  %s5 = inlined_call_operand.vmem [shape: f32[1,32], index: 5, kind: input, shape index: {}]
  %s6 = inlined_call_operand.<no memory space> [shape: f32[1,1], index: 6, kind: input, shape index: {}]
  %s7 = inlined_call_operand.vmem [shape: f32[1,512], index: 7, kind: output, shape index: {}]
  %s8 = sld [smem:[#allocation0]]
  $region84: #{fno2d_forward.15} parent=0
    _
  %s10 = ssub.s32 1, %s8
  %s11 = scalar_select 0, %s10, %s8
  %v12 = vstv %s6
  %13 = vst [vmem:[#allocation2] sm:$0x1] %v12
  $region1: #{fno2d_forward.15} parent=0
    #allocation3 [shape = 'u8[65536]{0}', space=vmem, size = 0x10000, scoped, tag = 'input window, operand 0']
    loop: start=0, step=1, limit=4
    $region2: #{fno2d_forward.15} parent=1 // loop_pre_header
      _
    $region3: #{fno2d_forward.15} parent=1 // loop_header
      %s15 = sphi 0, %s19
      %p16 = scmp.ge.s32.totalorder %s15, 4
      %s25 = sphi 0, %s27
      %s28 = sphi 0, %s25
      %s29 = sphi 0, %s28
      %s45 = sphi 0, %s29
      %s49 = sphi 0, %s49
      %s51 = sphi 0, %s49
      %s52 = sphi 0, %s51
      %s66 = sphi 0, %s52
      %s70 = sphi 0, %s70
      %s72 = sphi 0, %s70
      %s73 = sphi 0, %s72
      %s87 = sphi 0, %s73
      %s91 = sphi 0, %s91
      %s93 = sphi 0, %s91
      %s94 = sphi 0, %s93
      %s108 = sphi 0, %s94
      %s112 = sphi 0, %s112
      %s114 = sphi 0, %s112
      %s115 = sphi 0, %s114
      %s129 = sphi 0, %s115
      %s133 = sphi 0, %s133
      %s135 = sphi 0, %s133
      %s136 = sphi 0, %s135
      %s150 = sphi 0, %s136
      %s154 = sphi 0, %s154
      %s156 = sphi 0, %s154
      %s157 = sphi 0, %s156
      %s171 = sphi 0, %s157
      %s177 = sphi 0, %s179
      %s180 = sphi 0, %s177
      %s181 = sphi 0, %s180
      %s197 = sphi 0, %s181
    $region4: #{fno2d_forward.15} parent=1 // loop_header_branch
      %18 = sbr.rel (%p16) target = $region8
    $region5: #{fno2d_forward.15} parent=1 // loop_body
      %s20 = ssub.s32 %s15, 1
      %s21 = ssub.s32 %s15, 2
      %s22 = sadd.s32 %s15, 1
      %s23 = ssub.s32 %s15, %s22
      %p24 = scmp.eq.s32.totalorder %s23, 0
      %s26 = sadd.s32 %s25, 1
      %s27 = scalar_select %p24, %s25, %s26
      %p30 = pneg %p24
      %p31 = scmp.eq.s32.totalorder %s15, 1
      %p32 = por %p30, %p31
      %p33 = scmp.ne.s32.totalorder %s25, %s28
      %p34 = scmp.eq.s32.totalorder %s15, 0
      %p35 = por %p33, %p34
      %p36 = scmp.ne.s32.totalorder %s25, %s28
      %p37 = scmp.eq.s32.totalorder %s20, 1
      %p38 = por %p36, %p37
      %p39 = scmp.ne.s32.totalorder %s28, %s29
      %p40 = scmp.eq.s32.totalorder %s20, 0
      %p41 = por %p39, %p40
      %p42 = scmp.ne.s32.totalorder %s28, %s29
      %p43 = scmp.eq.s32.totalorder %s21, 1
      %p44 = por %p42, %p43
      %p46 = scmp.ne.s32.totalorder %s29, %s45
      %p47 = scmp.eq.s32.totalorder %s21, 0
      %p48 = por %p46, %p47
      %s50 = sadd.s32 %s49, 1
      %p53 = scmp.eq.s32.totalorder %s15, 1
      %p54 = scmp.ne.s32.totalorder %s49, %s51
      %p55 = scmp.eq.s32.totalorder %s15, 0
      %p56 = por %p54, %p55
      %p57 = scmp.ne.s32.totalorder %s49, %s51
      %p58 = scmp.eq.s32.totalorder %s20, 1
      %p59 = por %p57, %p58
      %p60 = scmp.ne.s32.totalorder %s51, %s52
      %p61 = scmp.eq.s32.totalorder %s20, 0
      %p62 = por %p60, %p61
      %p63 = scmp.ne.s32.totalorder %s51, %s52
      %p64 = scmp.eq.s32.totalorder %s21, 1
      %p65 = por %p63, %p64
      %p67 = scmp.ne.s32.totalorder %s52, %s66
      %p68 = scmp.eq.s32.totalorder %s21, 0
      %p69 = por %p67, %p68
      %s71 = sadd.s32 %s70, 1
      %p74 = scmp.eq.s32.totalorder %s15, 1
      %p75 = scmp.ne.s32.totalorder %s70, %s72
      %p76 = scmp.eq.s32.totalorder %s15, 0
      %p77 = por %p75, %p76
      %p78 = scmp.ne.s32.totalorder %s70, %s72
      %p79 = scmp.eq.s32.totalorder %s20, 1
      %p80 = por %p78, %p79
      %p81 = scmp.ne.s32.totalorder %s72, %s73
      %p82 = scmp.eq.s32.totalorder %s20, 0
      %p83 = por %p81, %p82
      %p84 = scmp.ne.s32.totalorder %s72, %s73
      %p85 = scmp.eq.s32.totalorder %s21, 1
      %p86 = por %p84, %p85
      %p88 = scmp.ne.s32.totalorder %s73, %s87
      %p89 = scmp.eq.s32.totalorder %s21, 0
      %p90 = por %p88, %p89
      %s92 = sadd.s32 %s91, 1
      %p95 = scmp.eq.s32.totalorder %s15, 1
      %p96 = scmp.ne.s32.totalorder %s91, %s93
      %p97 = scmp.eq.s32.totalorder %s15, 0
      %p98 = por %p96, %p97
      %p99 = scmp.ne.s32.totalorder %s91, %s93
      %p100 = scmp.eq.s32.totalorder %s20, 1
      %p101 = por %p99, %p100
      %p102 = scmp.ne.s32.totalorder %s93, %s94
      %p103 = scmp.eq.s32.totalorder %s20, 0
      %p104 = por %p102, %p103
      %p105 = scmp.ne.s32.totalorder %s93, %s94
      %p106 = scmp.eq.s32.totalorder %s21, 1
      %p107 = por %p105, %p106
      %p109 = scmp.ne.s32.totalorder %s94, %s108
      %p110 = scmp.eq.s32.totalorder %s21, 0
      %p111 = por %p109, %p110
      %s113 = sadd.s32 %s112, 1
      %p116 = scmp.eq.s32.totalorder %s15, 1
      %p117 = scmp.ne.s32.totalorder %s112, %s114
      %p118 = scmp.eq.s32.totalorder %s15, 0
      %p119 = por %p117, %p118
      %p120 = scmp.ne.s32.totalorder %s112, %s114
      %p121 = scmp.eq.s32.totalorder %s20, 1
      %p122 = por %p120, %p121
      %p123 = scmp.ne.s32.totalorder %s114, %s115
      %p124 = scmp.eq.s32.totalorder %s20, 0
      %p125 = por %p123, %p124
      %p126 = scmp.ne.s32.totalorder %s114, %s115
      %p127 = scmp.eq.s32.totalorder %s21, 1
      %p128 = por %p126, %p127
      %p130 = scmp.ne.s32.totalorder %s115, %s129
      %p131 = scmp.eq.s32.totalorder %s21, 0
      %p132 = por %p130, %p131
      %s134 = sadd.s32 %s133, 1
      %p137 = scmp.eq.s32.totalorder %s15, 1
      %p138 = scmp.ne.s32.totalorder %s133, %s135
      %p139 = scmp.eq.s32.totalorder %s15, 0
      %p140 = por %p138, %p139
      %p141 = scmp.ne.s32.totalorder %s133, %s135
      %p142 = scmp.eq.s32.totalorder %s20, 1
      %p143 = por %p141, %p142
      %p144 = scmp.ne.s32.totalorder %s135, %s136
      %p145 = scmp.eq.s32.totalorder %s20, 0
      %p146 = por %p144, %p145
      %p147 = scmp.ne.s32.totalorder %s135, %s136
      %p148 = scmp.eq.s32.totalorder %s21, 1
      %p149 = por %p147, %p148
      %p151 = scmp.ne.s32.totalorder %s136, %s150
      %p152 = scmp.eq.s32.totalorder %s21, 0
      %p153 = por %p151, %p152
      %s155 = sadd.s32 %s154, 1
      %p158 = scmp.eq.s32.totalorder %s15, 1
      %p159 = scmp.ne.s32.totalorder %s154, %s156
      %p160 = scmp.eq.s32.totalorder %s15, 0
      %p161 = por %p159, %p160
      %p162 = scmp.ne.s32.totalorder %s154, %s156
      %p163 = scmp.eq.s32.totalorder %s20, 1
      %p164 = por %p162, %p163
      %p165 = scmp.ne.s32.totalorder %s156, %s157
      %p166 = scmp.eq.s32.totalorder %s20, 0
      %p167 = por %p165, %p166
      %p168 = scmp.ne.s32.totalorder %s156, %s157
      %p169 = scmp.eq.s32.totalorder %s21, 1
      %p170 = por %p168, %p169
      %p172 = scmp.ne.s32.totalorder %s157, %s171
      %p173 = scmp.eq.s32.totalorder %s21, 0
      %p174 = por %p172, %p173
      %s175 = ssub.s32 %s15, %s22
      %p176 = scmp.eq.s32.totalorder %s175, 0
      %s178 = sadd.s32 %s177, 1
      %s179 = scalar_select %p176, %s177, %s178
      %p182 = pneg %p176
      %p183 = scmp.eq.s32.totalorder %s15, 1
      %p184 = por %p182, %p183
      %p185 = scmp.ne.s32.totalorder %s177, %s180
      %p186 = scmp.eq.s32.totalorder %s15, 0
      %p187 = por %p185, %p186
      %p188 = scmp.ne.s32.totalorder %s177, %s180
      %p189 = scmp.eq.s32.totalorder %s20, 1
      %p190 = por %p188, %p189
      %p191 = scmp.ne.s32.totalorder %s180, %s181
      %p192 = scmp.eq.s32.totalorder %s20, 0
      %p193 = por %p191, %p192
      %p194 = scmp.ne.s32.totalorder %s180, %s181
      %p195 = scmp.eq.s32.totalorder %s21, 1
      %p196 = por %p194, %p195
      %p198 = scmp.ne.s32.totalorder %s181, %s197
      %p199 = scmp.eq.s32.totalorder %s21, 0
      %p200 = por %p198, %p199
      %p201 = scmp.le.s32.totalorder 1, %s15
      %p202 = scmp.lt.s32.totalorder %s15, 3
      %p203 = pnand %p201, %p202
      %p204 = pneg %p203
      // Predicated region
      $region9: #{fno2d_forward.15} parent=5 // pred_check
        _
      $region10: #{fno2d_forward.15} parent=5 // pred_check_branch
        %206 = sbr.rel (%p203) target = $region12
      $region11: #{fno2d_forward.15} parent=5 // pred_region
        %s207 = ssub.s32 %s15, 1
        // Predicated region
        $region13: #{fno2d_forward.15} parent=11 // pred_check
          %p208 = pneg %p62
        $region14: #{fno2d_forward.15} parent=11 // pred_check_branch
          %210 = sbr.rel (%p208) target = $region16
        $region15: #{fno2d_forward.15} parent=11 // pred_region
          _
        $region16: #{fno2d_forward.15} parent=11 // pred_fallthru
          _
        // Predicated region
        $region17: #{fno2d_forward.15} parent=11 // pred_check
          %p211 = pneg %p83
        $region18: #{fno2d_forward.15} parent=11 // pred_check_branch
          %213 = sbr.rel (%p211) target = $region20
        $region19: #{fno2d_forward.15} parent=11 // pred_region
          _
        $region20: #{fno2d_forward.15} parent=11 // pred_fallthru
          _
        // Predicated region
        $region21: #{fno2d_forward.15} parent=11 // pred_check
          %p214 = pneg %p104
        $region22: #{fno2d_forward.15} parent=11 // pred_check_branch
          %216 = sbr.rel (%p214) target = $region24
        $region23: #{fno2d_forward.15} parent=11 // pred_region
          _
        $region24: #{fno2d_forward.15} parent=11 // pred_fallthru
          _
        // Predicated region
        $region25: #{fno2d_forward.15} parent=11 // pred_check
          %p217 = pneg %p125
        $region26: #{fno2d_forward.15} parent=11 // pred_check_branch
          %219 = sbr.rel (%p217) target = $region28
        $region27: #{fno2d_forward.15} parent=11 // pred_region
          _
        $region28: #{fno2d_forward.15} parent=11 // pred_fallthru
          _
        // Predicated region
        $region29: #{fno2d_forward.15} parent=11 // pred_check
          %p220 = pneg %p146
        $region30: #{fno2d_forward.15} parent=11 // pred_check_branch
          %222 = sbr.rel (%p220) target = $region32
        $region31: #{fno2d_forward.15} parent=11 // pred_region
          _
        $region32: #{fno2d_forward.15} parent=11 // pred_fallthru
          _
        // Predicated region
        $region33: #{fno2d_forward.15} parent=11 // pred_check
          %p223 = pneg %p167
        $region34: #{fno2d_forward.15} parent=11 // pred_check_branch
          %225 = sbr.rel (%p223) target = $region36
        $region35: #{fno2d_forward.15} parent=11 // pred_region
          _
        $region36: #{fno2d_forward.15} parent=11 // pred_fallthru
          _
      $region12: #{fno2d_forward.15} parent=5 // pred_fallthru
        _
      %p226 = scmp.lt.s32.totalorder %s15, 2
      // Predicated region
      $region37: #{fno2d_forward.15} parent=5 // pred_check
        %p227 = pneg %p226
      $region38: #{fno2d_forward.15} parent=5 // pred_check_branch
        %229 = sbr.rel (%p227) target = $region40
      $region39: #{fno2d_forward.15} parent=5 // pred_region
        // Predicated region
        $region41: #{fno2d_forward.15} parent=39 // pred_check
          %p230 = pneg %p35
        $region42: #{fno2d_forward.15} parent=39 // pred_check_branch
          %232 = sbr.rel (%p230) target = $region44
        $region43: #{fno2d_forward.15} parent=39 // pred_region
          %s233 = sand.u32 %s25, 1
          %s234 = sand.u32 %s25, 1
          %s235 = smul.addr %s234, 64
          %s236 = scalar_lea.vmem [#allocation3], %s235
          %s237 = smul.u32 2, %s15
          %s238 = smul.addr %s237, 8
          %s239 = scalar_lea.vmem %s0, %s238
          // Predicated region
          $region45: #{fno2d_forward.15} parent=43 // pred_check
            _
          $region46: #{fno2d_forward.15} parent=43 // pred_check_branch
            %241 = sbr.rel (0) target = $region48
          $region47: #{fno2d_forward.15} parent=43 // pred_region
            // Predicated region
            $region49: #{fno2d_forward.15} parent=47 // pred_check
              _
            $region50: #{fno2d_forward.15} parent=47 // pred_check_branch
              %243 = sbr.rel (0) target = $region52
            $region51: #{fno2d_forward.15} parent=47 // pred_region
              loop: start=0, step=1, limit=1
              $region53: #{fno2d_forward.15} parent=51 // loop_pre_header
                _
              $region54: #{fno2d_forward.15} parent=51 // loop_header
                %s245 = sphi 0, %s249
                %p246 = scmp.ge.s32.totalorder %s245, 1
                %s250 = sphi %s239, %s239
                %s251 = sphi %s236, %s236
              $region55: #{fno2d_forward.15} parent=51 // loop_header_branch
                %248 = sbr.rel (%p246) target = $region59
              $region56: #{fno2d_forward.15} parent=51 // loop_body
                %v252 = vld [vmem:[%s250] sm:$0xff]
                %253 = vst [vmem:[%s251] sm:$0xff] %v252
                %v254 = vld [vmem:[%s250 + $0x8] sm:$0xff]
                %255 = vst [vmem:[%s251 + $0x8] sm:$0xff] %v254
                %v256 = vld [vmem:[%s250 + $0x20] sm:$0xff]
                %257 = vst [vmem:[%s251 + $0x10] sm:$0xff] %v256
                %v258 = vld [vmem:[%s250 + $0x28] sm:$0xff]
                %259 = vst [vmem:[%s251 + $0x18] sm:$0xff] %v258
                %v260 = vld [vmem:[%s250 + $0x40] sm:$0xff]
                %261 = vst [vmem:[%s251 + $0x20] sm:$0xff] %v260
                %v262 = vld [vmem:[%s250 + $0x48] sm:$0xff]
                %263 = vst [vmem:[%s251 + $0x28] sm:$0xff] %v262
                %v264 = vld [vmem:[%s250 + $0x60] sm:$0xff]
                %265 = vst [vmem:[%s251 + $0x30] sm:$0xff] %v264
                %v266 = vld [vmem:[%s250 + $0x68] sm:$0xff]
                %267 = vst [vmem:[%s251 + $0x38] sm:$0xff] %v266
              $region57: #{fno2d_forward.15} parent=51 // loop_footer
                %s249 = sadd.s32 1, %s245
              $region58: #{fno2d_forward.15} parent=51 // loop_footer_branch
                %244 = sbr.rel target = $region54
              $region59: #{fno2d_forward.15} parent=51 // loop_exit
                _
            $region52: #{fno2d_forward.15} parent=47 // pred_fallthru
              _
            // Predicated region
            $region60: #{fno2d_forward.15} parent=47 // pred_check
              _
            $region61: #{fno2d_forward.15} parent=47 // pred_check_branch
              %269 = sbr.rel target = $region63
            $region62: #{fno2d_forward.15} parent=47 // pred_region
              _
            $region63: #{fno2d_forward.15} parent=47 // pred_fallthru
              _
          $region48: #{fno2d_forward.15} parent=43 // pred_fallthru
            _
          %270 = vnop
        $region44: #{fno2d_forward.15} parent=39 // pred_fallthru
          _
      $region40: #{fno2d_forward.15} parent=5 // pred_fallthru
        _
      %p271 = scmp.le.s32.totalorder 1, %s15
      %p272 = scmp.lt.s32.totalorder %s15, 3
      %p273 = pnand %p271, %p272
      %p274 = pneg %p273
      // Predicated region
      $region64: #{fno2d_forward.15} parent=5 // pred_check
        _
      $region65: #{fno2d_forward.15} parent=5 // pred_check_branch
        %276 = sbr.rel (%p273) target = $region67
      $region66: #{fno2d_forward.15} parent=5 // pred_region
        %s277 = ssub.s32 %s15, 1
        %s278 = sand.u32 %s28, 1
        %s279 = sand.u32 %s28, 1
        %s280 = smul.addr %s279, 64
        %s281 = scalar_lea.vmem [#allocation3], %s280
        // Predicated region
        $region68: #{fno2d_forward.15} parent=66 // pred_check
          %p282 = pneg %p41
        $region69: #{fno2d_forward.15} parent=66 // pred_check_branch
          %284 = sbr.rel (%p282) target = $region71
        $region70: #{fno2d_forward.15} parent=66 // pred_region
          _
        $region71: #{fno2d_forward.15} parent=66 // pred_fallthru
          _
        %s285 = sand.u32 %s28, 1
        %s286 = sand.u32 %s28, 1
        %s287 = smul.addr %s286, 64
        %s288 = scalar_lea.vmem [#allocation3], %s287
        %p289 = pneg %p41
        %p290 = pneg %p38
        %p291 = pneg %p62
        %p292 = pneg %p59
        %p293 = pneg %p83
        %p294 = pneg %p80
        %p295 = pneg %p104
        %p296 = pneg %p101
        %p297 = pneg %p125
        %p298 = pneg %p122
        %p299 = pneg %p146
        %p300 = pneg %p143
        %p301 = pneg %p167
        %p302 = pneg %p164
        %p303 = pneg %p193
        %p304 = pneg %p190
        %s305 = smul.u32 2, %s20
        %p306 = scmp.lt.s32.totalorder %s305, 3
        %s307 = scalar_select %p306, %s305, 3
        %s308 = scalar_lea.vmem %s7, %s307
        %s309 = smul.u32 2, %s20
        %s310 = smul.u32 2, %s20
        %p311 = scmp.lt.s32.totalorder %s310, 3
        %s312 = scalar_select %p311, %s310, 3
        %s313 = scalar_lea.vmem %s7, %s312
        %s314 = smul.u32 2, %s20
        %v315 = vld [vmem:[%s1] sm:$0xff]
        %v316 = vld [vmem:[%s1 + $0x8] sm:$0xff]
        %v317 = vld [vmem:[%s1 + $0x10] sm:$0xff]
        %v318 = vld [vmem:[%s1 + $0x18] sm:$0xff]
        %v319 = vld [vmem:[%s1 + $0x20] sm:$0xff]
        %v320 = vld [vmem:[%s1 + $0x28] sm:$0xff]
        %v321 = vld [vmem:[%s1 + $0x30] sm:$0xff]
        %v322 = vld [vmem:[%s1 + $0x38] sm:$0xff]
        %v323 = vld [vmem:[%s281] sm:$0xff]
        %v324 = vld [vmem:[%s281 + $0x8] sm:$0xff]
        %v325 = vld [vmem:[%s281 + $0x10] sm:$0xff]
        %v326 = vld [vmem:[%s281 + $0x18] sm:$0xff]
        %v327 = vld [vmem:[%s281 + $0x20] sm:$0xff]
        %v328 = vld [vmem:[%s281 + $0x28] sm:$0xff]
        %v329 = vld [vmem:[%s281 + $0x30] sm:$0xff]
        %v330 = vld [vmem:[%s281 + $0x38] sm:$0xff]
        %v331 = vld [vmem:[%s2] sm:$0xff]
        %v332 = vld [vmem:[%s2 + $0x8] sm:$0xff]
        %v333 = vld [vmem:[%s2 + $0x10] sm:$0xff]
        %v334 = vld [vmem:[%s2 + $0x18] sm:$0xff]
        %v335 = vld [vmem:[%s2 + $0x20] sm:$0xff]
        %v336 = vld [vmem:[%s2 + $0x28] sm:$0xff]
        %v337 = vld [vmem:[%s2 + $0x30] sm:$0xff]
        %v338 = vld [vmem:[%s2 + $0x38] sm:$0xff]
        %340 = vset.pattern.permute.xlu0 0
        %341 = vperm.xlu0 %340, %v331
        %v342 = vpop.permute.xlu0 %341
        %345 = vset.pattern.permute.xlu0 0
        %346 = vperm.xlu0 %345, %v332
        %v347 = vpop.permute.xlu0 %346
        %350 = vset.pattern.permute.xlu0 0
        %351 = vperm.xlu0 %350, %v333
        %v352 = vpop.permute.xlu0 %351
        %355 = vset.pattern.permute.xlu0 0
        %356 = vperm.xlu0 %355, %v334
        %v357 = vpop.permute.xlu0 %356
        %360 = vset.pattern.permute.xlu0 0
        %361 = vperm.xlu0 %360, %v335
        %v362 = vpop.permute.xlu0 %361
        %365 = vset.pattern.permute.xlu0 0
        %366 = vperm.xlu0 %365, %v336
        %v367 = vpop.permute.xlu0 %366
        %370 = vset.pattern.permute.xlu0 0
        %371 = vperm.xlu0 %370, %v337
        %v372 = vpop.permute.xlu0 %371
        %375 = vset.pattern.permute.xlu0 0
        %376 = vperm.xlu0 %375, %v338
        %v377 = vpop.permute.xlu0 %376
        %vm379 = vcmask 261120
        %v381 = vsel %vm379, %v315, 0
        %v384 = vsel %vm379, %v316, 0
        %v387 = vsel %vm379, %v317, 0
        %v390 = vsel %vm379, %v318, 0
        %v393 = vsel %vm379, %v319, 0
        %v396 = vsel %vm379, %v320, 0
        %v399 = vsel %vm379, %v321, 0
        %v402 = vsel %vm379, %v322, 0
        %404 = vmatprep.subr.mxu0 %v324
        %405 = vmatpush1.msra.mxu0 %v323
        %406 = vmatprep.subr.mxu0 %v326
        %407 = vmatpush1.msra.mxu0 %v325
        %408 = vmatprep.subr.mxu0 %v328
        %409 = vmatpush1.msra.mxu0 %v327
        %410 = vmatprep.subr.mxu0 %v330
        %411 = vmatpush1.msra.mxu0 %v329
        %412 = vmatprep.subr.mxu0 0.0
        %413 = vmatpush1.msra.mxu0 0.0
        %414 = vmatprep.subr.mxu0 0.0
        %415 = vmatpush1.msra.mxu0 0.0
        %416 = vmatprep.subr.mxu0 0.0
        %417 = vmatpush1.msra.mxu0 0.0
        %418 = vmatprep.subr.mxu0 0.0
        %419 = vmatpush1.msra.mxu0 0.0
        %420 = vmatprep.subr.mxu0 0.0
        %421 = vmatpush1.msra.mxu0 0.0
        %422 = vmatprep.subr.mxu0 0.0
        %423 = vmatpush1.msra.mxu0 0.0
        %424 = vmatprep.subr.mxu0 0.0
        %425 = vmatpush1.msra.mxu0 0.0
        %426 = vmatprep.subr.mxu0 0.0
        %427 = vmatpush1.msra.mxu0 0.0
        %428 = vmatprep.subr.mxu0 0.0
        %429 = vmatpush1.msra.mxu0 0.0
        %430 = vmatprep.subr.mxu0 0.0
        %431 = vmatpush1.msra.mxu0 0.0
        %432 = vmatprep.subr.mxu0 0.0
        %433 = vmatpush1.msra.mxu0 0.0
        %434 = vmatprep.subr.mxu0 0.0
        %435 = vmatpush1.msra.mxu0 0.0
        %436 = vmatprep.subr.mxu0 0.0
        %437 = vmatpush1.msra.mxu0 0.0
        %438 = vmatprep.subr.mxu0 0.0
        %439 = vmatpush1.msra.mxu0 0.0
        %440 = vmatprep.subr.mxu0 0.0
        %441 = vmatpush1.msra.mxu0 0.0
        %442 = vmatprep.subr.mxu0 0.0
        %443 = vmatpush1.msra.mxu0 0.0
        %444 = vmatprep.subr.mxu0 0.0
        %445 = vmatpush1.msra.mxu0 0.0
        %446 = vmatprep.subr.mxu0 0.0
        %447 = vmatpush1.msra.mxu0 0.0
        %448 = vmatprep.subr.mxu0 0.0
        %449 = vmatpush1.msra.mxu0 0.0
        %450 = vmatprep.subr.mxu0 0.0
        %451 = vmatpush1.msra.mxu0 0.0
        %452 = vmatprep.subr.mxu0 0.0
        %453 = vmatpush1.msra.mxu0 0.0
        %454 = vmatprep.subr.mxu0 0.0
        %455 = vmatpush1.msra.mxu0 0.0
        %456 = vmatprep.subr.mxu0 0.0
        %457 = vmatpush1.msra.mxu0 0.0
        %458 = vmatprep.subr.mxu0 0.0
        %459 = vmatpush1.msra.mxu0 0.0
        %460 = vmatprep.subr.mxu0 0.0
        %461 = vmatpush1.msra.mxu0 0.0
        %462 = vmatprep.subr.mxu0 0.0
        %463 = vmatpush1.msra.mxu0 0.0
        %464 = vmatprep.subr.mxu0 0.0
        %465 = vmatpush1.msra.mxu0 0.0
        %466 = vmatprep.subr.mxu0 0.0
        %467 = vmatpush1.msra.mxu0 0.0
        %468 = vmatprep.mubr.f32.mxu0 0.0
        %469 = vmatmul.mubr.f32.gmra.mrb[0].mxu0 %v381
        %v470 = vpop.f32.mrb[0].mxu0
        %v471 = vadd.f32 %v342, %v470
        %v472 = vpop.f32.mrb[0].mxu0
        %v473 = vadd.f32 %v342, %v472
        %474 = vmatprep.mubr.f32.mxu0 0.0
        %475 = vmatmul.mubr.f32.gmra.mrb[0].mxu0 %v384
        %v476 = vpop.f32.mrb[0].mxu0
        %v477 = vadd.f32 %v347, %v476
        %v478 = vpop.f32.mrb[0].mxu0
        %v479 = vadd.f32 %v347, %v478
        %480 = vmatprep.mubr.f32.mxu0 0.0
        %481 = vmatmul.mubr.f32.gmra.mrb[0].mxu0 %v387
        %v482 = vpop.f32.mrb[0].mxu0
        %v483 = vadd.f32 %v352, %v482
        %v484 = vpop.f32.mrb[0].mxu0
        %v485 = vadd.f32 %v352, %v484
        %486 = vmatprep.mubr.f32.mxu0 0.0
        %487 = vmatmul.mubr.f32.gmra.mrb[0].mxu0 %v390
        %v488 = vpop.f32.mrb[0].mxu0
        %v489 = vadd.f32 %v357, %v488
        %v490 = vpop.f32.mrb[0].mxu0
        %v491 = vadd.f32 %v357, %v490
        %492 = vmatprep.mubr.f32.mxu0 0.0
        %493 = vmatmul.mubr.f32.gmra.mrb[0].mxu0 %v393
        %v494 = vpop.f32.mrb[0].mxu0
        %v495 = vadd.f32 %v362, %v494
        %v496 = vpop.f32.mrb[0].mxu0
        %v497 = vadd.f32 %v362, %v496
        %498 = vmatprep.mubr.f32.mxu0 0.0
        %499 = vmatmul.mubr.f32.gmra.mrb[0].mxu0 %v396
        %v500 = vpop.f32.mrb[0].mxu0
        %v501 = vadd.f32 %v367, %v500
        %v502 = vpop.f32.mrb[0].mxu0
        %v503 = vadd.f32 %v367, %v502
        %504 = vmatprep.mubr.f32.mxu0 0.0
        %505 = vmatmul.mubr.f32.gmra.mrb[0].mxu0 %v399
        %v506 = vpop.f32.mrb[0].mxu0
        %v507 = vadd.f32 %v372, %v506
        %v508 = vpop.f32.mrb[0].mxu0
        %v509 = vadd.f32 %v372, %v508
        %510 = vmatprep.mubr.f32.mxu0 0.0
        %511 = vmatmul.mubr.f32.gmra.mrb[0].mxu0 %v402
        %v512 = vpop.f32.mrb[0].mxu0
        %v513 = vadd.f32 %v377, %v512
        %v514 = vpop.f32.mrb[0].mxu0
        %v515 = vadd.f32 %v377, %v514
        %516 = vdwg.mxu0
        %v517 = vmul.f32 %v471, 0.5
        %v518 = vmul.f32 %v473, 0.5
        %v519 = vmul.f32 %v477, 0.5
        %v520 = vmul.f32 %v479, 0.5
        %v521 = vmul.f32 %v483, 0.5
        %v522 = vmul.f32 %v485, 0.5
        %v523 = vmul.f32 %v489, 0.5
        %v524 = vmul.f32 %v491, 0.5
        %v525 = vmul.f32 %v495, 0.5
        %v526 = vmul.f32 %v497, 0.5
        %v527 = vmul.f32 %v501, 0.5
        %v528 = vmul.f32 %v503, 0.5
        %v529 = vmul.f32 %v507, 0.5
        %v530 = vmul.f32 %v509, 0.5
        %v531 = vmul.f32 %v513, 0.5
        %v532 = vmul.f32 %v515, 0.5
        %v533 = vmul.f32 %v471, 0.70710677
        %v534 = vmul.f32 %v473, 0.70710677
        %v535 = vmul.f32 %v477, 0.70710677
        %v536 = vmul.f32 %v479, 0.70710677
        %v537 = vmul.f32 %v483, 0.70710677
        %v538 = vmul.f32 %v485, 0.70710677
        %v539 = vmul.f32 %v489, 0.70710677
        %v540 = vmul.f32 %v491, 0.70710677
        %v541 = vmul.f32 %v495, 0.70710677
        %v542 = vmul.f32 %v497, 0.70710677
        %v543 = vmul.f32 %v501, 0.70710677
        %v544 = vmul.f32 %v503, 0.70710677
        %v545 = vmul.f32 %v507, 0.70710677
        %v546 = vmul.f32 %v509, 0.70710677
        %v547 = vmul.f32 %v513, 0.70710677
        %v548 = vmul.f32 %v515, 0.70710677
        %v549 = verf.f32.pop %v533
        %v550 = verf.f32.pop %v534
        %v551 = verf.f32.pop %v535
        %v552 = verf.f32.pop %v536
        %v553 = verf.f32.pop %v537
        %v554 = verf.f32.pop %v538
        %v555 = verf.f32.pop %v539
        %v556 = verf.f32.pop %v540
        %v557 = verf.f32.pop %v541
        %v558 = verf.f32.pop %v542
        %v559 = verf.f32.pop %v543
        %v560 = verf.f32.pop %v544
        %v561 = verf.f32.pop %v545
        %v562 = verf.f32.pop %v546
        %v563 = verf.f32.pop %v547
        %v564 = verf.f32.pop %v548
        %v565 = vadd.f32 %v549, 1.0
        %v566 = vadd.f32 %v550, 1.0
        %v567 = vadd.f32 %v551, 1.0
        %v568 = vadd.f32 %v552, 1.0
        %v569 = vadd.f32 %v553, 1.0
        %v570 = vadd.f32 %v554, 1.0
        %v571 = vadd.f32 %v555, 1.0
        %v572 = vadd.f32 %v556, 1.0
        %v573 = vadd.f32 %v557, 1.0
        %v574 = vadd.f32 %v558, 1.0
        %v575 = vadd.f32 %v559, 1.0
        %v576 = vadd.f32 %v560, 1.0
        %v577 = vadd.f32 %v561, 1.0
        %v578 = vadd.f32 %v562, 1.0
        %v579 = vadd.f32 %v563, 1.0
        %v580 = vadd.f32 %v564, 1.0
        %v581 = vmul.f32 %v517, %v565
        %v582 = vmul.f32 %v518, %v566
        %v583 = vmul.f32 %v519, %v567
        %v584 = vmul.f32 %v520, %v568
        %v585 = vmul.f32 %v521, %v569
        %v586 = vmul.f32 %v522, %v570
        %v587 = vmul.f32 %v523, %v571
        %v588 = vmul.f32 %v524, %v572
        %v589 = vmul.f32 %v525, %v573
        %v590 = vmul.f32 %v526, %v574
        %v591 = vmul.f32 %v527, %v575
        %v592 = vmul.f32 %v528, %v576
        %v593 = vmul.f32 %v529, %v577
        %v594 = vmul.f32 %v530, %v578
        %v595 = vmul.f32 %v531, %v579
        %v596 = vmul.f32 %v532, %v580
        %v597 = vld [vmem:[%s3] sm:$0xff]
        %v598 = vld [vmem:[%s3 + $0x8] sm:$0xff]
        %v599 = vld [vmem:[%s3 + $0x10] sm:$0xff]
        %v600 = vld [vmem:[%s3 + $0x18] sm:$0xff]
        %v601 = vld [vmem:[%s4] sm:$0xff]
        %v602 = vld [vmem:[%s4 + $0x8] sm:$0xff]
        %v603 = vld [vmem:[%s4 + $0x10] sm:$0xff]
        %v604 = vld [vmem:[%s4 + $0x18] sm:$0xff]
        %606 = vset.pattern.permute.xlu0 0
        %607 = vperm.xlu0 %606, %v601
        %v608 = vpop.permute.xlu0 %607
        %611 = vset.pattern.permute.xlu0 0
        %612 = vperm.xlu0 %611, %v602
        %v613 = vpop.permute.xlu0 %612
        %616 = vset.pattern.permute.xlu0 0
        %617 = vperm.xlu0 %616, %v603
        %v618 = vpop.permute.xlu0 %617
        %621 = vset.pattern.permute.xlu0 0
        %622 = vperm.xlu0 %621, %v604
        %v623 = vpop.permute.xlu0 %622
        %vm625 = vcmask 523264
        %v627 = vsel %vm625, %v597, 0
        %v630 = vsel %vm625, %v598, 0
        %v633 = vsel %vm625, %v599, 0
        %v636 = vsel %vm625, %v600, 0
        %638 = vmatprep.subr.mxu0 %v582
        %639 = vmatpush1.msra.mxu0 %v581
        %640 = vmatprep.subr.mxu0 %v584
        %641 = vmatpush1.msra.mxu0 %v583
        %642 = vmatprep.subr.mxu0 %v586
        %643 = vmatpush1.msra.mxu0 %v585
        %644 = vmatprep.subr.mxu0 %v588
        %645 = vmatpush1.msra.mxu0 %v587
        %646 = vmatprep.subr.mxu0 %v590
        %647 = vmatpush1.msra.mxu0 %v589
        %648 = vmatprep.subr.mxu0 %v592
        %649 = vmatpush1.msra.mxu0 %v591
        %650 = vmatprep.subr.mxu0 %v594
        %651 = vmatpush1.msra.mxu0 %v593
        %652 = vmatprep.subr.mxu0 %v596
        %653 = vmatpush1.msra.mxu0 %v595
        %654 = vmatprep.subr.mxu0 0.0
        %655 = vmatpush1.msra.mxu0 0.0
        %656 = vmatprep.subr.mxu0 0.0
        %657 = vmatpush1.msra.mxu0 0.0
        %658 = vmatprep.subr.mxu0 0.0
        %659 = vmatpush1.msra.mxu0 0.0
        %660 = vmatprep.subr.mxu0 0.0
        %661 = vmatpush1.msra.mxu0 0.0
        %662 = vmatprep.subr.mxu0 0.0
        %663 = vmatpush1.msra.mxu0 0.0
        %664 = vmatprep.subr.mxu0 0.0
        %665 = vmatpush1.msra.mxu0 0.0
        %666 = vmatprep.subr.mxu0 0.0
        %667 = vmatpush1.msra.mxu0 0.0
        %668 = vmatprep.subr.mxu0 0.0
        %669 = vmatpush1.msra.mxu0 0.0
        %670 = vmatprep.subr.mxu0 0.0
        %671 = vmatpush1.msra.mxu0 0.0
        %672 = vmatprep.subr.mxu0 0.0
        %673 = vmatpush1.msra.mxu0 0.0
        %674 = vmatprep.subr.mxu0 0.0
        %675 = vmatpush1.msra.mxu0 0.0
        %676 = vmatprep.subr.mxu0 0.0
        %677 = vmatpush1.msra.mxu0 0.0
        %678 = vmatprep.subr.mxu0 0.0
        %679 = vmatpush1.msra.mxu0 0.0
        %680 = vmatprep.subr.mxu0 0.0
        %681 = vmatpush1.msra.mxu0 0.0
        %682 = vmatprep.subr.mxu0 0.0
        %683 = vmatpush1.msra.mxu0 0.0
        %684 = vmatprep.subr.mxu0 0.0
        %685 = vmatpush1.msra.mxu0 0.0
        %686 = vmatprep.subr.mxu0 0.0
        %687 = vmatpush1.msra.mxu0 0.0
        %688 = vmatprep.subr.mxu0 0.0
        %689 = vmatpush1.msra.mxu0 0.0
        %690 = vmatprep.subr.mxu0 0.0
        %691 = vmatpush1.msra.mxu0 0.0
        %692 = vmatprep.subr.mxu0 0.0
        %693 = vmatpush1.msra.mxu0 0.0
        %694 = vmatprep.subr.mxu0 0.0
        %695 = vmatpush1.msra.mxu0 0.0
        %696 = vmatprep.subr.mxu0 0.0
        %697 = vmatpush1.msra.mxu0 0.0
        %698 = vmatprep.subr.mxu0 0.0
        %699 = vmatpush1.msra.mxu0 0.0
        %700 = vmatprep.subr.mxu0 0.0
        %701 = vmatpush1.msra.mxu0 0.0
        %702 = vmatprep.mubr.f32.mxu0 0.0
        %703 = vmatmul.mubr.f32.gmra.mrb[0].mxu0 %v627
        %v704 = vpop.f32.mrb[0].mxu0
        %v705 = vadd.f32 %v608, %v704
        %v706 = vpop.f32.mrb[0].mxu0
        %v707 = vadd.f32 %v608, %v706
        %708 = vmatprep.mubr.f32.mxu0 0.0
        %709 = vmatmul.mubr.f32.gmra.mrb[0].mxu0 %v630
        %v710 = vpop.f32.mrb[0].mxu0
        %v711 = vadd.f32 %v613, %v710
        %v712 = vpop.f32.mrb[0].mxu0
        %v713 = vadd.f32 %v613, %v712
        %714 = vmatprep.mubr.f32.mxu0 0.0
        %715 = vmatmul.mubr.f32.gmra.mrb[0].mxu0 %v633
        %v716 = vpop.f32.mrb[0].mxu0
        %v717 = vadd.f32 %v618, %v716
        %v718 = vpop.f32.mrb[0].mxu0
        %v719 = vadd.f32 %v618, %v718
        %720 = vmatprep.mubr.f32.mxu0 0.0
        %721 = vmatmul.mubr.f32.gmra.mrb[0].mxu0 %v636
        %v722 = vpop.f32.mrb[0].mxu0
        %v723 = vadd.f32 %v623, %v722
        %v724 = vpop.f32.mrb[0].mxu0
        %v725 = vadd.f32 %v623, %v724
        %726 = vdwg.mxu0
        %v727 = vmul.f32 %v705, 0.5
        %v728 = vmul.f32 %v707, 0.5
        %v729 = vmul.f32 %v711, 0.5
        %v730 = vmul.f32 %v713, 0.5
        %v731 = vmul.f32 %v717, 0.5
        %v732 = vmul.f32 %v719, 0.5
        %v733 = vmul.f32 %v723, 0.5
        %v734 = vmul.f32 %v725, 0.5
        %v735 = vmul.f32 %v705, 0.70710677
        %v736 = vmul.f32 %v707, 0.70710677
        %v737 = vmul.f32 %v711, 0.70710677
        %v738 = vmul.f32 %v713, 0.70710677
        %v739 = vmul.f32 %v717, 0.70710677
        %v740 = vmul.f32 %v719, 0.70710677
        %v741 = vmul.f32 %v723, 0.70710677
        %v742 = vmul.f32 %v725, 0.70710677
        %v743 = verf.f32.pop %v735
        %v744 = verf.f32.pop %v736
        %v745 = verf.f32.pop %v737
        %v746 = verf.f32.pop %v738
        %v747 = verf.f32.pop %v739
        %v748 = verf.f32.pop %v740
        %v749 = verf.f32.pop %v741
        %v750 = verf.f32.pop %v742
        %v751 = vadd.f32 %v743, 1.0
        %v752 = vadd.f32 %v744, 1.0
        %v753 = vadd.f32 %v745, 1.0
        %v754 = vadd.f32 %v746, 1.0
        %v755 = vadd.f32 %v747, 1.0
        %v756 = vadd.f32 %v748, 1.0
        %v757 = vadd.f32 %v749, 1.0
        %v758 = vadd.f32 %v750, 1.0
        %v759 = vmul.f32 %v727, %v751
        %v760 = vmul.f32 %v728, %v752
        %v761 = vmul.f32 %v729, %v753
        %v762 = vmul.f32 %v730, %v754
        %v763 = vmul.f32 %v731, %v755
        %v764 = vmul.f32 %v732, %v756
        %v765 = vmul.f32 %v733, %v757
        %v766 = vmul.f32 %v734, %v758
        %v767 = vld [vmem:[%s5] sm:$0x1]
        %v768 = vld [vmem:[#allocation2] sm:$0x1]
        %770 = vset.pattern.permute.xlu0 0
        %771 = vperm.xlu0 %770, %v768
        %v772 = vpop.permute.xlu0 %771
        %v774 = vlaneseq
        %v775 = vshrl.u32 %v774, 7
        %v776 = vsub.s32 0, %v775
        %v777 = vrot.slane %v772, %v776
        %v779 = vsel %vm379, %v767, 0
        %781 = vmatprep.subr.mxu0 %v760
        %782 = vmatpush1.msra.mxu0 %v759
        %783 = vmatprep.subr.mxu0 %v762
        %784 = vmatpush1.msra.mxu0 %v761
        %785 = vmatprep.subr.mxu0 %v764
        %786 = vmatpush1.msra.mxu0 %v763
        %787 = vmatprep.subr.mxu0 %v766
        %788 = vmatpush1.msra.mxu0 %v765
        %789 = vmatprep.subr.mxu0 0.0
        %790 = vmatpush1.msra.mxu0 0.0
        %791 = vmatprep.subr.mxu0 0.0
        %792 = vmatpush1.msra.mxu0 0.0
        %793 = vmatprep.subr.mxu0 0.0
        %794 = vmatpush1.msra.mxu0 0.0
        %795 = vmatprep.subr.mxu0 0.0
        %796 = vmatpush1.msra.mxu0 0.0
        %797 = vmatprep.subr.mxu0 0.0
        %798 = vmatpush1.msra.mxu0 0.0
        %799 = vmatprep.subr.mxu0 0.0
        %800 = vmatpush1.msra.mxu0 0.0
        %801 = vmatprep.subr.mxu0 0.0
        %802 = vmatpush1.msra.mxu0 0.0
        %803 = vmatprep.subr.mxu0 0.0
        %804 = vmatpush1.msra.mxu0 0.0
        %805 = vmatprep.subr.mxu0 0.0
        %806 = vmatpush1.msra.mxu0 0.0
        %807 = vmatprep.subr.mxu0 0.0
        %808 = vmatpush1.msra.mxu0 0.0
        %809 = vmatprep.subr.mxu0 0.0
        %810 = vmatpush1.msra.mxu0 0.0
        %811 = vmatprep.subr.mxu0 0.0
        %812 = vmatpush1.msra.mxu0 0.0
        %813 = vmatprep.subr.mxu0 0.0
        %814 = vmatpush1.msra.mxu0 0.0
        %815 = vmatprep.subr.mxu0 0.0
        %816 = vmatpush1.msra.mxu0 0.0
        %817 = vmatprep.subr.mxu0 0.0
        %818 = vmatpush1.msra.mxu0 0.0
        %819 = vmatprep.subr.mxu0 0.0
        %820 = vmatpush1.msra.mxu0 0.0
        %821 = vmatprep.subr.mxu0 0.0
        %822 = vmatpush1.msra.mxu0 0.0
        %823 = vmatprep.subr.mxu0 0.0
        %824 = vmatpush1.msra.mxu0 0.0
        %825 = vmatprep.subr.mxu0 0.0
        %826 = vmatpush1.msra.mxu0 0.0
        %827 = vmatprep.subr.mxu0 0.0
        %828 = vmatpush1.msra.mxu0 0.0
        %829 = vmatprep.subr.mxu0 0.0
        %830 = vmatpush1.msra.mxu0 0.0
        %831 = vmatprep.subr.mxu0 0.0
        %832 = vmatpush1.msra.mxu0 0.0
        %833 = vmatprep.subr.mxu0 0.0
        %834 = vmatpush1.msra.mxu0 0.0
        %835 = vmatprep.subr.mxu0 0.0
        %836 = vmatpush1.msra.mxu0 0.0
        %837 = vmatprep.subr.mxu0 0.0
        %838 = vmatpush1.msra.mxu0 0.0
        %839 = vmatprep.subr.mxu0 0.0
        %840 = vmatpush1.msra.mxu0 0.0
        %841 = vmatprep.subr.mxu0 0.0
        %842 = vmatpush1.msra.mxu0 0.0
        %843 = vmatprep.subr.mxu0 0.0
        %844 = vmatpush1.msra.mxu0 0.0
        %845 = vmatprep.mubr.f32.mxu0 0.0
        %846 = vmatmul.mubr.f32.gmra.mrb[0].mxu0 %v779
        %v847 = vpop.f32.mrb[0].mxu0
        %v848 = vadd.f32 %v777, %v847
        %v849 = vpop.f32.mrb[0].mxu0
        %v850 = vadd.f32 %v777, %v849
        %851 = vdwg.mxu0
        %v854 = vcombine.low %v848, %v850
        %v856 = vunpack.c.l.s4 1966171168
        %v857 = vunpack.c.0.s8 %v856
        %v858 = vlaneseq
        %v859 = vshrl.u32 %v858, 7
        %v860 = vsub.s32 %v857, %v859
        %v861 = vrot.slane %v854, %v860
        %v863 = vunpack.c.l.s4 1966171168
        %v864 = vunpack.c.0.s8 %v863
        %v865 = vlaneseq
        %v866 = vshrl.u32 %v865, 7
        %v867 = vsub.s32 %v864, %v866
        %v868 = vrot.slane %v861, %v867
        %v870 = vlaneseq
        %vm871 = vcmp.ge.s32.totalorder %v870, 0
        %vm872 = vcmp.lt.s32.totalorder %v870, 256
        %vm873 = vmand %vm871, %vm872
        %874 = vst.msk [vmem:[%s313] sm:$0x3] %vm873, %v868
        %s875 = smul.u32 2, %s20
        %p876 = scmp.lt.s32.totalorder %s875, 3
        %s877 = scalar_select %p876, %s875, 3
        %s878 = scalar_lea.vmem %s7, %s877
        // Predicated region
        $region72: #{fno2d_forward.15} parent=66 // pred_check
          %p879 = pneg %p190
        $region73: #{fno2d_forward.15} parent=66 // pred_check_branch
          %881 = sbr.rel (%p879) target = $region75
        $region74: #{fno2d_forward.15} parent=66 // pred_region
          %s882 = smul.u32 2, %s20
        $region75: #{fno2d_forward.15} parent=66 // pred_fallthru
          _
      $region67: #{fno2d_forward.15} parent=5 // pred_fallthru
        _
      %p883 = scmp.le.s32.totalorder 2, %s15
      // Predicated region
      $region76: #{fno2d_forward.15} parent=5 // pred_check
        %p884 = pneg %p883
      $region77: #{fno2d_forward.15} parent=5 // pred_check_branch
        %886 = sbr.rel (%p884) target = $region79
      $region78: #{fno2d_forward.15} parent=5 // pred_region
        %s887 = ssub.s32 %s15, 2
        // Predicated region
        $region80: #{fno2d_forward.15} parent=78 // pred_check
          %p888 = pneg %p196
        $region81: #{fno2d_forward.15} parent=78 // pred_check_branch
          %890 = sbr.rel (%p888) target = $region83
        $region82: #{fno2d_forward.15} parent=78 // pred_region
          %s891 = smul.u32 2, %s21
          %p892 = scmp.lt.s32.totalorder %s891, 3
          %s893 = scalar_select %p892, %s891, 3
          %s894 = scalar_lea.vmem %s7, %s893
        $region83: #{fno2d_forward.15} parent=78 // pred_fallthru
          _
      $region79: #{fno2d_forward.15} parent=5 // pred_fallthru
        _
    $region6: #{fno2d_forward.15} parent=1 // loop_footer
      %s19 = sadd.s32 1, %s15
    $region7: #{fno2d_forward.15} parent=1 // loop_footer_branch
      %14 = sbr.rel target = $region3
    $region8: #{fno2d_forward.15} parent=1 // loop_exit
      _

</llo_original>
